<compile_context>
chip_gen: v7x
topology: tpu7x:2x2x1
jax: 0.10.0
libtpu: 0.0.40
codegen_flags: <defaults>
</compile_context>

<pallas_src>
import functools

import jax
import jax.numpy as jnp
from jax.experimental import pallas as pl
from jax.experimental.pallas import tpu as pltpu

LANE = 128  # vreg lane width: hidden/feature dims are padded to this inside VMEM

# Padded-lane correctness relies on act(0) == 0, which holds for every
# activation the PyTorch module supports (Identity, Tanh, ReLU, GELU, Sine)
# but would silently break for e.g. sigmoid/softplus — hence the whitelist.
_ZERO_PRESERVING_ACTIVATIONS = ("identity", "tanh", "relu", "gelu", "sin")


def _round_up(x, m):
    return (x + m - 1) // m * m


def _pick_tile_n(n):
    # 512-row tiles amortize per-grid-step overhead and fill the MXU for real
    # collocation batches; small batches use 128-row tiles so the grid keeps
    # >= 2 steps (both v7x TensorCores busy under "parallel").
    return 512 if n >= 1024 else 128


def _apply_activation(y, activation):
    if activation == "identity":
        return y
    if activation == "tanh":
        return jnp.tanh(y)
    if activation == "relu":
        return jnp.maximum(y, 0.0)
    if activation == "gelu":
        return jax.nn.gelu(y)
    if activation == "sin":
        return jnp.sin(y)
    raise ValueError(f"unknown activation {activation}")


# ----------------------------- Pallas kernel ------------------------------ #
def _fused_mlp_kernel(x_ref, w_ref, b_ref, o_ref, *, fin, fout, depth,
                      activation, precision):
    """Whole MLP on one (tile_n, fin) batch tile.

    x_ref : (tile_n, fin)        unpadded input tile (fin is tiny, e.g. 2)
    w_ref : (depth, W, W)        128-lane padded, pre-transposed weights (VMEM resident)
    b_ref : (depth, 1, W)        128-lane padded biases (f32)
    o_ref : (tile_n, fout)       unpadded output tile (only real columns hit HBM)
    """
    w_dtype = w_ref.dtype  # f32, or bf16 when packed with weight_dtype=bfloat16

    # ---- Layer 0 on the VPU: fin broadcast-FMAs over (tile_n, W).  Avoids
    # lane-padding x to 128 and a K=fin MXU pass.  Intended for NeuralSI's
    # small coordinate inputs (fin <= ~8).
    # TODO(synk): for large fin, switch layer 0 to a padded MXU matmul instead
    # of this unrolled VPU path.
    x = x_ref[...].astype(jnp.float32)
    w0 = w_ref[0].astype(jnp.float32)                 # (W, W); rows >= fin are zero
    h = x[:, 0:1] * w0[0:1, :] + b_ref[0].astype(jnp.float32)
    for k in range(1, fin):
        h = h + x[:, k:k + 1] * w0[k:k + 1, :]
    if depth > 1:
        h = _apply_activation(h, activation)

    # ---- Layers 1 .. depth-1 on the MXU.  All (W, W) operands are fully
    # (8,128)-aligned; accumulation in f32.  Static unroll: depth is a small
    # compile-time constant, so weight/bias indices are static.
    for l in range(1, depth):
        y = jnp.dot(h.astype(w_dtype), w_ref[l],
                    preferred_element_type=jnp.float32, precision=precision)
        y = y + b_ref[l].astype(jnp.float32)
        if l < depth - 1:
            y = _apply_activation(y, activation)
        h = y

    # ---- Store only the real output columns: HBM writeback is fout lanes
    # (e.g. 1) instead of a 128-lane padded slab.
    o_ref[...] = h[:, :fout].astype(o_ref.dtype)


# ------------------------------ DNN wrapper -------------------------------- #
def init_dnn_params(key, layers):
    """torch.nn.Linear-style init: U(-1/sqrt(fan_in), 1/sqrt(fan_in)).

    Weights are stored pre-transposed as (fan_in, fan_out) so the kernel
    computes y = x @ W^T + b, identical to torch.nn.Linear.
    """
    assert len(layers) >= 2
    params = []
    for i in range(len(layers) - 1):
        fan_in, fan_out = layers[i], layers[i + 1]
        key, kw, kb = jax.random.split(key, 3)
        bound = 1.0 / jnp.sqrt(jnp.float32(fan_in))
        w_t = jax.random.uniform(kw, (fan_in, fan_out), jnp.float32,
                                 minval=-bound, maxval=bound)
        b = jax.random.uniform(kb, (1, fan_out), jnp.float32,
                               minval=-bound, maxval=bound)
        params.append((w_t, b))
    return params


def pack_dnn_params(params, *, lane=LANE, weight_dtype=jnp.float32):
    """Zero-pad every layer to a common lane-dense width W and stack.

    Returns (w_stack (L, W, W), b_stack (L, 1, W), dims).  Use
    weight_dtype=jnp.bfloat16 on v6e/v7x to halve weight residency/DMA
    (accumulation stays f32 in the kernel); biases stay f32.
    """
    depth = len(params)
    dims = [params[0][0].shape[0]] + [w.shape[1] for w, _ in params]
    w_pad = _round_up(max(dims), lane)
    w_stack = jnp.zeros((depth, w_pad, w_pad), weight_dtype)
    b_stack = jnp.zeros((depth, 1, w_pad), jnp.float32)
    for l, (w_t, b) in enumerate(params):
        fin_l, fout_l = w_t.shape
        w_stack = w_stack.at[l, :fin_l, :fout_l].set(w_t.astype(weight_dtype))
        b_stack = b_stack.at[l, 0, :fout_l].set(b.reshape(-1))
    return w_stack, b_stack, tuple(dims)


def dnn_forward(packed_params, x, activation, *, tile_n=None,
                precision=jax.lax.Precision.DEFAULT):
    """Equivalent of DNN.forward: hidden layers with activation, last layer linear.

    use_batch_norm / use_instance_norm default to False in the module, so no
    normalization layers are implemented here.
    """
    if activation not in _ZERO_PRESERVING_ACTIVATIONS:
        raise ValueError(
            f"activation {activation!r} not supported: lane-padding correctness "
            f"requires act(0)==0 (supported: {_ZERO_PRESERVING_ACTIVATIONS})")

    w_stack, b_stack, dims = packed_params
    depth, w_pad, _ = w_stack.shape
    n, fin = x.shape
    assert fin == dims[0], (fin, dims)
    fout = dims[-1]

    if tile_n is None:
        tile_n = _pick_tile_n(n)
    n_pad = _round_up(n, tile_n)
    # Only the batch dim is padded (a few zero rows of `fin` floats); features
    # are NOT lane-padded in HBM any more.
    x_in = x if n_pad == n else jnp.zeros((n_pad, fin), x.dtype).at[:n].set(x)

    grid = (n_pad // tile_n,)

    # ---- VMEM budget for the "all weights resident" design (guard for v7x's
    # 64 MiB VMEM; v5e/v6e have 128 MiB).  Everything is double-buffered by
    # default; x/out tiles are lane-padded to 128 inside VMEM.
    w_bytes = w_stack.size * w_stack.dtype.itemsize
    b_bytes = b_stack.size * b_stack.dtype.itemsize
    vmem_est = (2 * w_bytes + 2 * b_bytes
                + 2 * tile_n * _round_up(fin, LANE) * 4
                + 2 * tile_n * _round_up(fout, LANE) * 4)
    compiler_kwargs = dict(dimension_semantics=("parallel",))
    if vmem_est > 30 * 1024 * 1024:
        if vmem_est > 56 * 1024 * 1024:
            # TODO(synk): for very wide/deep nets, fall back to a layer (or K)
            # grid axis / emit_pipeline over layers instead of fully-resident
            # stacked weights.
            raise ValueError(
                f"stacked weights too large for resident-in-VMEM design "
                f"({vmem_est / 2**20:.1f} MiB estimated)")
        compiler_kwargs["vmem_limit_bytes"] = int(vmem_est + (4 << 20))

    # Advisory cost estimate so XLA schedules the custom call correctly inside
    # the surrounding training loop.
    cost = pl.CostEstimate(
        flops=2 * n_pad * (fin * w_pad + (depth - 1) * w_pad * w_pad),
        transcendentals=(n_pad * w_pad * (depth - 1)
                         if activation in ("tanh", "gelu", "sin") else 0),
        bytes_accessed=(x_in.size * x_in.dtype.itemsize
                        + n_pad * fout * 4 + w_bytes + b_bytes),
    )

    kernel = functools.partial(_fused_mlp_kernel, fin=fin, fout=fout,
                               depth=depth, activation=activation,
                               precision=precision)

    out = pl.pallas_call(
        kernel,
        out_shape=jax.ShapeDtypeStruct((n_pad, fout), x.dtype),
        grid=grid,
        in_specs=[
            # x: tiled over the batch grid, full (tiny) feature dim.
            pl.BlockSpec((tile_n, fin), lambda i: (i, 0)),
            # weights/biases: whole stacks, resident in VMEM every grid step.
            pl.BlockSpec((depth, w_pad, w_pad), lambda i: (0, 0, 0)),
            pl.BlockSpec((depth, 1, w_pad), lambda i: (0, 0, 0)),
        ],
        # Output block carries only the real output columns (no 128-lane pad).
        out_specs=pl.BlockSpec((tile_n, fout), lambda i: (i, 0)),
        compiler_params=pltpu.CompilerParams(**compiler_kwargs),
        cost_estimate=cost,
    )(x_in, w_stack, b_stack)

    return out if n_pad == n else out[:n]


# --------------------------------- main ------------------------------------ #
if __name__ == "__main__":
    # Typical NeuralSI config: small MLP mapping (x, t) -> output.
    layers = [2, 32, 32, 32, 1]
    activation = "tanh"

    params = init_dnn_params(jax.random.PRNGKey(0), layers)
    packed = pack_dnn_params(params)

    key = jax.random.PRNGKey(0)
    key, kx, kx2 = jax.random.split(key, 3)

    # Pure-JAX reference of the same math (torch.nn.Linear chain), full precision.
    def reference(xr):
        h = xr
        for i, (w_t, b) in enumerate(params):
            h = jnp.dot(h, w_t, precision=jax.lax.Precision.HIGHEST) + b
            if i < len(params) - 1:
                h = jnp.tanh(h)
        return h

    # --- tight numerics check (HIGHEST used only for this assertion) --------
    x = jax.random.normal(kx, (256, layers[0]), jnp.float32)   # 2 tiles of 128
    out_exact = jax.block_until_ready(
        dnn_forward(packed, x, activation, precision=jax.lax.Precision.HIGHEST))
    ref = reference(x)
    assert out_exact.shape == (256, layers[-1])
    assert jnp.allclose(out_exact, ref, atol=1e-5, rtol=1e-5)

    # --- fast path: DEFAULT precision, 512-row tiles, ragged batch ----------
    x_big = jax.random.normal(kx2, (1500, layers[0]), jnp.float32)
    out_fast = jax.block_until_ready(dnn_forward(packed, x_big, activation))
    ref_big = reference(x_big)
    assert out_fast.shape == (1500, layers[-1])
    # DEFAULT precision may take a single bf16 MXU pass per f32 dot, so the
    # tolerance here is bf16-appropriate; the tight check above covers exact math.
    assert jnp.allclose(out_fast, ref_big, atol=5e-2, rtol=5e-2)

    print("KERNEL_OK")
</pallas_src>

<mosaic_0001>
module attributes {stable_mosaic.version = 11 : i64} {
  func.func @_fused_mlp_kernel(%arg0: i32, %arg1: memref<128x2xf32, #tpu.memory_space<vmem>>, %arg2: memref<4x128x128xf32, #tpu.memory_space<vmem>>, %arg3: memref<4x1x128xf32, #tpu.memory_space<vmem>>, %arg4: memref<128x1xf32, #tpu.memory_space<vmem>>) attributes {dimension_semantics = [#tpu.dimension_semantics<parallel>], iteration_bounds = array<i64: 2>, scalar_prefetch = 0 : i64, scratch_operands = 0 : i64, tpu.core_type = #tpu.core_type<tc>, window_params = [{transform_indices = @transform_0, window_bounds = array<i64: 128, 2>}, {pipeline_mode = #tpu.pipeline_mode<synchronous>, transform_indices = @transform_1, window_bounds = array<i64: 4, 128, 128>}, {pipeline_mode = #tpu.pipeline_mode<synchronous>, transform_indices = @transform_2, window_bounds = array<i64: 4, 1, 128>}, {transform_indices = @transform_3, window_bounds = array<i64: 128, 1>}]} {
    %c0 = arith.constant 0 : index
    %c0_0 = arith.constant 0 : index
    %0 = vector.load %arg1[%c0, %c0_0] : memref<128x2xf32, #tpu.memory_space<vmem>>, vector<128x2xf32>
    %c0_1 = arith.constant 0 : index
    %c0_2 = arith.constant 0 : index
    %c0_3 = arith.constant 0 : index
    %1 = vector.load %arg2[%c0_1, %c0_2, %c0_3] : memref<4x128x128xf32, #tpu.memory_space<vmem>>, vector<1x128x128xf32>
    %2 = vector.shape_cast %1 : vector<1x128x128xf32> to vector<128x128xf32>
    %3 = vector.extract_strided_slice %0 {offsets = [0, 0], sizes = [128, 1], strides = [1, 1]} : vector<128x2xf32> to vector<128x1xf32>
    %4 = vector.extract_strided_slice %2 {offsets = [0, 0], sizes = [1, 128], strides = [1, 1]} : vector<128x128xf32> to vector<1x128xf32>
    %5 = vector.broadcast %3 : vector<128x1xf32> to vector<128x128xf32>
    %6 = vector.broadcast %4 : vector<1x128xf32> to vector<128x128xf32>
    %7 = arith.mulf %5, %6 : vector<128x128xf32>
    %c0_4 = arith.constant 0 : index
    %c0_5 = arith.constant 0 : index
    %c0_6 = arith.constant 0 : index
    %8 = vector.load %arg3[%c0_4, %c0_5, %c0_6] : memref<4x1x128xf32, #tpu.memory_space<vmem>>, vector<1x1x128xf32>
    %9 = vector.shape_cast %8 : vector<1x1x128xf32> to vector<1x128xf32>
    %10 = vector.broadcast %9 : vector<1x128xf32> to vector<128x128xf32>
    %11 = arith.addf %7, %10 : vector<128x128xf32>
    %12 = vector.extract_strided_slice %0 {offsets = [0, 1], sizes = [128, 1], strides = [1, 1]} : vector<128x2xf32> to vector<128x1xf32>
    %13 = vector.extract_strided_slice %2 {offsets = [1, 0], sizes = [1, 128], strides = [1, 1]} : vector<128x128xf32> to vector<1x128xf32>
    %14 = vector.broadcast %12 : vector<128x1xf32> to vector<128x128xf32>
    %15 = vector.broadcast %13 : vector<1x128xf32> to vector<128x128xf32>
    %16 = arith.mulf %14, %15 : vector<128x128xf32>
    %17 = arith.addf %11, %16 : vector<128x128xf32>
    %18 = math.tanh %17 : vector<128x128xf32>
    %c1 = arith.constant 1 : index
    %c0_7 = arith.constant 0 : index
    %c0_8 = arith.constant 0 : index
    %19 = vector.load %arg2[%c1, %c0_7, %c0_8] : memref<4x128x128xf32, #tpu.memory_space<vmem>>, vector<1x128x128xf32>
    %20 = vector.shape_cast %19 : vector<1x128x128xf32> to vector<128x128xf32>
    %cst = arith.constant dense<0.000000e+00> : vector<128x128xf32>
    %21 = tpu.matmul %18, %20, %cst {dimension_numbers = #tpu.dot_dimension_numbers<[1], [0], [0], [1], [0, 0, 1, 1], [], []>, precision = #tpu.contract_precision<fp32>} : vector<128x128xf32>, vector<128x128xf32>, vector<128x128xf32> -> vector<128x128xf32>
    %c1_9 = arith.constant 1 : index
    %c0_10 = arith.constant 0 : index
    %c0_11 = arith.constant 0 : index
    %22 = vector.load %arg3[%c1_9, %c0_10, %c0_11] : memref<4x1x128xf32, #tpu.memory_space<vmem>>, vector<1x1x128xf32>
    %23 = vector.shape_cast %22 : vector<1x1x128xf32> to vector<1x128xf32>
    %24 = vector.broadcast %23 : vector<1x128xf32> to vector<128x128xf32>
    %25 = arith.addf %21, %24 : vector<128x128xf32>
    %26 = math.tanh %25 : vector<128x128xf32>
    %c2 = arith.constant 2 : index
    %c0_12 = arith.constant 0 : index
    %c0_13 = arith.constant 0 : index
    %27 = vector.load %arg2[%c2, %c0_12, %c0_13] : memref<4x128x128xf32, #tpu.memory_space<vmem>>, vector<1x128x128xf32>
    %28 = vector.shape_cast %27 : vector<1x128x128xf32> to vector<128x128xf32>
    %cst_14 = arith.constant dense<0.000000e+00> : vector<128x128xf32>
    %29 = tpu.matmul %26, %28, %cst_14 {dimension_numbers = #tpu.dot_dimension_numbers<[1], [0], [0], [1], [0, 0, 1, 1], [], []>, precision = #tpu.contract_precision<fp32>} : vector<128x128xf32>, vector<128x128xf32>, vector<128x128xf32> -> vector<128x128xf32>
    %c2_15 = arith.constant 2 : index
    %c0_16 = arith.constant 0 : index
    %c0_17 = arith.constant 0 : index
    %30 = vector.load %arg3[%c2_15, %c0_16, %c0_17] : memref<4x1x128xf32, #tpu.memory_space<vmem>>, vector<1x1x128xf32>
    %31 = vector.shape_cast %30 : vector<1x1x128xf32> to vector<1x128xf32>
    %32 = vector.broadcast %31 : vector<1x128xf32> to vector<128x128xf32>
    %33 = arith.addf %29, %32 : vector<128x128xf32>
    %34 = math.tanh %33 : vector<128x128xf32>
    %c3 = arith.constant 3 : index
    %c0_18 = arith.constant 0 : index
    %c0_19 = arith.constant 0 : index
    %35 = vector.load %arg2[%c3, %c0_18, %c0_19] : memref<4x128x128xf32, #tpu.memory_space<vmem>>, vector<1x128x128xf32>
    %36 = vector.shape_cast %35 : vector<1x128x128xf32> to vector<128x128xf32>
    %cst_20 = arith.constant dense<0.000000e+00> : vector<128x128xf32>
    %37 = tpu.matmul %34, %36, %cst_20 {dimension_numbers = #tpu.dot_dimension_numbers<[1], [0], [0], [1], [0, 0, 1, 1], [], []>, precision = #tpu.contract_precision<fp32>} : vector<128x128xf32>, vector<128x128xf32>, vector<128x128xf32> -> vector<128x128xf32>
    %c3_21 = arith.constant 3 : index
    %c0_22 = arith.constant 0 : index
    %c0_23 = arith.constant 0 : index
    %38 = vector.load %arg3[%c3_21, %c0_22, %c0_23] : memref<4x1x128xf32, #tpu.memory_space<vmem>>, vector<1x1x128xf32>
    %39 = vector.shape_cast %38 : vector<1x1x128xf32> to vector<1x128xf32>
    %40 = vector.broadcast %39 : vector<1x128xf32> to vector<128x128xf32>
    %41 = arith.addf %37, %40 : vector<128x128xf32>
    %42 = vector.extract_strided_slice %41 {offsets = [0, 0], sizes = [128, 1], strides = [1, 1]} : vector<128x128xf32> to vector<128x1xf32>
    %c0_24 = arith.constant 0 : index
    %c0_25 = arith.constant 0 : index
    %43 = vector.load %arg4[%c0_24, %c0_25] : memref<128x1xf32, #tpu.memory_space<vmem>>, vector<128x1xf32>
    tpu.vector_store %arg4[%c0_24, %c0_25], %42 {strides = array<i32>} : memref<128x1xf32, #tpu.memory_space<vmem>>, vector<128x1xf32>,
    return
  }
  func.func @transform_0(%arg0: i32) -> (i32, i32) {
    %c0_i32 = arith.constant 0 : i32
    %c0_i32_0 = arith.constant 0 : i32
    return %arg0, %c0_i32 : i32, i32
  }
  func.func @transform_1(%arg0: i32) -> (i32, i32, i32) {
    %c0_i32 = arith.constant 0 : i32
    %c0_i32_0 = arith.constant 0 : i32
    %c0_i32_1 = arith.constant 0 : i32
    %c0_i32_2 = arith.constant 0 : i32
    return %c0_i32, %c0_i32_0, %c0_i32_1 : i32, i32, i32
  }
  func.func @transform_2(%arg0: i32) -> (i32, i32, i32) {
    %c0_i32 = arith.constant 0 : i32
    %c0_i32_0 = arith.constant 0 : i32
    %c0_i32_1 = arith.constant 0 : i32
    %c0_i32_2 = arith.constant 0 : i32
    return %c0_i32, %c0_i32_0, %c0_i32_1 : i32, i32, i32
  }
  func.func @transform_3(%arg0: i32) -> (i32, i32) {
    %c0_i32 = arith.constant 0 : i32
    %c0_i32_0 = arith.constant 0 : i32
    return %arg0, %c0_i32 : i32, i32
  }
}

</mosaic_0001>

<llo_original>
// kernel: tpu_custom_call.1
$region0: #{tpu_custom_call.1}
  #allocation0 [shape = 'u32[]', space=smem, size = 0x4, offset = 0x4, fixed_abs, tag = 'smem constant byte address 0x4 - core index']
  #allocation1 [shape = 'u32[144,128]{1,0:T(1,128)}', space=vmem, size = 0x12000, scoped, tag = 'internal scratch']
  %s0 = inlined_call_operand.vmem [shape: f32[256,2], index: 0, kind: input, shape index: {}]
  %s1 = inlined_call_operand.hbm [shape: f32[4,128,128], index: 1, kind: input, shape index: {}]
  %s2 = inlined_call_operand.vmem [shape: f32[4,1,128], index: 2, kind: input, shape index: {}]
  %s3 = inlined_call_operand.vmem [shape: f32[256,1], index: 3, kind: output, shape index: {}]
  %s4 = sld [smem:[#allocation0]]
  $region49: #{tpu_custom_call.1} parent=0
    _
  %s6 = ssub.s32 1, %s4
  %s7 = scalar_select 0, %s6, %s4
  $region1: #{tpu_custom_call.1} parent=0
    #allocation2 [shape = 'u8[262144]{0}', space=vmem, size = 0x40000, scoped, tag = 'input window, operand 1, single buffered']
    #allocation3 [shape = 's32[2]{0}', space=sflag, size = 0x8, scoped, tag = 'scoped memory for tpu_custom_call.1']
    %8 = vsyncpa [#allocation3], 0
    loop: start=0, step=1, limit=4
    $region2: #{tpu_custom_call.1} parent=1 // loop_pre_header
      _
    $region3: #{tpu_custom_call.1} parent=1 // loop_header
      %s10 = sphi 0, %s14
      %p11 = scmp.ge.s32.totalorder %s10, 4
      %s20 = sphi 0, %s22
      %s23 = sphi 0, %s20
      %s24 = sphi 0, %s23
      %s40 = sphi 0, %s24
      %s44 = sphi 0, %s44
      %s46 = sphi 0, %s44
      %s47 = sphi 0, %s46
      %s61 = sphi 0, %s47
      %s65 = sphi 0, %s65
      %s67 = sphi 0, %s65
      %s68 = sphi 0, %s67
      %s82 = sphi 0, %s68
      %s88 = sphi 0, %s90
      %s91 = sphi 0, %s88
      %s92 = sphi 0, %s91
      %s108 = sphi 0, %s92
    $region4: #{tpu_custom_call.1} parent=1 // loop_header_branch
      %13 = sbr.rel (%p11) target = $region8
    $region5: #{tpu_custom_call.1} parent=1 // loop_body
      %s15 = ssub.s32 %s10, 1
      %s16 = ssub.s32 %s10, 2
      %s17 = sadd.s32 %s10, 1
      %s18 = ssub.s32 %s10, %s17
      %p19 = scmp.eq.s32.totalorder %s18, 0
      %s21 = sadd.s32 %s20, 1
      %s22 = scalar_select %p19, %s20, %s21
      %p25 = pneg %p19
      %p26 = scmp.eq.s32.totalorder %s10, 1
      %p27 = por %p25, %p26
      %p28 = scmp.ne.s32.totalorder %s20, %s23
      %p29 = scmp.eq.s32.totalorder %s10, 0
      %p30 = por %p28, %p29
      %p31 = scmp.ne.s32.totalorder %s20, %s23
      %p32 = scmp.eq.s32.totalorder %s15, 1
      %p33 = por %p31, %p32
      %p34 = scmp.ne.s32.totalorder %s23, %s24
      %p35 = scmp.eq.s32.totalorder %s15, 0
      %p36 = por %p34, %p35
      %p37 = scmp.ne.s32.totalorder %s23, %s24
      %p38 = scmp.eq.s32.totalorder %s16, 1
      %p39 = por %p37, %p38
      %p41 = scmp.ne.s32.totalorder %s24, %s40
      %p42 = scmp.eq.s32.totalorder %s16, 0
      %p43 = por %p41, %p42
      %s45 = sadd.s32 %s44, 1
      %p48 = scmp.eq.s32.totalorder %s10, 1
      %p49 = scmp.ne.s32.totalorder %s44, %s46
      %p50 = scmp.eq.s32.totalorder %s10, 0
      %p51 = por %p49, %p50
      %p52 = scmp.ne.s32.totalorder %s44, %s46
      %p53 = scmp.eq.s32.totalorder %s15, 1
      %p54 = por %p52, %p53
      %p55 = scmp.ne.s32.totalorder %s46, %s47
      %p56 = scmp.eq.s32.totalorder %s15, 0
      %p57 = por %p55, %p56
      %p58 = scmp.ne.s32.totalorder %s46, %s47
      %p59 = scmp.eq.s32.totalorder %s16, 1
      %p60 = por %p58, %p59
      %p62 = scmp.ne.s32.totalorder %s47, %s61
      %p63 = scmp.eq.s32.totalorder %s16, 0
      %p64 = por %p62, %p63
      %s66 = sadd.s32 %s65, 1
      %p69 = scmp.eq.s32.totalorder %s10, 1
      %p70 = scmp.ne.s32.totalorder %s65, %s67
      %p71 = scmp.eq.s32.totalorder %s10, 0
      %p72 = por %p70, %p71
      %p73 = scmp.ne.s32.totalorder %s65, %s67
      %p74 = scmp.eq.s32.totalorder %s15, 1
      %p75 = por %p73, %p74
      %p76 = scmp.ne.s32.totalorder %s67, %s68
      %p77 = scmp.eq.s32.totalorder %s15, 0
      %p78 = por %p76, %p77
      %p79 = scmp.ne.s32.totalorder %s67, %s68
      %p80 = scmp.eq.s32.totalorder %s16, 1
      %p81 = por %p79, %p80
      %p83 = scmp.ne.s32.totalorder %s68, %s82
      %p84 = scmp.eq.s32.totalorder %s16, 0
      %p85 = por %p83, %p84
      %s86 = ssub.s32 %s10, %s17
      %p87 = scmp.eq.s32.totalorder %s86, 0
      %s89 = sadd.s32 %s88, 1
      %s90 = scalar_select %p87, %s88, %s89
      %p93 = pneg %p87
      %p94 = scmp.eq.s32.totalorder %s10, 1
      %p95 = por %p93, %p94
      %p96 = scmp.ne.s32.totalorder %s88, %s91
      %p97 = scmp.eq.s32.totalorder %s10, 0
      %p98 = por %p96, %p97
      %p99 = scmp.ne.s32.totalorder %s88, %s91
      %p100 = scmp.eq.s32.totalorder %s15, 1
      %p101 = por %p99, %p100
      %p102 = scmp.ne.s32.totalorder %s91, %s92
      %p103 = scmp.eq.s32.totalorder %s15, 0
      %p104 = por %p102, %p103
      %p105 = scmp.ne.s32.totalorder %s91, %s92
      %p106 = scmp.eq.s32.totalorder %s16, 1
      %p107 = por %p105, %p106
      %p109 = scmp.ne.s32.totalorder %s92, %s108
      %p110 = scmp.eq.s32.totalorder %s16, 0
      %p111 = por %p109, %p110
      %p112 = scmp.le.s32.totalorder 1, %s10
      %p113 = scmp.lt.s32.totalorder %s10, 3
      %p114 = pnand %p112, %p113
      %p115 = pneg %p114
      // Predicated region
      $region9: #{tpu_custom_call.1} parent=5 // pred_check
        _
      $region10: #{tpu_custom_call.1} parent=5 // pred_check_branch
        %117 = sbr.rel (%p114) target = $region12
      $region11: #{tpu_custom_call.1} parent=5 // pred_region
        %s118 = ssub.s32 %s10, 1
        // Predicated region
        $region13: #{tpu_custom_call.1} parent=11 // pred_check
          %p119 = pneg %p57
        $region14: #{tpu_custom_call.1} parent=11 // pred_check_branch
          %121 = sbr.rel (%p119) target = $region16
        $region15: #{tpu_custom_call.1} parent=11 // pred_region
          %s123 = ssub.s32 8192, 8192
          %124 = vsyncadd [#allocation3], %s123
          %s125 = sshll.u32 [#allocation2], 4
          %s126 = int_to_ptr.vmem [resolvable:$true] %s125
          %131 = dma.hbm_to_vmem [thread:$0]  %s1, 8192, %s126, [#allocation3], 128, 128, 8
        $region16: #{tpu_custom_call.1} parent=11 // pred_fallthru
          _
        // Predicated region
        $region17: #{tpu_custom_call.1} parent=11 // pred_check
          %p132 = pneg %p78
        $region18: #{tpu_custom_call.1} parent=11 // pred_check_branch
          %134 = sbr.rel (%p132) target = $region20
        $region19: #{tpu_custom_call.1} parent=11 // pred_region
          _
        $region20: #{tpu_custom_call.1} parent=11 // pred_fallthru
          _
      $region12: #{tpu_custom_call.1} parent=5 // pred_fallthru
        _
      %p135 = scmp.lt.s32.totalorder %s10, 2
      // Predicated region
      $region21: #{tpu_custom_call.1} parent=5 // pred_check
        %p136 = pneg %p135
      $region22: #{tpu_custom_call.1} parent=5 // pred_check_branch
        %138 = sbr.rel (%p136) target = $region24
      $region23: #{tpu_custom_call.1} parent=5 // pred_region
        // Predicated region
        $region25: #{tpu_custom_call.1} parent=23 // pred_check
          %p139 = pneg %p30
        $region26: #{tpu_custom_call.1} parent=23 // pred_check_branch
          %141 = sbr.rel (%p139) target = $region28
        $region27: #{tpu_custom_call.1} parent=23 // pred_region
          %s142 = smul.u32 16, %s10
          %p143 = scmp.lt.s32.totalorder %s142, 31
          %s144 = scalar_select %p143, %s142, 31
          %s145 = smul.addr %s144, 8
          %s146 = scalar_lea.vmem %s0, %s145
          %s147 = smul.u32 16, %s10
        $region28: #{tpu_custom_call.1} parent=23 // pred_fallthru
          _
      $region24: #{tpu_custom_call.1} parent=5 // pred_fallthru
        _
      %p148 = scmp.le.s32.totalorder 1, %s10
      %p149 = scmp.lt.s32.totalorder %s10, 3
      %p150 = pnand %p148, %p149
      %p151 = pneg %p150
      // Predicated region
      $region29: #{tpu_custom_call.1} parent=5 // pred_check
        _
      $region30: #{tpu_custom_call.1} parent=5 // pred_check_branch
        %153 = sbr.rel (%p150) target = $region32
      $region31: #{tpu_custom_call.1} parent=5 // pred_region
        %s154 = ssub.s32 %s10, 1
        // Predicated region
        $region33: #{tpu_custom_call.1} parent=31 // pred_check
          %p155 = pneg %p57
        $region34: #{tpu_custom_call.1} parent=31 // pred_check_branch
          %157 = sbr.rel (%p155) target = $region36
        $region35: #{tpu_custom_call.1} parent=31 // pred_region
          %158 = dma.done [#allocation3], 8192
        $region36: #{tpu_custom_call.1} parent=31 // pred_fallthru
          _
        %s159 = smul.u32 16, %s15
        %p160 = scmp.lt.s32.totalorder %s159, 31
        %s161 = scalar_select %p160, %s159, 31
        %s162 = smul.addr %s161, 8
        %s163 = scalar_lea.vmem %s0, %s162
        %p164 = pneg %p36
        %p165 = pneg %p33
        %p166 = pneg %p57
        %p167 = pneg %p54
        %p168 = pneg %p78
        %p169 = pneg %p75
        %p170 = pneg %p104
        %p171 = pneg %p101
        %s172 = smul.u32 16, %s15
        %p173 = scmp.lt.s32.totalorder %s172, 31
        %s174 = scalar_select %p173, %s172, 31
        %s175 = smul.addr %s174, 8
        %s176 = scalar_lea.vmem %s3, %s175
        %s177 = smul.u32 16, %s15
        %p178 = scmp.lt.s32.totalorder %s177, 31
        %s179 = scalar_select %p178, %s177, 31
        %s180 = smul.addr %s179, 8
        %s181 = scalar_lea.vmem %s0, %s180
        %s182 = smul.u32 16, %s15
        %s183 = smul.u32 16, %s15
        %p184 = scmp.lt.s32.totalorder %s183, 31
        %s185 = scalar_select %p184, %s183, 31
        %s186 = smul.addr %s185, 8
        %s187 = scalar_lea.vmem %s3, %s186
        %s188 = smul.u32 16, %s15
        %v189 = vld [vmem:[%s181] sm:$0xff]
        %v190 = vld [vmem:[%s181 + $0x8] sm:$0xff]
        %v191 = vld [vmem:[%s181 + $0x10] sm:$0xff]
        %v192 = vld [vmem:[%s181 + $0x18] sm:$0xff]
        %v193 = vld [vmem:[%s181 + $0x20] sm:$0xff]
        %v194 = vld [vmem:[%s181 + $0x28] sm:$0xff]
        %v195 = vld [vmem:[%s181 + $0x30] sm:$0xff]
        %v196 = vld [vmem:[%s181 + $0x38] sm:$0xff]
        %v197 = vld [vmem:[%s181 + $0x40] sm:$0xff]
        %v198 = vld [vmem:[%s181 + $0x48] sm:$0xff]
        %v199 = vld [vmem:[%s181 + $0x50] sm:$0xff]
        %v200 = vld [vmem:[%s181 + $0x58] sm:$0xff]
        %v201 = vld [vmem:[%s181 + $0x60] sm:$0xff]
        %v202 = vld [vmem:[%s181 + $0x68] sm:$0xff]
        %v203 = vld [vmem:[%s181 + $0x70] sm:$0xff]
        %v204 = vld [vmem:[%s181 + $0x78] sm:$0xff]
        %v205 = vld [vmem:[#allocation2] sm:$0xff]
        %207 = vset.pattern.permute.xlu0 0
        %208 = vperm.xlu0 %207, %v189
        %v209 = vpop.permute.xlu0 %208
        %212 = vset.pattern.permute.xlu0 0
        %213 = vperm.xlu0 %212, %v190
        %v214 = vpop.permute.xlu0 %213
        %217 = vset.pattern.permute.xlu0 0
        %218 = vperm.xlu0 %217, %v191
        %v219 = vpop.permute.xlu0 %218
        %222 = vset.pattern.permute.xlu0 0
        %223 = vperm.xlu0 %222, %v192
        %v224 = vpop.permute.xlu0 %223
        %227 = vset.pattern.permute.xlu0 0
        %228 = vperm.xlu0 %227, %v193
        %v229 = vpop.permute.xlu0 %228
        %232 = vset.pattern.permute.xlu0 0
        %233 = vperm.xlu0 %232, %v194
        %v234 = vpop.permute.xlu0 %233
        %237 = vset.pattern.permute.xlu0 0
        %238 = vperm.xlu0 %237, %v195
        %v239 = vpop.permute.xlu0 %238
        %242 = vset.pattern.permute.xlu0 0
        %243 = vperm.xlu0 %242, %v196
        %v244 = vpop.permute.xlu0 %243
        %247 = vset.pattern.permute.xlu0 0
        %248 = vperm.xlu0 %247, %v197
        %v249 = vpop.permute.xlu0 %248
        %252 = vset.pattern.permute.xlu0 0
        %253 = vperm.xlu0 %252, %v198
        %v254 = vpop.permute.xlu0 %253
        %257 = vset.pattern.permute.xlu0 0
        %258 = vperm.xlu0 %257, %v199
        %v259 = vpop.permute.xlu0 %258
        %262 = vset.pattern.permute.xlu0 0
        %263 = vperm.xlu0 %262, %v200
        %v264 = vpop.permute.xlu0 %263
        %267 = vset.pattern.permute.xlu0 0
        %268 = vperm.xlu0 %267, %v201
        %v269 = vpop.permute.xlu0 %268
        %272 = vset.pattern.permute.xlu0 0
        %273 = vperm.xlu0 %272, %v202
        %v274 = vpop.permute.xlu0 %273
        %277 = vset.pattern.permute.xlu0 0
        %278 = vperm.xlu0 %277, %v203
        %v279 = vpop.permute.xlu0 %278
        %282 = vset.pattern.permute.xlu0 0
        %283 = vperm.xlu0 %282, %v204
        %v284 = vpop.permute.xlu0 %283
        %v286 = vlaneseq
        %v287 = vshrl.u32 %v286, 7
        %v288 = vsub.s32 0, %v287
        %v289 = vrot.slane %v205, %v288
        %v290 = vmul.f32 %v209, %v289
        %v291 = vmul.f32 %v214, %v289
        %v292 = vmul.f32 %v219, %v289
        %v293 = vmul.f32 %v224, %v289
        %v294 = vmul.f32 %v229, %v289
        %v295 = vmul.f32 %v234, %v289
        %v296 = vmul.f32 %v239, %v289
        %v297 = vmul.f32 %v244, %v289
        %v298 = vmul.f32 %v249, %v289
        %v299 = vmul.f32 %v254, %v289
        %v300 = vmul.f32 %v259, %v289
        %v301 = vmul.f32 %v264, %v289
        %v302 = vmul.f32 %v269, %v289
        %v303 = vmul.f32 %v274, %v289
        %v304 = vmul.f32 %v279, %v289
        %v305 = vmul.f32 %v284, %v289
        %v306 = vld [vmem:[%s2] sm:$0x1]
        %v308 = vlaneseq
        %v309 = vshrl.u32 %v308, 7
        %v310 = vsub.s32 0, %v309
        %v311 = vrot.slane %v306, %v310
        %v313 = vadd.f32 %v290, %v311
        %v314 = vadd.f32 %v291, %v311
        %v315 = vadd.f32 %v292, %v311
        %v316 = vadd.f32 %v293, %v311
        %v317 = vadd.f32 %v294, %v311
        %v318 = vadd.f32 %v295, %v311
        %v319 = vadd.f32 %v296, %v311
        %v320 = vadd.f32 %v297, %v311
        %v321 = vadd.f32 %v298, %v311
        %v322 = vadd.f32 %v299, %v311
        %v323 = vadd.f32 %v300, %v311
        %v324 = vadd.f32 %v301, %v311
        %v325 = vadd.f32 %v302, %v311
        %v326 = vadd.f32 %v303, %v311
        %v327 = vadd.f32 %v304, %v311
        %v328 = vadd.f32 %v305, %v311
        %329 = vset.pattern.permute.xlu0 1
        %330 = vperm.xlu0 %329, %v189
        %v331 = vpop.permute.xlu0 %330
        %333 = vset.pattern.permute.xlu0 1
        %334 = vperm.xlu0 %333, %v190
        %v335 = vpop.permute.xlu0 %334
        %337 = vset.pattern.permute.xlu0 1
        %338 = vperm.xlu0 %337, %v191
        %v339 = vpop.permute.xlu0 %338
        %341 = vset.pattern.permute.xlu0 1
        %342 = vperm.xlu0 %341, %v192
        %v343 = vpop.permute.xlu0 %342
        %345 = vset.pattern.permute.xlu0 1
        %346 = vperm.xlu0 %345, %v193
        %v347 = vpop.permute.xlu0 %346
        %349 = vset.pattern.permute.xlu0 1
        %350 = vperm.xlu0 %349, %v194
        %v351 = vpop.permute.xlu0 %350
        %353 = vset.pattern.permute.xlu0 1
        %354 = vperm.xlu0 %353, %v195
        %v355 = vpop.permute.xlu0 %354
        %357 = vset.pattern.permute.xlu0 1
        %358 = vperm.xlu0 %357, %v196
        %v359 = vpop.permute.xlu0 %358
        %361 = vset.pattern.permute.xlu0 1
        %362 = vperm.xlu0 %361, %v197
        %v363 = vpop.permute.xlu0 %362
        %365 = vset.pattern.permute.xlu0 1
        %366 = vperm.xlu0 %365, %v198
        %v367 = vpop.permute.xlu0 %366
        %369 = vset.pattern.permute.xlu0 1
        %370 = vperm.xlu0 %369, %v199
        %v371 = vpop.permute.xlu0 %370
        %373 = vset.pattern.permute.xlu0 1
        %374 = vperm.xlu0 %373, %v200
        %v375 = vpop.permute.xlu0 %374
        %377 = vset.pattern.permute.xlu0 1
        %378 = vperm.xlu0 %377, %v201
        %v379 = vpop.permute.xlu0 %378
        %381 = vset.pattern.permute.xlu0 1
        %382 = vperm.xlu0 %381, %v202
        %v383 = vpop.permute.xlu0 %382
        %385 = vset.pattern.permute.xlu0 1
        %386 = vperm.xlu0 %385, %v203
        %v387 = vpop.permute.xlu0 %386
        %389 = vset.pattern.permute.xlu0 1
        %390 = vperm.xlu0 %389, %v204
        %v391 = vpop.permute.xlu0 %390
        %v393 = vlaneseq
        %v394 = vshrl.u32 %v393, 7
        %v395 = vsub.s32 1, %v394
        %v396 = vrot.slane %v205, %v395
        %v397 = vmul.f32 %v331, %v396
        %v398 = vmul.f32 %v335, %v396
        %v399 = vmul.f32 %v339, %v396
        %v400 = vmul.f32 %v343, %v396
        %v401 = vmul.f32 %v347, %v396
        %v402 = vmul.f32 %v351, %v396
        %v403 = vmul.f32 %v355, %v396
        %v404 = vmul.f32 %v359, %v396
        %v405 = vmul.f32 %v363, %v396
        %v406 = vmul.f32 %v367, %v396
        %v407 = vmul.f32 %v371, %v396
        %v408 = vmul.f32 %v375, %v396
        %v409 = vmul.f32 %v379, %v396
        %v410 = vmul.f32 %v383, %v396
        %v411 = vmul.f32 %v387, %v396
        %v412 = vmul.f32 %v391, %v396
        %v413 = vadd.f32 %v313, %v397
        %v414 = vadd.f32 %v314, %v398
        %v415 = vadd.f32 %v315, %v399
        %v416 = vadd.f32 %v316, %v400
        %v417 = vadd.f32 %v317, %v401
        %v418 = vadd.f32 %v318, %v402
        %v419 = vadd.f32 %v319, %v403
        %v420 = vadd.f32 %v320, %v404
        %v421 = vadd.f32 %v321, %v405
        %v422 = vadd.f32 %v322, %v406
        %v423 = vadd.f32 %v323, %v407
        %v424 = vadd.f32 %v324, %v408
        %v425 = vadd.f32 %v325, %v409
        %v426 = vadd.f32 %v326, %v410
        %v427 = vadd.f32 %v327, %v411
        %v428 = vadd.f32 %v328, %v412
        %v429 = vtanh.pop %v413
        %v430 = vtanh.pop %v414
        %v431 = vtanh.pop %v415
        %v432 = vtanh.pop %v416
        %v433 = vtanh.pop %v417
        %v434 = vtanh.pop %v418
        %v435 = vtanh.pop %v419
        %v436 = vtanh.pop %v420
        %v437 = vtanh.pop %v421
        %v438 = vtanh.pop %v422
        %v439 = vtanh.pop %v423
        %v440 = vtanh.pop %v424
        %v441 = vtanh.pop %v425
        %v442 = vtanh.pop %v426
        %v443 = vtanh.pop %v427
        %v444 = vtanh.pop %v428
        %s445 = scalar_lea.vmem [#allocation2], 128
        %v446 = vld [vmem:[%s445] sm:$0xff]
        %v447 = vld [vmem:[%s445 + $0x8] sm:$0xff]
        %v448 = vld [vmem:[%s445 + $0x10] sm:$0xff]
        %v449 = vld [vmem:[%s445 + $0x18] sm:$0xff]
        %v450 = vld [vmem:[%s445 + $0x20] sm:$0xff]
        %v451 = vld [vmem:[%s445 + $0x28] sm:$0xff]
        %v452 = vld [vmem:[%s445 + $0x30] sm:$0xff]
        %v453 = vld [vmem:[%s445 + $0x38] sm:$0xff]
        %v454 = vld [vmem:[%s445 + $0x40] sm:$0xff]
        %v455 = vld [vmem:[%s445 + $0x48] sm:$0xff]
        %v456 = vld [vmem:[%s445 + $0x50] sm:$0xff]
        %v457 = vld [vmem:[%s445 + $0x58] sm:$0xff]
        %v458 = vld [vmem:[%s445 + $0x60] sm:$0xff]
        %v459 = vld [vmem:[%s445 + $0x68] sm:$0xff]
        %v460 = vld [vmem:[%s445 + $0x70] sm:$0xff]
        %v461 = vld [vmem:[%s445 + $0x78] sm:$0xff]
        %s462 = scalar_lea.vmem %s2, 1
        %v463 = vld [vmem:[%s462] sm:$0x1]
        %v465 = vlaneseq
        %v466 = vshrl.u32 %v465, 7
        %v467 = vsub.s32 0, %v466
        %v468 = vrot.slane %v463, %v467
        %470 = vmatprep.subr.mxu0 0.0
        %v471 = vand.u32 %v446, 4294901760
        %472 = vmatpush1.msra.mxu0 %v471
        %473 = vmatprep.subr.mxu0 0.0
        %v474 = vand.u32 %v447, 4294901760
        %475 = vmatpush1.msra.mxu0 %v474
        %476 = vmatprep.subr.mxu0 0.0
        %v477 = vand.u32 %v448, 4294901760
        %478 = vmatpush1.msra.mxu0 %v477
        %479 = vmatprep.subr.mxu0 0.0
        %v480 = vand.u32 %v449, 4294901760
        %481 = vmatpush1.msra.mxu0 %v480
        %482 = vmatprep.subr.mxu0 0.0
        %v483 = vand.u32 %v450, 4294901760
        %484 = vmatpush1.msra.mxu0 %v483
        %485 = vmatprep.subr.mxu0 0.0
        %v486 = vand.u32 %v451, 4294901760
        %487 = vmatpush1.msra.mxu0 %v486
        %488 = vmatprep.subr.mxu0 0.0
        %v489 = vand.u32 %v452, 4294901760
        %490 = vmatpush1.msra.mxu0 %v489
        %491 = vmatprep.subr.mxu0 0.0
        %v492 = vand.u32 %v453, 4294901760
        %493 = vmatpush1.msra.mxu0 %v492
        %494 = vmatprep.subr.mxu0 0.0
        %v495 = vand.u32 %v454, 4294901760
        %496 = vmatpush1.msra.mxu0 %v495
        %497 = vmatprep.subr.mxu0 0.0
        %v498 = vand.u32 %v455, 4294901760
        %499 = vmatpush1.msra.mxu0 %v498
        %500 = vmatprep.subr.mxu0 0.0
        %v501 = vand.u32 %v456, 4294901760
        %502 = vmatpush1.msra.mxu0 %v501
        %503 = vmatprep.subr.mxu0 0.0
        %v504 = vand.u32 %v457, 4294901760
        %505 = vmatpush1.msra.mxu0 %v504
        %506 = vmatprep.subr.mxu0 0.0
        %v507 = vand.u32 %v458, 4294901760
        %508 = vmatpush1.msra.mxu0 %v507
        %509 = vmatprep.subr.mxu0 0.0
        %v510 = vand.u32 %v459, 4294901760
        %511 = vmatpush1.msra.mxu0 %v510
        %512 = vmatprep.subr.mxu0 0.0
        %v513 = vand.u32 %v460, 4294901760
        %514 = vmatpush1.msra.mxu0 %v513
        %515 = vmatprep.subr.mxu0 0.0
        %v516 = vand.u32 %v461, 4294901760
        %517 = vmatpush1.msra.mxu0 %v516
        %518 = vmatprep.subr.mxu0 0.0
        %519 = vmatpush1.msra.mxu0 0.0
        %520 = vmatprep.subr.mxu0 0.0
        %521 = vmatpush1.msra.mxu0 0.0
        %522 = vmatprep.subr.mxu0 0.0
        %523 = vmatpush1.msra.mxu0 0.0
        %524 = vmatprep.subr.mxu0 0.0
        %525 = vmatpush1.msra.mxu0 0.0
        %526 = vmatprep.subr.mxu0 0.0
        %527 = vmatpush1.msra.mxu0 0.0
        %528 = vmatprep.subr.mxu0 0.0
        %529 = vmatpush1.msra.mxu0 0.0
        %530 = vmatprep.subr.mxu0 0.0
        %531 = vmatpush1.msra.mxu0 0.0
        %532 = vmatprep.subr.mxu0 0.0
        %533 = vmatpush1.msra.mxu0 0.0
        %534 = vmatprep.subr.mxu0 0.0
        %535 = vmatpush1.msra.mxu0 0.0
        %536 = vmatprep.subr.mxu0 0.0
        %537 = vmatpush1.msra.mxu0 0.0
        %538 = vmatprep.subr.mxu0 0.0
        %539 = vmatpush1.msra.mxu0 0.0
        %540 = vmatprep.subr.mxu0 0.0
        %541 = vmatpush1.msra.mxu0 0.0
        %542 = vmatprep.subr.mxu0 0.0
        %543 = vmatpush1.msra.mxu0 0.0
        %544 = vmatprep.subr.mxu0 0.0
        %545 = vmatpush1.msra.mxu0 0.0
        %546 = vmatprep.subr.mxu0 0.0
        %547 = vmatpush1.msra.mxu0 0.0
        %548 = vmatprep.subr.mxu0 0.0
        %549 = vmatpush1.msra.mxu0 0.0
        %550 = vmatprep.mubr.f32.mxu0 0.0
        %v551 = vand.u32 %v429, 4294901760
        %v552 = vsub.f32 %v429, %v551
        %v553 = vand.u32 %v552, 4294901760
        %v554 = vsub.f32 %v552, %v553
        %v555 = vand.u32 %v554, 4294901760
        %556 = vmatmul.mubr.f32.gmra.mrb[0].mxu0 %v555
        %v557 = vpop.f32.mrb[0].mxu0
        %v558 = vadd.f32 %v468, %v557
        %v559 = vpop.f32.mrb[0].mxu0
        %560 = vmatprep.mubr.f32.mxu0 0.0
        %v561 = vand.u32 %v430, 4294901760
        %v562 = vsub.f32 %v430, %v561
        %v563 = vand.u32 %v562, 4294901760
        %v564 = vsub.f32 %v562, %v563
        %v565 = vand.u32 %v564, 4294901760
        %566 = vmatmul.mubr.f32.gmra.mrb[0].mxu0 %v565
        %v567 = vpop.f32.mrb[0].mxu0
        %v568 = vadd.f32 %v468, %v567
        %v569 = vpop.f32.mrb[0].mxu0
        %570 = vmatprep.mubr.f32.mxu0 0.0
        %v571 = vand.u32 %v431, 4294901760
        %v572 = vsub.f32 %v431, %v571
        %v573 = vand.u32 %v572, 4294901760
        %v574 = vsub.f32 %v572, %v573
        %v575 = vand.u32 %v574, 4294901760
        %576 = vmatmul.mubr.f32.gmra.mrb[0].mxu0 %v575
        %v577 = vpop.f32.mrb[0].mxu0
        %v578 = vadd.f32 %v468, %v577
        %v579 = vpop.f32.mrb[0].mxu0
        %580 = vmatprep.mubr.f32.mxu0 0.0
        %v581 = vand.u32 %v432, 4294901760
        %v582 = vsub.f32 %v432, %v581
        %v583 = vand.u32 %v582, 4294901760
        %v584 = vsub.f32 %v582, %v583
        %v585 = vand.u32 %v584, 4294901760
        %586 = vmatmul.mubr.f32.gmra.mrb[0].mxu0 %v585
        %v587 = vpop.f32.mrb[0].mxu0
        %v588 = vadd.f32 %v468, %v587
        %v589 = vpop.f32.mrb[0].mxu0
        %590 = vmatprep.mubr.f32.mxu0 0.0
        %v591 = vand.u32 %v433, 4294901760
        %v592 = vsub.f32 %v433, %v591
        %v593 = vand.u32 %v592, 4294901760
        %v594 = vsub.f32 %v592, %v593
        %v595 = vand.u32 %v594, 4294901760
        %596 = vmatmul.mubr.f32.gmra.mrb[0].mxu0 %v595
        %v597 = vpop.f32.mrb[0].mxu0
        %v598 = vadd.f32 %v468, %v597
        %v599 = vpop.f32.mrb[0].mxu0
        %600 = vmatprep.mubr.f32.mxu0 0.0
        %v601 = vand.u32 %v434, 4294901760
        %v602 = vsub.f32 %v434, %v601
        %v603 = vand.u32 %v602, 4294901760
        %v604 = vsub.f32 %v602, %v603
        %v605 = vand.u32 %v604, 4294901760
        %606 = vmatmul.mubr.f32.gmra.mrb[0].mxu0 %v605
        %v607 = vpop.f32.mrb[0].mxu0
        %v608 = vadd.f32 %v468, %v607
        %v609 = vpop.f32.mrb[0].mxu0
        %610 = vmatprep.mubr.f32.mxu0 0.0
        %v611 = vand.u32 %v435, 4294901760
        %v612 = vsub.f32 %v435, %v611
        %v613 = vand.u32 %v612, 4294901760
        %v614 = vsub.f32 %v612, %v613
        %v615 = vand.u32 %v614, 4294901760
        %616 = vmatmul.mubr.f32.gmra.mrb[0].mxu0 %v615
        %v617 = vpop.f32.mrb[0].mxu0
        %v618 = vadd.f32 %v468, %v617
        %v619 = vpop.f32.mrb[0].mxu0
        %620 = vmatprep.mubr.f32.mxu0 0.0
        %v621 = vand.u32 %v436, 4294901760
        %v622 = vsub.f32 %v436, %v621
        %v623 = vand.u32 %v622, 4294901760
        %v624 = vsub.f32 %v622, %v623
        %v625 = vand.u32 %v624, 4294901760
        %626 = vmatmul.mubr.f32.gmra.mrb[0].mxu0 %v625
        %v627 = vpop.f32.mrb[0].mxu0
        %v628 = vadd.f32 %v468, %v627
        %v629 = vpop.f32.mrb[0].mxu0
        %630 = vmatprep.mubr.f32.mxu0 0.0
        %v631 = vand.u32 %v437, 4294901760
        %v632 = vsub.f32 %v437, %v631
        %v633 = vand.u32 %v632, 4294901760
        %v634 = vsub.f32 %v632, %v633
        %v635 = vand.u32 %v634, 4294901760
        %636 = vmatmul.mubr.f32.gmra.mrb[0].mxu0 %v635
        %v637 = vpop.f32.mrb[0].mxu0
        %v638 = vadd.f32 %v468, %v637
        %v639 = vpop.f32.mrb[0].mxu0
        %640 = vmatprep.mubr.f32.mxu0 0.0
        %v641 = vand.u32 %v438, 4294901760
        %v642 = vsub.f32 %v438, %v641
        %v643 = vand.u32 %v642, 4294901760
        %v644 = vsub.f32 %v642, %v643
        %v645 = vand.u32 %v644, 4294901760
        %646 = vmatmul.mubr.f32.gmra.mrb[0].mxu0 %v645
        %v647 = vpop.f32.mrb[0].mxu0
        %v648 = vadd.f32 %v468, %v647
        %v649 = vpop.f32.mrb[0].mxu0
        %650 = vmatprep.mubr.f32.mxu0 0.0
        %v651 = vand.u32 %v439, 4294901760
        %v652 = vsub.f32 %v439, %v651
        %v653 = vand.u32 %v652, 4294901760
        %v654 = vsub.f32 %v652, %v653
        %v655 = vand.u32 %v654, 4294901760
        %656 = vmatmul.mubr.f32.gmra.mrb[0].mxu0 %v655
        %v657 = vpop.f32.mrb[0].mxu0
        %v658 = vadd.f32 %v468, %v657
        %v659 = vpop.f32.mrb[0].mxu0
        %660 = vmatprep.mubr.f32.mxu0 0.0
        %v661 = vand.u32 %v440, 4294901760
        %v662 = vsub.f32 %v440, %v661
        %v663 = vand.u32 %v662, 4294901760
        %v664 = vsub.f32 %v662, %v663
        %v665 = vand.u32 %v664, 4294901760
        %666 = vmatmul.mubr.f32.gmra.mrb[0].mxu0 %v665
        %v667 = vpop.f32.mrb[0].mxu0
        %v668 = vadd.f32 %v468, %v667
        %v669 = vpop.f32.mrb[0].mxu0
        %670 = vmatprep.mubr.f32.mxu0 0.0
        %v671 = vand.u32 %v441, 4294901760
        %v672 = vsub.f32 %v441, %v671
        %v673 = vand.u32 %v672, 4294901760
        %v674 = vsub.f32 %v672, %v673
        %v675 = vand.u32 %v674, 4294901760
        %676 = vmatmul.mubr.f32.gmra.mrb[0].mxu0 %v675
        %v677 = vpop.f32.mrb[0].mxu0
        %v678 = vadd.f32 %v468, %v677
        %v679 = vpop.f32.mrb[0].mxu0
        %680 = vmatprep.mubr.f32.mxu0 0.0
        %v681 = vand.u32 %v442, 4294901760
        %v682 = vsub.f32 %v442, %v681
        %v683 = vand.u32 %v682, 4294901760
        %v684 = vsub.f32 %v682, %v683
        %v685 = vand.u32 %v684, 4294901760
        %686 = vmatmul.mubr.f32.gmra.mrb[0].mxu0 %v685
        %v687 = vpop.f32.mrb[0].mxu0
        %v688 = vadd.f32 %v468, %v687
        %v689 = vpop.f32.mrb[0].mxu0
        %690 = vmatprep.mubr.f32.mxu0 0.0
        %v691 = vand.u32 %v443, 4294901760
        %v692 = vsub.f32 %v443, %v691
        %v693 = vand.u32 %v692, 4294901760
        %v694 = vsub.f32 %v692, %v693
        %v695 = vand.u32 %v694, 4294901760
        %696 = vmatmul.mubr.f32.gmra.mrb[0].mxu0 %v695
        %v697 = vpop.f32.mrb[0].mxu0
        %v698 = vadd.f32 %v468, %v697
        %v699 = vpop.f32.mrb[0].mxu0
        %700 = vmatprep.mubr.f32.mxu0 0.0
        %v701 = vand.u32 %v444, 4294901760
        %v702 = vsub.f32 %v444, %v701
        %v703 = vand.u32 %v702, 4294901760
        %v704 = vsub.f32 %v702, %v703
        %v705 = vand.u32 %v704, 4294901760
        %706 = vmatmul.mubr.f32.gmra.mrb[0].mxu0 %v705
        %v707 = vpop.f32.mrb[0].mxu0
        %v708 = vadd.f32 %v468, %v707
        %v709 = vpop.f32.mrb[0].mxu0
        %710 = vdwg.mxu0
        %711 = vmatprep.subr.mxu0 0.0
        %v712 = vand.u32 %v446, 4294901760
        %v713 = vsub.f32 %v446, %v712
        %v714 = vand.u32 %v713, 4294901760
        %v715 = vsub.f32 %v713, %v714
        %v716 = vand.u32 %v715, 4294901760
        %717 = vmatpush1.msra.mxu0 %v716
        %718 = vmatprep.subr.mxu0 0.0
        %v719 = vand.u32 %v447, 4294901760
        %v720 = vsub.f32 %v447, %v719
        %v721 = vand.u32 %v720, 4294901760
        %v722 = vsub.f32 %v720, %v721
        %v723 = vand.u32 %v722, 4294901760
        %724 = vmatpush1.msra.mxu0 %v723
        %725 = vmatprep.subr.mxu0 0.0
        %v726 = vand.u32 %v448, 4294901760
        %v727 = vsub.f32 %v448, %v726
        %v728 = vand.u32 %v727, 4294901760
        %v729 = vsub.f32 %v727, %v728
        %v730 = vand.u32 %v729, 4294901760
        %731 = vmatpush1.msra.mxu0 %v730
        %732 = vmatprep.subr.mxu0 0.0
        %v733 = vand.u32 %v449, 4294901760
        %v734 = vsub.f32 %v449, %v733
        %v735 = vand.u32 %v734, 4294901760
        %v736 = vsub.f32 %v734, %v735
        %v737 = vand.u32 %v736, 4294901760
        %738 = vmatpush1.msra.mxu0 %v737
        %739 = vmatprep.subr.mxu0 0.0
        %v740 = vand.u32 %v450, 4294901760
        %v741 = vsub.f32 %v450, %v740
        %v742 = vand.u32 %v741, 4294901760
        %v743 = vsub.f32 %v741, %v742
        %v744 = vand.u32 %v743, 4294901760
        %745 = vmatpush1.msra.mxu0 %v744
        %746 = vmatprep.subr.mxu0 0.0
        %v747 = vand.u32 %v451, 4294901760
        %v748 = vsub.f32 %v451, %v747
        %v749 = vand.u32 %v748, 4294901760
        %v750 = vsub.f32 %v748, %v749
        %v751 = vand.u32 %v750, 4294901760
        %752 = vmatpush1.msra.mxu0 %v751
        %753 = vmatprep.subr.mxu0 0.0
        %v754 = vand.u32 %v452, 4294901760
        %v755 = vsub.f32 %v452, %v754
        %v756 = vand.u32 %v755, 4294901760
        %v757 = vsub.f32 %v755, %v756
        %v758 = vand.u32 %v757, 4294901760
        %759 = vmatpush1.msra.mxu0 %v758
        %760 = vmatprep.subr.mxu0 0.0
        %v761 = vand.u32 %v453, 4294901760
        %v762 = vsub.f32 %v453, %v761
        %v763 = vand.u32 %v762, 4294901760
        %v764 = vsub.f32 %v762, %v763
        %v765 = vand.u32 %v764, 4294901760
        %766 = vmatpush1.msra.mxu0 %v765
        %767 = vmatprep.subr.mxu0 0.0
        %v768 = vand.u32 %v454, 4294901760
        %v769 = vsub.f32 %v454, %v768
        %v770 = vand.u32 %v769, 4294901760
        %v771 = vsub.f32 %v769, %v770
        %v772 = vand.u32 %v771, 4294901760
        %773 = vmatpush1.msra.mxu0 %v772
        %774 = vmatprep.subr.mxu0 0.0
        %v775 = vand.u32 %v455, 4294901760
        %v776 = vsub.f32 %v455, %v775
        %v777 = vand.u32 %v776, 4294901760
        %v778 = vsub.f32 %v776, %v777
        %v779 = vand.u32 %v778, 4294901760
        %780 = vmatpush1.msra.mxu0 %v779
        %781 = vmatprep.subr.mxu0 0.0
        %v782 = vand.u32 %v456, 4294901760
        %v783 = vsub.f32 %v456, %v782
        %v784 = vand.u32 %v783, 4294901760
        %v785 = vsub.f32 %v783, %v784
        %v786 = vand.u32 %v785, 4294901760
        %787 = vmatpush1.msra.mxu0 %v786
        %788 = vmatprep.subr.mxu0 0.0
        %v789 = vand.u32 %v457, 4294901760
        %v790 = vsub.f32 %v457, %v789
        %v791 = vand.u32 %v790, 4294901760
        %v792 = vsub.f32 %v790, %v791
        %v793 = vand.u32 %v792, 4294901760
        %794 = vmatpush1.msra.mxu0 %v793
        %795 = vmatprep.subr.mxu0 0.0
        %v796 = vand.u32 %v458, 4294901760
        %v797 = vsub.f32 %v458, %v796
        %v798 = vand.u32 %v797, 4294901760
        %v799 = vsub.f32 %v797, %v798
        %v800 = vand.u32 %v799, 4294901760
        %801 = vmatpush1.msra.mxu0 %v800
        %802 = vmatprep.subr.mxu0 0.0
        %v803 = vand.u32 %v459, 4294901760
        %v804 = vsub.f32 %v459, %v803
        %v805 = vand.u32 %v804, 4294901760
        %v806 = vsub.f32 %v804, %v805
        %v807 = vand.u32 %v806, 4294901760
        %808 = vmatpush1.msra.mxu0 %v807
        %809 = vmatprep.subr.mxu0 0.0
        %v810 = vand.u32 %v460, 4294901760
        %v811 = vsub.f32 %v460, %v810
        %v812 = vand.u32 %v811, 4294901760
        %v813 = vsub.f32 %v811, %v812
        %v814 = vand.u32 %v813, 4294901760
        %815 = vmatpush1.msra.mxu0 %v814
        %816 = vmatprep.subr.mxu0 0.0
        %v817 = vand.u32 %v461, 4294901760
        %v818 = vsub.f32 %v461, %v817
        %v819 = vand.u32 %v818, 4294901760
        %v820 = vsub.f32 %v818, %v819
        %v821 = vand.u32 %v820, 4294901760
        %822 = vmatpush1.msra.mxu0 %v821
        %823 = vmatprep.subr.mxu0 0.0
        %824 = vmatpush1.msra.mxu0 0.0
        %825 = vmatprep.subr.mxu0 0.0
        %826 = vmatpush1.msra.mxu0 0.0
        %827 = vmatprep.subr.mxu0 0.0
        %828 = vmatpush1.msra.mxu0 0.0
        %829 = vmatprep.subr.mxu0 0.0
        %830 = vmatpush1.msra.mxu0 0.0
        %831 = vmatprep.subr.mxu0 0.0
        %832 = vmatpush1.msra.mxu0 0.0
        %833 = vmatprep.subr.mxu0 0.0
        %834 = vmatpush1.msra.mxu0 0.0
        %835 = vmatprep.subr.mxu0 0.0
        %836 = vmatpush1.msra.mxu0 0.0
        %837 = vmatprep.subr.mxu0 0.0
        %838 = vmatpush1.msra.mxu0 0.0
        %839 = vmatprep.subr.mxu0 0.0
        %840 = vmatpush1.msra.mxu0 0.0
        %841 = vmatprep.subr.mxu0 0.0
        %842 = vmatpush1.msra.mxu0 0.0
        %843 = vmatprep.subr.mxu0 0.0
        %844 = vmatpush1.msra.mxu0 0.0
        %845 = vmatprep.subr.mxu0 0.0
        %846 = vmatpush1.msra.mxu0 0.0
        %847 = vmatprep.subr.mxu0 0.0
        %848 = vmatpush1.msra.mxu0 0.0
        %849 = vmatprep.subr.mxu0 0.0
        %850 = vmatpush1.msra.mxu0 0.0
        %851 = vmatprep.subr.mxu0 0.0
        %852 = vmatpush1.msra.mxu0 0.0
        %853 = vmatprep.subr.mxu0 0.0
        %854 = vmatpush1.msra.mxu0 0.0
        %855 = vmatprep.mubr.f32.mxu0 0.0
        %v856 = vand.u32 %v429, 4294901760
        %857 = vmatmul.mubr.f32.gmra.mrb[0].mxu0 %v856
        %v858 = vpop.f32.mrb[0].mxu0
        %v859 = vadd.f32 %v558, %v858
        %v860 = vpop.f32.mrb[0].mxu0
        %861 = vmatprep.mubr.f32.mxu0 0.0
        %v862 = vand.u32 %v430, 4294901760
        %863 = vmatmul.mubr.f32.gmra.mrb[0].mxu0 %v862
        %v864 = vpop.f32.mrb[0].mxu0
        %v865 = vadd.f32 %v568, %v864
        %v866 = vpop.f32.mrb[0].mxu0
        %867 = vmatprep.mubr.f32.mxu0 0.0
        %v868 = vand.u32 %v431, 4294901760
        %869 = vmatmul.mubr.f32.gmra.mrb[0].mxu0 %v868
        %v870 = vpop.f32.mrb[0].mxu0
        %v871 = vadd.f32 %v578, %v870
        %v872 = vpop.f32.mrb[0].mxu0
        %873 = vmatprep.mubr.f32.mxu0 0.0
        %v874 = vand.u32 %v432, 4294901760
        %875 = vmatmul.mubr.f32.gmra.mrb[0].mxu0 %v874
        %v876 = vpop.f32.mrb[0].mxu0
        %v877 = vadd.f32 %v588, %v876
        %v878 = vpop.f32.mrb[0].mxu0
        %879 = vmatprep.mubr.f32.mxu0 0.0
        %v880 = vand.u32 %v433, 4294901760
        %881 = vmatmul.mubr.f32.gmra.mrb[0].mxu0 %v880
        %v882 = vpop.f32.mrb[0].mxu0
        %v883 = vadd.f32 %v598, %v882
        %v884 = vpop.f32.mrb[0].mxu0
        %885 = vmatprep.mubr.f32.mxu0 0.0
        %v886 = vand.u32 %v434, 4294901760
        %887 = vmatmul.mubr.f32.gmra.mrb[0].mxu0 %v886
        %v888 = vpop.f32.mrb[0].mxu0
        %v889 = vadd.f32 %v608, %v888
        %v890 = vpop.f32.mrb[0].mxu0
        %891 = vmatprep.mubr.f32.mxu0 0.0
        %v892 = vand.u32 %v435, 4294901760
        %893 = vmatmul.mubr.f32.gmra.mrb[0].mxu0 %v892
        %v894 = vpop.f32.mrb[0].mxu0
        %v895 = vadd.f32 %v618, %v894
        %v896 = vpop.f32.mrb[0].mxu0
        %897 = vmatprep.mubr.f32.mxu0 0.0
        %v898 = vand.u32 %v436, 4294901760
        %899 = vmatmul.mubr.f32.gmra.mrb[0].mxu0 %v898
        %v900 = vpop.f32.mrb[0].mxu0
        %v901 = vadd.f32 %v628, %v900
        %v902 = vpop.f32.mrb[0].mxu0
        %903 = vmatprep.mubr.f32.mxu0 0.0
        %v904 = vand.u32 %v437, 4294901760
        %905 = vmatmul.mubr.f32.gmra.mrb[0].mxu0 %v904
        %v906 = vpop.f32.mrb[0].mxu0
        %v907 = vadd.f32 %v638, %v906
        %v908 = vpop.f32.mrb[0].mxu0
        %909 = vmatprep.mubr.f32.mxu0 0.0
        %v910 = vand.u32 %v438, 4294901760
        %911 = vmatmul.mubr.f32.gmra.mrb[0].mxu0 %v910
        %v912 = vpop.f32.mrb[0].mxu0
        %v913 = vadd.f32 %v648, %v912
        %v914 = vpop.f32.mrb[0].mxu0
        %915 = vmatprep.mubr.f32.mxu0 0.0
        %v916 = vand.u32 %v439, 4294901760
        %917 = vmatmul.mubr.f32.gmra.mrb[0].mxu0 %v916
        %v918 = vpop.f32.mrb[0].mxu0
        %v919 = vadd.f32 %v658, %v918
        %v920 = vpop.f32.mrb[0].mxu0
        %921 = vmatprep.mubr.f32.mxu0 0.0
        %v922 = vand.u32 %v440, 4294901760
        %923 = vmatmul.mubr.f32.gmra.mrb[0].mxu0 %v922
        %v924 = vpop.f32.mrb[0].mxu0
        %v925 = vadd.f32 %v668, %v924
        %v926 = vpop.f32.mrb[0].mxu0
        %927 = vmatprep.mubr.f32.mxu0 0.0
        %v928 = vand.u32 %v441, 4294901760
        %929 = vmatmul.mubr.f32.gmra.mrb[0].mxu0 %v928
        %v930 = vpop.f32.mrb[0].mxu0
        %v931 = vadd.f32 %v678, %v930
        %v932 = vpop.f32.mrb[0].mxu0
        %933 = vmatprep.mubr.f32.mxu0 0.0
        %v934 = vand.u32 %v442, 4294901760
        %935 = vmatmul.mubr.f32.gmra.mrb[0].mxu0 %v934
        %v936 = vpop.f32.mrb[0].mxu0
        %v937 = vadd.f32 %v688, %v936
        %v938 = vpop.f32.mrb[0].mxu0
        %939 = vmatprep.mubr.f32.mxu0 0.0
        %v940 = vand.u32 %v443, 4294901760
        %941 = vmatmul.mubr.f32.gmra.mrb[0].mxu0 %v940
        %v942 = vpop.f32.mrb[0].mxu0
        %v943 = vadd.f32 %v698, %v942
        %v944 = vpop.f32.mrb[0].mxu0
        %945 = vmatprep.mubr.f32.mxu0 0.0
        %v946 = vand.u32 %v444, 4294901760
        %947 = vmatmul.mubr.f32.gmra.mrb[0].mxu0 %v946
        %v948 = vpop.f32.mrb[0].mxu0
        %v949 = vadd.f32 %v708, %v948
        %v950 = vpop.f32.mrb[0].mxu0
        %951 = vdwg.mxu0
        %952 = vmatprep.subr.mxu0 0.0
        %v953 = vand.u32 %v446, 4294901760
        %v954 = vsub.f32 %v446, %v953
        %955 = vmatpush1.msra.mxu0 %v954
        %956 = vmatprep.subr.mxu0 0.0
        %v957 = vand.u32 %v447, 4294901760
        %v958 = vsub.f32 %v447, %v957
        %959 = vmatpush1.msra.mxu0 %v958
        %960 = vmatprep.subr.mxu0 0.0
        %v961 = vand.u32 %v448, 4294901760
        %v962 = vsub.f32 %v448, %v961
        %963 = vmatpush1.msra.mxu0 %v962
        %964 = vmatprep.subr.mxu0 0.0
        %v965 = vand.u32 %v449, 4294901760
        %v966 = vsub.f32 %v449, %v965
        %967 = vmatpush1.msra.mxu0 %v966
        %968 = vmatprep.subr.mxu0 0.0
        %v969 = vand.u32 %v450, 4294901760
        %v970 = vsub.f32 %v450, %v969
        %971 = vmatpush1.msra.mxu0 %v970
        %972 = vmatprep.subr.mxu0 0.0
        %v973 = vand.u32 %v451, 4294901760
        %v974 = vsub.f32 %v451, %v973
        %975 = vmatpush1.msra.mxu0 %v974
        %976 = vmatprep.subr.mxu0 0.0
        %v977 = vand.u32 %v452, 4294901760
        %v978 = vsub.f32 %v452, %v977
        %979 = vmatpush1.msra.mxu0 %v978
        %980 = vmatprep.subr.mxu0 0.0
        %v981 = vand.u32 %v453, 4294901760
        %v982 = vsub.f32 %v453, %v981
        %983 = vmatpush1.msra.mxu0 %v982
        %984 = vmatprep.subr.mxu0 0.0
        %v985 = vand.u32 %v454, 4294901760
        %v986 = vsub.f32 %v454, %v985
        %987 = vmatpush1.msra.mxu0 %v986
        %988 = vmatprep.subr.mxu0 0.0
        %v989 = vand.u32 %v455, 4294901760
        %v990 = vsub.f32 %v455, %v989
        %991 = vmatpush1.msra.mxu0 %v990
        %992 = vmatprep.subr.mxu0 0.0
        %v993 = vand.u32 %v456, 4294901760
        %v994 = vsub.f32 %v456, %v993
        %995 = vmatpush1.msra.mxu0 %v994
        %996 = vmatprep.subr.mxu0 0.0
        %v997 = vand.u32 %v457, 4294901760
        %v998 = vsub.f32 %v457, %v997
        %999 = vmatpush1.msra.mxu0 %v998
        %1000 = vmatprep.subr.mxu0 0.0
        %v1001 = vand.u32 %v458, 4294901760
        %v1002 = vsub.f32 %v458, %v1001
        %1003 = vmatpush1.msra.mxu0 %v1002
        %1004 = vmatprep.subr.mxu0 0.0
        %v1005 = vand.u32 %v459, 4294901760
        %v1006 = vsub.f32 %v459, %v1005
        %1007 = vmatpush1.msra.mxu0 %v1006
        %1008 = vmatprep.subr.mxu0 0.0
        %v1009 = vand.u32 %v460, 4294901760
        %v1010 = vsub.f32 %v460, %v1009
        %1011 = vmatpush1.msra.mxu0 %v1010
        %1012 = vmatprep.subr.mxu0 0.0
        %v1013 = vand.u32 %v461, 4294901760
        %v1014 = vsub.f32 %v461, %v1013
        %1015 = vmatpush1.msra.mxu0 %v1014
        %1016 = vmatprep.subr.mxu0 0.0
        %1017 = vmatpush1.msra.mxu0 0.0
        %1018 = vmatprep.subr.mxu0 0.0
        %1019 = vmatpush1.msra.mxu0 0.0
        %1020 = vmatprep.subr.mxu0 0.0
        %1021 = vmatpush1.msra.mxu0 0.0
        %1022 = vmatprep.subr.mxu0 0.0
        %1023 = vmatpush1.msra.mxu0 0.0
        %1024 = vmatprep.subr.mxu0 0.0
        %1025 = vmatpush1.msra.mxu0 0.0
        %1026 = vmatprep.subr.mxu0 0.0
        %1027 = vmatpush1.msra.mxu0 0.0
        %1028 = vmatprep.subr.mxu0 0.0
        %1029 = vmatpush1.msra.mxu0 0.0
        %1030 = vmatprep.subr.mxu0 0.0
        %1031 = vmatpush1.msra.mxu0 0.0
        %1032 = vmatprep.subr.mxu0 0.0
        %1033 = vmatpush1.msra.mxu0 0.0
        %1034 = vmatprep.subr.mxu0 0.0
        %1035 = vmatpush1.msra.mxu0 0.0
        %1036 = vmatprep.subr.mxu0 0.0
        %1037 = vmatpush1.msra.mxu0 0.0
        %1038 = vmatprep.subr.mxu0 0.0
        %1039 = vmatpush1.msra.mxu0 0.0
        %1040 = vmatprep.subr.mxu0 0.0
        %1041 = vmatpush1.msra.mxu0 0.0
        %1042 = vmatprep.subr.mxu0 0.0
        %1043 = vmatpush1.msra.mxu0 0.0
        %1044 = vmatprep.subr.mxu0 0.0
        %1045 = vmatpush1.msra.mxu0 0.0
        %1046 = vmatprep.subr.mxu0 0.0
        %1047 = vmatpush1.msra.mxu0 0.0
        %1048 = vmatprep.mubr.f32.mxu0 0.0
        %v1049 = vand.u32 %v429, 4294901760
        %v1050 = vsub.f32 %v429, %v1049
        %1051 = vmatmul.mubr.f32.gmra.mrb[0].mxu0 %v1050
        %v1052 = vpop.f32.mrb[0].mxu0
        %v1053 = vadd.f32 %v859, %v1052
        %v1054 = vpop.f32.mrb[0].mxu0
        %1055 = vmatprep.mubr.f32.mxu0 0.0
        %v1056 = vand.u32 %v430, 4294901760
        %v1057 = vsub.f32 %v430, %v1056
        %1058 = vmatmul.mubr.f32.gmra.mrb[0].mxu0 %v1057
        %v1059 = vpop.f32.mrb[0].mxu0
        %v1060 = vadd.f32 %v865, %v1059
        %v1061 = vpop.f32.mrb[0].mxu0
        %1062 = vmatprep.mubr.f32.mxu0 0.0
        %v1063 = vand.u32 %v431, 4294901760
        %v1064 = vsub.f32 %v431, %v1063
        %1065 = vmatmul.mubr.f32.gmra.mrb[0].mxu0 %v1064
        %v1066 = vpop.f32.mrb[0].mxu0
        %v1067 = vadd.f32 %v871, %v1066
        %v1068 = vpop.f32.mrb[0].mxu0
        %1069 = vmatprep.mubr.f32.mxu0 0.0
        %v1070 = vand.u32 %v432, 4294901760
        %v1071 = vsub.f32 %v432, %v1070
        %1072 = vmatmul.mubr.f32.gmra.mrb[0].mxu0 %v1071
        %v1073 = vpop.f32.mrb[0].mxu0
        %v1074 = vadd.f32 %v877, %v1073
        %v1075 = vpop.f32.mrb[0].mxu0
        %1076 = vmatprep.mubr.f32.mxu0 0.0
        %v1077 = vand.u32 %v433, 4294901760
        %v1078 = vsub.f32 %v433, %v1077
        %1079 = vmatmul.mubr.f32.gmra.mrb[0].mxu0 %v1078
        %v1080 = vpop.f32.mrb[0].mxu0
        %v1081 = vadd.f32 %v883, %v1080
        %v1082 = vpop.f32.mrb[0].mxu0
        %1083 = vmatprep.mubr.f32.mxu0 0.0
        %v1084 = vand.u32 %v434, 4294901760
        %v1085 = vsub.f32 %v434, %v1084
        %1086 = vmatmul.mubr.f32.gmra.mrb[0].mxu0 %v1085
        %v1087 = vpop.f32.mrb[0].mxu0
        %v1088 = vadd.f32 %v889, %v1087
        %v1089 = vpop.f32.mrb[0].mxu0
        %1090 = vmatprep.mubr.f32.mxu0 0.0
        %v1091 = vand.u32 %v435, 4294901760
        %v1092 = vsub.f32 %v435, %v1091
        %1093 = vmatmul.mubr.f32.gmra.mrb[0].mxu0 %v1092
        %v1094 = vpop.f32.mrb[0].mxu0
        %v1095 = vadd.f32 %v895, %v1094
        %v1096 = vpop.f32.mrb[0].mxu0
        %1097 = vmatprep.mubr.f32.mxu0 0.0
        %v1098 = vand.u32 %v436, 4294901760
        %v1099 = vsub.f32 %v436, %v1098
        %1100 = vmatmul.mubr.f32.gmra.mrb[0].mxu0 %v1099
        %v1101 = vpop.f32.mrb[0].mxu0
        %v1102 = vadd.f32 %v901, %v1101
        %v1103 = vpop.f32.mrb[0].mxu0
        %1104 = vmatprep.mubr.f32.mxu0 0.0
        %v1105 = vand.u32 %v437, 4294901760
        %v1106 = vsub.f32 %v437, %v1105
        %1107 = vmatmul.mubr.f32.gmra.mrb[0].mxu0 %v1106
        %v1108 = vpop.f32.mrb[0].mxu0
        %v1109 = vadd.f32 %v907, %v1108
        %v1110 = vpop.f32.mrb[0].mxu0
        %1111 = vmatprep.mubr.f32.mxu0 0.0
        %v1112 = vand.u32 %v438, 4294901760
        %v1113 = vsub.f32 %v438, %v1112
        %1114 = vmatmul.mubr.f32.gmra.mrb[0].mxu0 %v1113
        %v1115 = vpop.f32.mrb[0].mxu0
        %v1116 = vadd.f32 %v913, %v1115
        %v1117 = vpop.f32.mrb[0].mxu0
        %1118 = vmatprep.mubr.f32.mxu0 0.0
        %v1119 = vand.u32 %v439, 4294901760
        %v1120 = vsub.f32 %v439, %v1119
        %1121 = vmatmul.mubr.f32.gmra.mrb[0].mxu0 %v1120
        %v1122 = vpop.f32.mrb[0].mxu0
        %v1123 = vadd.f32 %v919, %v1122
        %v1124 = vpop.f32.mrb[0].mxu0
        %1125 = vmatprep.mubr.f32.mxu0 0.0
        %v1126 = vand.u32 %v440, 4294901760
        %v1127 = vsub.f32 %v440, %v1126
        %1128 = vmatmul.mubr.f32.gmra.mrb[0].mxu0 %v1127
        %v1129 = vpop.f32.mrb[0].mxu0
        %v1130 = vadd.f32 %v925, %v1129
        %v1131 = vpop.f32.mrb[0].mxu0
        %1132 = vmatprep.mubr.f32.mxu0 0.0
        %v1133 = vand.u32 %v441, 4294901760
        %v1134 = vsub.f32 %v441, %v1133
        %1135 = vmatmul.mubr.f32.gmra.mrb[0].mxu0 %v1134
        %v1136 = vpop.f32.mrb[0].mxu0
        %v1137 = vadd.f32 %v931, %v1136
        %v1138 = vpop.f32.mrb[0].mxu0
        %1139 = vmatprep.mubr.f32.mxu0 0.0
        %v1140 = vand.u32 %v442, 4294901760
        %v1141 = vsub.f32 %v442, %v1140
        %1142 = vmatmul.mubr.f32.gmra.mrb[0].mxu0 %v1141
        %v1143 = vpop.f32.mrb[0].mxu0
        %v1144 = vadd.f32 %v937, %v1143
        %v1145 = vpop.f32.mrb[0].mxu0
        %1146 = vmatprep.mubr.f32.mxu0 0.0
        %v1147 = vand.u32 %v443, 4294901760
        %v1148 = vsub.f32 %v443, %v1147
        %1149 = vmatmul.mubr.f32.gmra.mrb[0].mxu0 %v1148
        %v1150 = vpop.f32.mrb[0].mxu0
        %v1151 = vadd.f32 %v943, %v1150
        %v1152 = vpop.f32.mrb[0].mxu0
        %1153 = vmatprep.mubr.f32.mxu0 0.0
        %v1154 = vand.u32 %v444, 4294901760
        %v1155 = vsub.f32 %v444, %v1154
        %1156 = vmatmul.mubr.f32.gmra.mrb[0].mxu0 %v1155
        %v1157 = vpop.f32.mrb[0].mxu0
        %v1158 = vadd.f32 %v949, %v1157
        %v1159 = vpop.f32.mrb[0].mxu0
        %1160 = vdwg.mxu0
        %1161 = vmatprep.subr.mxu0 0.0
        %v1162 = vand.u32 %v446, 4294901760
        %1163 = vmatpush1.msra.mxu0 %v1162
        %1164 = vmatprep.subr.mxu0 0.0
        %v1165 = vand.u32 %v447, 4294901760
        %1166 = vmatpush1.msra.mxu0 %v1165
        %1167 = vmatprep.subr.mxu0 0.0
        %v1168 = vand.u32 %v448, 4294901760
        %1169 = vmatpush1.msra.mxu0 %v1168
        %1170 = vmatprep.subr.mxu0 0.0
        %v1171 = vand.u32 %v449, 4294901760
        %1172 = vmatpush1.msra.mxu0 %v1171
        %1173 = vmatprep.subr.mxu0 0.0
        %v1174 = vand.u32 %v450, 4294901760
        %1175 = vmatpush1.msra.mxu0 %v1174
        %1176 = vmatprep.subr.mxu0 0.0
        %v1177 = vand.u32 %v451, 4294901760
        %1178 = vmatpush1.msra.mxu0 %v1177
        %1179 = vmatprep.subr.mxu0 0.0
        %v1180 = vand.u32 %v452, 4294901760
        %1181 = vmatpush1.msra.mxu0 %v1180
        %1182 = vmatprep.subr.mxu0 0.0
        %v1183 = vand.u32 %v453, 4294901760
        %1184 = vmatpush1.msra.mxu0 %v1183
        %1185 = vmatprep.subr.mxu0 0.0
        %v1186 = vand.u32 %v454, 4294901760
        %1187 = vmatpush1.msra.mxu0 %v1186
        %1188 = vmatprep.subr.mxu0 0.0
        %v1189 = vand.u32 %v455, 4294901760
        %1190 = vmatpush1.msra.mxu0 %v1189
        %1191 = vmatprep.subr.mxu0 0.0
        %v1192 = vand.u32 %v456, 4294901760
        %1193 = vmatpush1.msra.mxu0 %v1192
        %1194 = vmatprep.subr.mxu0 0.0
        %v1195 = vand.u32 %v457, 4294901760
        %1196 = vmatpush1.msra.mxu0 %v1195
        %1197 = vmatprep.subr.mxu0 0.0
        %v1198 = vand.u32 %v458, 4294901760
        %1199 = vmatpush1.msra.mxu0 %v1198
        %1200 = vmatprep.subr.mxu0 0.0
        %v1201 = vand.u32 %v459, 4294901760
        %1202 = vmatpush1.msra.mxu0 %v1201
        %1203 = vmatprep.subr.mxu0 0.0
        %v1204 = vand.u32 %v460, 4294901760
        %1205 = vmatpush1.msra.mxu0 %v1204
        %1206 = vmatprep.subr.mxu0 0.0
        %v1207 = vand.u32 %v461, 4294901760
        %1208 = vmatpush1.msra.mxu0 %v1207
        %1209 = vmatprep.subr.mxu0 0.0
        %1210 = vmatpush1.msra.mxu0 0.0
        %1211 = vmatprep.subr.mxu0 0.0
        %1212 = vmatpush1.msra.mxu0 0.0
        %1213 = vmatprep.subr.mxu0 0.0
        %1214 = vmatpush1.msra.mxu0 0.0
        %1215 = vmatprep.subr.mxu0 0.0
        %1216 = vmatpush1.msra.mxu0 0.0
        %1217 = vmatprep.subr.mxu0 0.0
        %1218 = vmatpush1.msra.mxu0 0.0
        %1219 = vmatprep.subr.mxu0 0.0
        %1220 = vmatpush1.msra.mxu0 0.0
        %1221 = vmatprep.subr.mxu0 0.0
        %1222 = vmatpush1.msra.mxu0 0.0
        %1223 = vmatprep.subr.mxu0 0.0
        %1224 = vmatpush1.msra.mxu0 0.0
        %1225 = vmatprep.subr.mxu0 0.0
        %1226 = vmatpush1.msra.mxu0 0.0
        %1227 = vmatprep.subr.mxu0 0.0
        %1228 = vmatpush1.msra.mxu0 0.0
        %1229 = vmatprep.subr.mxu0 0.0
        %1230 = vmatpush1.msra.mxu0 0.0
        %1231 = vmatprep.subr.mxu0 0.0
        %1232 = vmatpush1.msra.mxu0 0.0
        %1233 = vmatprep.subr.mxu0 0.0
        %1234 = vmatpush1.msra.mxu0 0.0
        %1235 = vmatprep.subr.mxu0 0.0
        %1236 = vmatpush1.msra.mxu0 0.0
        %1237 = vmatprep.subr.mxu0 0.0
        %1238 = vmatpush1.msra.mxu0 0.0
        %1239 = vmatprep.subr.mxu0 0.0
        %1240 = vmatpush1.msra.mxu0 0.0
        %1241 = vmatprep.mubr.f32.mxu0 0.0
        %v1242 = vand.u32 %v429, 4294901760
        %v1243 = vsub.f32 %v429, %v1242
        %v1244 = vand.u32 %v1243, 4294901760
        %1245 = vmatmul.mubr.f32.gmra.mrb[0].mxu0 %v1244
        %v1246 = vpop.f32.mrb[0].mxu0
        %v1247 = vadd.f32 %v1053, %v1246
        %v1248 = vpop.f32.mrb[0].mxu0
        %1249 = vmatprep.mubr.f32.mxu0 0.0
        %v1250 = vand.u32 %v430, 4294901760
        %v1251 = vsub.f32 %v430, %v1250
        %v1252 = vand.u32 %v1251, 4294901760
        %1253 = vmatmul.mubr.f32.gmra.mrb[0].mxu0 %v1252
        %v1254 = vpop.f32.mrb[0].mxu0
        %v1255 = vadd.f32 %v1060, %v1254
        %v1256 = vpop.f32.mrb[0].mxu0
        %1257 = vmatprep.mubr.f32.mxu0 0.0
        %v1258 = vand.u32 %v431, 4294901760
        %v1259 = vsub.f32 %v431, %v1258
        %v1260 = vand.u32 %v1259, 4294901760
        %1261 = vmatmul.mubr.f32.gmra.mrb[0].mxu0 %v1260
        %v1262 = vpop.f32.mrb[0].mxu0
        %v1263 = vadd.f32 %v1067, %v1262
        %v1264 = vpop.f32.mrb[0].mxu0
        %1265 = vmatprep.mubr.f32.mxu0 0.0
        %v1266 = vand.u32 %v432, 4294901760
        %v1267 = vsub.f32 %v432, %v1266
        %v1268 = vand.u32 %v1267, 4294901760
        %1269 = vmatmul.mubr.f32.gmra.mrb[0].mxu0 %v1268
        %v1270 = vpop.f32.mrb[0].mxu0
        %v1271 = vadd.f32 %v1074, %v1270
        %v1272 = vpop.f32.mrb[0].mxu0
        %1273 = vmatprep.mubr.f32.mxu0 0.0
        %v1274 = vand.u32 %v433, 4294901760
        %v1275 = vsub.f32 %v433, %v1274
        %v1276 = vand.u32 %v1275, 4294901760
        %1277 = vmatmul.mubr.f32.gmra.mrb[0].mxu0 %v1276
        %v1278 = vpop.f32.mrb[0].mxu0
        %v1279 = vadd.f32 %v1081, %v1278
        %v1280 = vpop.f32.mrb[0].mxu0
        %1281 = vmatprep.mubr.f32.mxu0 0.0
        %v1282 = vand.u32 %v434, 4294901760
        %v1283 = vsub.f32 %v434, %v1282
        %v1284 = vand.u32 %v1283, 4294901760
        %1285 = vmatmul.mubr.f32.gmra.mrb[0].mxu0 %v1284
        %v1286 = vpop.f32.mrb[0].mxu0
        %v1287 = vadd.f32 %v1088, %v1286
        %v1288 = vpop.f32.mrb[0].mxu0
        %1289 = vmatprep.mubr.f32.mxu0 0.0
        %v1290 = vand.u32 %v435, 4294901760
        %v1291 = vsub.f32 %v435, %v1290
        %v1292 = vand.u32 %v1291, 4294901760
        %1293 = vmatmul.mubr.f32.gmra.mrb[0].mxu0 %v1292
        %v1294 = vpop.f32.mrb[0].mxu0
        %v1295 = vadd.f32 %v1095, %v1294
        %v1296 = vpop.f32.mrb[0].mxu0
        %1297 = vmatprep.mubr.f32.mxu0 0.0
        %v1298 = vand.u32 %v436, 4294901760
        %v1299 = vsub.f32 %v436, %v1298
        %v1300 = vand.u32 %v1299, 4294901760
        %1301 = vmatmul.mubr.f32.gmra.mrb[0].mxu0 %v1300
        %v1302 = vpop.f32.mrb[0].mxu0
        %v1303 = vadd.f32 %v1102, %v1302
        %v1304 = vpop.f32.mrb[0].mxu0
        %1305 = vmatprep.mubr.f32.mxu0 0.0
        %v1306 = vand.u32 %v437, 4294901760
        %v1307 = vsub.f32 %v437, %v1306
        %v1308 = vand.u32 %v1307, 4294901760
        %1309 = vmatmul.mubr.f32.gmra.mrb[0].mxu0 %v1308
        %v1310 = vpop.f32.mrb[0].mxu0
        %v1311 = vadd.f32 %v1109, %v1310
        %v1312 = vpop.f32.mrb[0].mxu0
        %1313 = vmatprep.mubr.f32.mxu0 0.0
        %v1314 = vand.u32 %v438, 4294901760
        %v1315 = vsub.f32 %v438, %v1314
        %v1316 = vand.u32 %v1315, 4294901760
        %1317 = vmatmul.mubr.f32.gmra.mrb[0].mxu0 %v1316
        %v1318 = vpop.f32.mrb[0].mxu0
        %v1319 = vadd.f32 %v1116, %v1318
        %v1320 = vpop.f32.mrb[0].mxu0
        %1321 = vmatprep.mubr.f32.mxu0 0.0
        %v1322 = vand.u32 %v439, 4294901760
        %v1323 = vsub.f32 %v439, %v1322
        %v1324 = vand.u32 %v1323, 4294901760
        %1325 = vmatmul.mubr.f32.gmra.mrb[0].mxu0 %v1324
        %v1326 = vpop.f32.mrb[0].mxu0
        %v1327 = vadd.f32 %v1123, %v1326
        %v1328 = vpop.f32.mrb[0].mxu0
        %1329 = vmatprep.mubr.f32.mxu0 0.0
        %v1330 = vand.u32 %v440, 4294901760
        %v1331 = vsub.f32 %v440, %v1330
        %v1332 = vand.u32 %v1331, 4294901760
        %1333 = vmatmul.mubr.f32.gmra.mrb[0].mxu0 %v1332
        %v1334 = vpop.f32.mrb[0].mxu0
        %v1335 = vadd.f32 %v1130, %v1334
        %v1336 = vpop.f32.mrb[0].mxu0
        %1337 = vmatprep.mubr.f32.mxu0 0.0
        %v1338 = vand.u32 %v441, 4294901760
        %v1339 = vsub.f32 %v441, %v1338
        %v1340 = vand.u32 %v1339, 4294901760
        %1341 = vmatmul.mubr.f32.gmra.mrb[0].mxu0 %v1340
        %v1342 = vpop.f32.mrb[0].mxu0
        %v1343 = vadd.f32 %v1137, %v1342
        %v1344 = vpop.f32.mrb[0].mxu0
        %1345 = vmatprep.mubr.f32.mxu0 0.0
        %v1346 = vand.u32 %v442, 4294901760
        %v1347 = vsub.f32 %v442, %v1346
        %v1348 = vand.u32 %v1347, 4294901760
        %1349 = vmatmul.mubr.f32.gmra.mrb[0].mxu0 %v1348
        %v1350 = vpop.f32.mrb[0].mxu0
        %v1351 = vadd.f32 %v1144, %v1350
        %v1352 = vpop.f32.mrb[0].mxu0
        %1353 = vmatprep.mubr.f32.mxu0 0.0
        %v1354 = vand.u32 %v443, 4294901760
        %v1355 = vsub.f32 %v443, %v1354
        %v1356 = vand.u32 %v1355, 4294901760
        %1357 = vmatmul.mubr.f32.gmra.mrb[0].mxu0 %v1356
        %v1358 = vpop.f32.mrb[0].mxu0
        %v1359 = vadd.f32 %v1151, %v1358
        %v1360 = vpop.f32.mrb[0].mxu0
        %1361 = vmatprep.mubr.f32.mxu0 0.0
        %v1362 = vand.u32 %v444, 4294901760
        %v1363 = vsub.f32 %v444, %v1362
        %v1364 = vand.u32 %v1363, 4294901760
        %1365 = vmatmul.mubr.f32.gmra.mrb[0].mxu0 %v1364
        %v1366 = vpop.f32.mrb[0].mxu0
        %v1367 = vadd.f32 %v1158, %v1366
        %v1368 = vpop.f32.mrb[0].mxu0
        %1369 = vdwg.mxu0
        %1370 = vmatprep.subr.mxu0 0.0
        %v1371 = vand.u32 %v446, 4294901760
        %v1372 = vsub.f32 %v446, %v1371
        %v1373 = vand.u32 %v1372, 4294901760
        %1374 = vmatpush1.msra.mxu0 %v1373
        %1375 = vmatprep.subr.mxu0 0.0
        %v1376 = vand.u32 %v447, 4294901760
        %v1377 = vsub.f32 %v447, %v1376
        %v1378 = vand.u32 %v1377, 4294901760
        %1379 = vmatpush1.msra.mxu0 %v1378
        %1380 = vmatprep.subr.mxu0 0.0
        %v1381 = vand.u32 %v448, 4294901760
        %v1382 = vsub.f32 %v448, %v1381
        %v1383 = vand.u32 %v1382, 4294901760
        %1384 = vmatpush1.msra.mxu0 %v1383
        %1385 = vmatprep.subr.mxu0 0.0
        %v1386 = vand.u32 %v449, 4294901760
        %v1387 = vsub.f32 %v449, %v1386
        %v1388 = vand.u32 %v1387, 4294901760
        %1389 = vmatpush1.msra.mxu0 %v1388
        %1390 = vmatprep.subr.mxu0 0.0
        %v1391 = vand.u32 %v450, 4294901760
        %v1392 = vsub.f32 %v450, %v1391
        %v1393 = vand.u32 %v1392, 4294901760
        %1394 = vmatpush1.msra.mxu0 %v1393
        %1395 = vmatprep.subr.mxu0 0.0
        %v1396 = vand.u32 %v451, 4294901760
        %v1397 = vsub.f32 %v451, %v1396
        %v1398 = vand.u32 %v1397, 4294901760
        %1399 = vmatpush1.msra.mxu0 %v1398
        %1400 = vmatprep.subr.mxu0 0.0
        %v1401 = vand.u32 %v452, 4294901760
        %v1402 = vsub.f32 %v452, %v1401
        %v1403 = vand.u32 %v1402, 4294901760
        %1404 = vmatpush1.msra.mxu0 %v1403
        %1405 = vmatprep.subr.mxu0 0.0
        %v1406 = vand.u32 %v453, 4294901760
        %v1407 = vsub.f32 %v453, %v1406
        %v1408 = vand.u32 %v1407, 4294901760
        %1409 = vmatpush1.msra.mxu0 %v1408
        %1410 = vmatprep.subr.mxu0 0.0
        %v1411 = vand.u32 %v454, 4294901760
        %v1412 = vsub.f32 %v454, %v1411
        %v1413 = vand.u32 %v1412, 4294901760
        %1414 = vmatpush1.msra.mxu0 %v1413
        %1415 = vmatprep.subr.mxu0 0.0
        %v1416 = vand.u32 %v455, 4294901760
        %v1417 = vsub.f32 %v455, %v1416
        %v1418 = vand.u32 %v1417, 4294901760
        %1419 = vmatpush1.msra.mxu0 %v1418
        %1420 = vmatprep.subr.mxu0 0.0
        %v1421 = vand.u32 %v456, 4294901760
        %v1422 = vsub.f32 %v456, %v1421
        %v1423 = vand.u32 %v1422, 4294901760
        %1424 = vmatpush1.msra.mxu0 %v1423
        %1425 = vmatprep.subr.mxu0 0.0
        %v1426 = vand.u32 %v457, 4294901760
        %v1427 = vsub.f32 %v457, %v1426
        %v1428 = vand.u32 %v1427, 4294901760
        %1429 = vmatpush1.msra.mxu0 %v1428
        %1430 = vmatprep.subr.mxu0 0.0
        %v1431 = vand.u32 %v458, 4294901760
        %v1432 = vsub.f32 %v458, %v1431
        %v1433 = vand.u32 %v1432, 4294901760
        %1434 = vmatpush1.msra.mxu0 %v1433
        %1435 = vmatprep.subr.mxu0 0.0
        %v1436 = vand.u32 %v459, 4294901760
        %v1437 = vsub.f32 %v459, %v1436
        %v1438 = vand.u32 %v1437, 4294901760
        %1439 = vmatpush1.msra.mxu0 %v1438
        %1440 = vmatprep.subr.mxu0 0.0
        %v1441 = vand.u32 %v460, 4294901760
        %v1442 = vsub.f32 %v460, %v1441
        %v1443 = vand.u32 %v1442, 4294901760
        %1444 = vmatpush1.msra.mxu0 %v1443
        %1445 = vmatprep.subr.mxu0 0.0
        %v1446 = vand.u32 %v461, 4294901760
        %v1447 = vsub.f32 %v461, %v1446
        %v1448 = vand.u32 %v1447, 4294901760
        %1449 = vmatpush1.msra.mxu0 %v1448
        %1450 = vmatprep.subr.mxu0 0.0
        %1451 = vmatpush1.msra.mxu0 0.0
        %1452 = vmatprep.subr.mxu0 0.0
        %1453 = vmatpush1.msra.mxu0 0.0
        %1454 = vmatprep.subr.mxu0 0.0
        %1455 = vmatpush1.msra.mxu0 0.0
        %1456 = vmatprep.subr.mxu0 0.0
        %1457 = vmatpush1.msra.mxu0 0.0
        %1458 = vmatprep.subr.mxu0 0.0
        %1459 = vmatpush1.msra.mxu0 0.0
        %1460 = vmatprep.subr.mxu0 0.0
        %1461 = vmatpush1.msra.mxu0 0.0
        %1462 = vmatprep.subr.mxu0 0.0
        %1463 = vmatpush1.msra.mxu0 0.0
        %1464 = vmatprep.subr.mxu0 0.0
        %1465 = vmatpush1.msra.mxu0 0.0
        %1466 = vmatprep.subr.mxu0 0.0
        %1467 = vmatpush1.msra.mxu0 0.0
        %1468 = vmatprep.subr.mxu0 0.0
        %1469 = vmatpush1.msra.mxu0 0.0
        %1470 = vmatprep.subr.mxu0 0.0
        %1471 = vmatpush1.msra.mxu0 0.0
        %1472 = vmatprep.subr.mxu0 0.0
        %1473 = vmatpush1.msra.mxu0 0.0
        %1474 = vmatprep.subr.mxu0 0.0
        %1475 = vmatpush1.msra.mxu0 0.0
        %1476 = vmatprep.subr.mxu0 0.0
        %1477 = vmatpush1.msra.mxu0 0.0
        %1478 = vmatprep.subr.mxu0 0.0
        %1479 = vmatpush1.msra.mxu0 0.0
        %1480 = vmatprep.subr.mxu0 0.0
        %1481 = vmatpush1.msra.mxu0 0.0
        %1482 = vmatprep.mubr.f32.mxu0 0.0
        %v1483 = vand.u32 %v429, 4294901760
        %1484 = vmatmul.mubr.f32.gmra.mrb[0].mxu0 %v1483
        %v1485 = vpop.f32.mrb[0].mxu0
        %v1486 = vadd.f32 %v1247, %v1485
        %v1487 = vpop.f32.mrb[0].mxu0
        %1488 = vmatprep.mubr.f32.mxu0 0.0
        %v1489 = vand.u32 %v430, 4294901760
        %1490 = vmatmul.mubr.f32.gmra.mrb[0].mxu0 %v1489
        %v1491 = vpop.f32.mrb[0].mxu0
        %v1492 = vadd.f32 %v1255, %v1491
        %v1493 = vpop.f32.mrb[0].mxu0
        %1494 = vmatprep.mubr.f32.mxu0 0.0
        %v1495 = vand.u32 %v431, 4294901760
        %1496 = vmatmul.mubr.f32.gmra.mrb[0].mxu0 %v1495
        %v1497 = vpop.f32.mrb[0].mxu0
        %v1498 = vadd.f32 %v1263, %v1497
        %v1499 = vpop.f32.mrb[0].mxu0
        %1500 = vmatprep.mubr.f32.mxu0 0.0
        %v1501 = vand.u32 %v432, 4294901760
        %1502 = vmatmul.mubr.f32.gmra.mrb[0].mxu0 %v1501
        %v1503 = vpop.f32.mrb[0].mxu0
        %v1504 = vadd.f32 %v1271, %v1503
        %v1505 = vpop.f32.mrb[0].mxu0
        %1506 = vmatprep.mubr.f32.mxu0 0.0
        %v1507 = vand.u32 %v433, 4294901760
        %1508 = vmatmul.mubr.f32.gmra.mrb[0].mxu0 %v1507
        %v1509 = vpop.f32.mrb[0].mxu0
        %v1510 = vadd.f32 %v1279, %v1509
        %v1511 = vpop.f32.mrb[0].mxu0
        %1512 = vmatprep.mubr.f32.mxu0 0.0
        %v1513 = vand.u32 %v434, 4294901760
        %1514 = vmatmul.mubr.f32.gmra.mrb[0].mxu0 %v1513
        %v1515 = vpop.f32.mrb[0].mxu0
        %v1516 = vadd.f32 %v1287, %v1515
        %v1517 = vpop.f32.mrb[0].mxu0
        %1518 = vmatprep.mubr.f32.mxu0 0.0
        %v1519 = vand.u32 %v435, 4294901760
        %1520 = vmatmul.mubr.f32.gmra.mrb[0].mxu0 %v1519
        %v1521 = vpop.f32.mrb[0].mxu0
        %v1522 = vadd.f32 %v1295, %v1521
        %v1523 = vpop.f32.mrb[0].mxu0
        %1524 = vmatprep.mubr.f32.mxu0 0.0
        %v1525 = vand.u32 %v436, 4294901760
        %1526 = vmatmul.mubr.f32.gmra.mrb[0].mxu0 %v1525
        %v1527 = vpop.f32.mrb[0].mxu0
        %v1528 = vadd.f32 %v1303, %v1527
        %v1529 = vpop.f32.mrb[0].mxu0
        %1530 = vmatprep.mubr.f32.mxu0 0.0
        %v1531 = vand.u32 %v437, 4294901760
        %1532 = vmatmul.mubr.f32.gmra.mrb[0].mxu0 %v1531
        %v1533 = vpop.f32.mrb[0].mxu0
        %v1534 = vadd.f32 %v1311, %v1533
        %v1535 = vpop.f32.mrb[0].mxu0
        %1536 = vmatprep.mubr.f32.mxu0 0.0
        %v1537 = vand.u32 %v438, 4294901760
        %1538 = vmatmul.mubr.f32.gmra.mrb[0].mxu0 %v1537
        %v1539 = vpop.f32.mrb[0].mxu0
        %v1540 = vadd.f32 %v1319, %v1539
        %v1541 = vpop.f32.mrb[0].mxu0
        %1542 = vmatprep.mubr.f32.mxu0 0.0
        %v1543 = vand.u32 %v439, 4294901760
        %1544 = vmatmul.mubr.f32.gmra.mrb[0].mxu0 %v1543
        %v1545 = vpop.f32.mrb[0].mxu0
        %v1546 = vadd.f32 %v1327, %v1545
        %v1547 = vpop.f32.mrb[0].mxu0
        %1548 = vmatprep.mubr.f32.mxu0 0.0
        %v1549 = vand.u32 %v440, 4294901760
        %1550 = vmatmul.mubr.f32.gmra.mrb[0].mxu0 %v1549
        %v1551 = vpop.f32.mrb[0].mxu0
        %v1552 = vadd.f32 %v1335, %v1551
        %v1553 = vpop.f32.mrb[0].mxu0
        %1554 = vmatprep.mubr.f32.mxu0 0.0
        %v1555 = vand.u32 %v441, 4294901760
        %1556 = vmatmul.mubr.f32.gmra.mrb[0].mxu0 %v1555
        %v1557 = vpop.f32.mrb[0].mxu0
        %v1558 = vadd.f32 %v1343, %v1557
        %v1559 = vpop.f32.mrb[0].mxu0
        %1560 = vmatprep.mubr.f32.mxu0 0.0
        %v1561 = vand.u32 %v442, 4294901760
        %1562 = vmatmul.mubr.f32.gmra.mrb[0].mxu0 %v1561
        %v1563 = vpop.f32.mrb[0].mxu0
        %v1564 = vadd.f32 %v1351, %v1563
        %v1565 = vpop.f32.mrb[0].mxu0
        %1566 = vmatprep.mubr.f32.mxu0 0.0
        %v1567 = vand.u32 %v443, 4294901760
        %1568 = vmatmul.mubr.f32.gmra.mrb[0].mxu0 %v1567
        %v1569 = vpop.f32.mrb[0].mxu0
        %v1570 = vadd.f32 %v1359, %v1569
        %v1571 = vpop.f32.mrb[0].mxu0
        %1572 = vmatprep.mubr.f32.mxu0 0.0
        %v1573 = vand.u32 %v444, 4294901760
        %1574 = vmatmul.mubr.f32.gmra.mrb[0].mxu0 %v1573
        %v1575 = vpop.f32.mrb[0].mxu0
        %v1576 = vadd.f32 %v1367, %v1575
        %v1577 = vpop.f32.mrb[0].mxu0
        %1578 = vdwg.mxu0
        %1579 = vmatprep.subr.mxu0 0.0
        %v1580 = vand.u32 %v446, 4294901760
        %1581 = vmatpush1.msra.mxu0 %v1580
        %1582 = vmatprep.subr.mxu0 0.0
        %v1583 = vand.u32 %v447, 4294901760
        %1584 = vmatpush1.msra.mxu0 %v1583
        %1585 = vmatprep.subr.mxu0 0.0
        %v1586 = vand.u32 %v448, 4294901760
        %1587 = vmatpush1.msra.mxu0 %v1586
        %1588 = vmatprep.subr.mxu0 0.0
        %v1589 = vand.u32 %v449, 4294901760
        %1590 = vmatpush1.msra.mxu0 %v1589
        %1591 = vmatprep.subr.mxu0 0.0
        %v1592 = vand.u32 %v450, 4294901760
        %1593 = vmatpush1.msra.mxu0 %v1592
        %1594 = vmatprep.subr.mxu0 0.0
        %v1595 = vand.u32 %v451, 4294901760
        %1596 = vmatpush1.msra.mxu0 %v1595
        %1597 = vmatprep.subr.mxu0 0.0
        %v1598 = vand.u32 %v452, 4294901760
        %1599 = vmatpush1.msra.mxu0 %v1598
        %1600 = vmatprep.subr.mxu0 0.0
        %v1601 = vand.u32 %v453, 4294901760
        %1602 = vmatpush1.msra.mxu0 %v1601
        %1603 = vmatprep.subr.mxu0 0.0
        %v1604 = vand.u32 %v454, 4294901760
        %1605 = vmatpush1.msra.mxu0 %v1604
        %1606 = vmatprep.subr.mxu0 0.0
        %v1607 = vand.u32 %v455, 4294901760
        %1608 = vmatpush1.msra.mxu0 %v1607
        %1609 = vmatprep.subr.mxu0 0.0
        %v1610 = vand.u32 %v456, 4294901760
        %1611 = vmatpush1.msra.mxu0 %v1610
        %1612 = vmatprep.subr.mxu0 0.0
        %v1613 = vand.u32 %v457, 4294901760
        %1614 = vmatpush1.msra.mxu0 %v1613
        %1615 = vmatprep.subr.mxu0 0.0
        %v1616 = vand.u32 %v458, 4294901760
        %1617 = vmatpush1.msra.mxu0 %v1616
        %1618 = vmatprep.subr.mxu0 0.0
        %v1619 = vand.u32 %v459, 4294901760
        %1620 = vmatpush1.msra.mxu0 %v1619
        %1621 = vmatprep.subr.mxu0 0.0
        %v1622 = vand.u32 %v460, 4294901760
        %1623 = vmatpush1.msra.mxu0 %v1622
        %1624 = vmatprep.subr.mxu0 0.0
        %v1625 = vand.u32 %v461, 4294901760
        %1626 = vmatpush1.msra.mxu0 %v1625
        %1627 = vmatprep.subr.mxu0 0.0
        %1628 = vmatpush1.msra.mxu0 0.0
        %1629 = vmatprep.subr.mxu0 0.0
        %1630 = vmatpush1.msra.mxu0 0.0
        %1631 = vmatprep.subr.mxu0 0.0
        %1632 = vmatpush1.msra.mxu0 0.0
        %1633 = vmatprep.subr.mxu0 0.0
        %1634 = vmatpush1.msra.mxu0 0.0
        %1635 = vmatprep.subr.mxu0 0.0
        %1636 = vmatpush1.msra.mxu0 0.0
        %1637 = vmatprep.subr.mxu0 0.0
        %1638 = vmatpush1.msra.mxu0 0.0
        %1639 = vmatprep.subr.mxu0 0.0
        %1640 = vmatpush1.msra.mxu0 0.0
        %1641 = vmatprep.subr.mxu0 0.0
        %1642 = vmatpush1.msra.mxu0 0.0
        %1643 = vmatprep.subr.mxu0 0.0
        %1644 = vmatpush1.msra.mxu0 0.0
        %1645 = vmatprep.subr.mxu0 0.0
        %1646 = vmatpush1.msra.mxu0 0.0
        %1647 = vmatprep.subr.mxu0 0.0
        %1648 = vmatpush1.msra.mxu0 0.0
        %1649 = vmatprep.subr.mxu0 0.0
        %1650 = vmatpush1.msra.mxu0 0.0
        %1651 = vmatprep.subr.mxu0 0.0
        %1652 = vmatpush1.msra.mxu0 0.0
        %1653 = vmatprep.subr.mxu0 0.0
        %1654 = vmatpush1.msra.mxu0 0.0
        %1655 = vmatprep.subr.mxu0 0.0
        %1656 = vmatpush1.msra.mxu0 0.0
        %1657 = vmatprep.subr.mxu0 0.0
        %1658 = vmatpush1.msra.mxu0 0.0
        %1659 = vmatprep.mubr.f32.mxu0 0.0
        %v1660 = vand.u32 %v429, 4294901760
        %1661 = vmatmul.mubr.f32.gmra.mrb[0].mxu0 %v1660
        %v1662 = vpop.f32.mrb[0].mxu0
        %v1663 = vadd.f32 %v1486, %v1662
        %v1664 = vpop.f32.mrb[0].mxu0
        %1665 = vmatprep.mubr.f32.mxu0 0.0
        %v1666 = vand.u32 %v430, 4294901760
        %1667 = vmatmul.mubr.f32.gmra.mrb[0].mxu0 %v1666
        %v1668 = vpop.f32.mrb[0].mxu0
        %v1669 = vadd.f32 %v1492, %v1668
        %v1670 = vpop.f32.mrb[0].mxu0
        %1671 = vmatprep.mubr.f32.mxu0 0.0
        %v1672 = vand.u32 %v431, 4294901760
        %1673 = vmatmul.mubr.f32.gmra.mrb[0].mxu0 %v1672
        %v1674 = vpop.f32.mrb[0].mxu0
        %v1675 = vadd.f32 %v1498, %v1674
        %v1676 = vpop.f32.mrb[0].mxu0
        %1677 = vmatprep.mubr.f32.mxu0 0.0
        %v1678 = vand.u32 %v432, 4294901760
        %1679 = vmatmul.mubr.f32.gmra.mrb[0].mxu0 %v1678
        %v1680 = vpop.f32.mrb[0].mxu0
        %v1681 = vadd.f32 %v1504, %v1680
        %v1682 = vpop.f32.mrb[0].mxu0
        %1683 = vmatprep.mubr.f32.mxu0 0.0
        %v1684 = vand.u32 %v433, 4294901760
        %1685 = vmatmul.mubr.f32.gmra.mrb[0].mxu0 %v1684
        %v1686 = vpop.f32.mrb[0].mxu0
        %v1687 = vadd.f32 %v1510, %v1686
        %v1688 = vpop.f32.mrb[0].mxu0
        %1689 = vmatprep.mubr.f32.mxu0 0.0
        %v1690 = vand.u32 %v434, 4294901760
        %1691 = vmatmul.mubr.f32.gmra.mrb[0].mxu0 %v1690
        %v1692 = vpop.f32.mrb[0].mxu0
        %v1693 = vadd.f32 %v1516, %v1692
        %v1694 = vpop.f32.mrb[0].mxu0
        %1695 = vmatprep.mubr.f32.mxu0 0.0
        %v1696 = vand.u32 %v435, 4294901760
        %1697 = vmatmul.mubr.f32.gmra.mrb[0].mxu0 %v1696
        %v1698 = vpop.f32.mrb[0].mxu0
        %v1699 = vadd.f32 %v1522, %v1698
        %v1700 = vpop.f32.mrb[0].mxu0
        %1701 = vmatprep.mubr.f32.mxu0 0.0
        %v1702 = vand.u32 %v436, 4294901760
        %1703 = vmatmul.mubr.f32.gmra.mrb[0].mxu0 %v1702
        %v1704 = vpop.f32.mrb[0].mxu0
        %v1705 = vadd.f32 %v1528, %v1704
        %v1706 = vpop.f32.mrb[0].mxu0
        %1707 = vmatprep.mubr.f32.mxu0 0.0
        %v1708 = vand.u32 %v437, 4294901760
        %1709 = vmatmul.mubr.f32.gmra.mrb[0].mxu0 %v1708
        %v1710 = vpop.f32.mrb[0].mxu0
        %v1711 = vadd.f32 %v1534, %v1710
        %v1712 = vpop.f32.mrb[0].mxu0
        %1713 = vmatprep.mubr.f32.mxu0 0.0
        %v1714 = vand.u32 %v438, 4294901760
        %1715 = vmatmul.mubr.f32.gmra.mrb[0].mxu0 %v1714
        %v1716 = vpop.f32.mrb[0].mxu0
        %v1717 = vadd.f32 %v1540, %v1716
        %v1718 = vpop.f32.mrb[0].mxu0
        %1719 = vmatprep.mubr.f32.mxu0 0.0
        %v1720 = vand.u32 %v439, 4294901760
        %1721 = vmatmul.mubr.f32.gmra.mrb[0].mxu0 %v1720
        %v1722 = vpop.f32.mrb[0].mxu0
        %v1723 = vadd.f32 %v1546, %v1722
        %v1724 = vpop.f32.mrb[0].mxu0
        %1725 = vmatprep.mubr.f32.mxu0 0.0
        %v1726 = vand.u32 %v440, 4294901760
        %1727 = vmatmul.mubr.f32.gmra.mrb[0].mxu0 %v1726
        %v1728 = vpop.f32.mrb[0].mxu0
        %v1729 = vadd.f32 %v1552, %v1728
        %v1730 = vpop.f32.mrb[0].mxu0
        %1731 = vmatprep.mubr.f32.mxu0 0.0
        %v1732 = vand.u32 %v441, 4294901760
        %1733 = vmatmul.mubr.f32.gmra.mrb[0].mxu0 %v1732
        %v1734 = vpop.f32.mrb[0].mxu0
        %v1735 = vadd.f32 %v1558, %v1734
        %v1736 = vpop.f32.mrb[0].mxu0
        %1737 = vmatprep.mubr.f32.mxu0 0.0
        %v1738 = vand.u32 %v442, 4294901760
        %1739 = vmatmul.mubr.f32.gmra.mrb[0].mxu0 %v1738
        %v1740 = vpop.f32.mrb[0].mxu0
        %v1741 = vadd.f32 %v1564, %v1740
        %v1742 = vpop.f32.mrb[0].mxu0
        %1743 = vmatprep.mubr.f32.mxu0 0.0
        %v1744 = vand.u32 %v443, 4294901760
        %1745 = vmatmul.mubr.f32.gmra.mrb[0].mxu0 %v1744
        %v1746 = vpop.f32.mrb[0].mxu0
        %v1747 = vadd.f32 %v1570, %v1746
        %v1748 = vpop.f32.mrb[0].mxu0
        %1749 = vmatprep.mubr.f32.mxu0 0.0
        %v1750 = vand.u32 %v444, 4294901760
        %1751 = vmatmul.mubr.f32.gmra.mrb[0].mxu0 %v1750
        %v1752 = vpop.f32.mrb[0].mxu0
        %v1753 = vadd.f32 %v1576, %v1752
        %v1754 = vpop.f32.mrb[0].mxu0
        %1755 = vdwg.mxu0
        %v1756 = vtanh.pop %v1663
        %v1757 = vtanh.pop %v1669
        %v1758 = vtanh.pop %v1675
        %v1759 = vtanh.pop %v1681
        %v1760 = vtanh.pop %v1687
        %v1761 = vtanh.pop %v1693
        %v1762 = vtanh.pop %v1699
        %v1763 = vtanh.pop %v1705
        %v1764 = vtanh.pop %v1711
        %v1765 = vtanh.pop %v1717
        %v1766 = vtanh.pop %v1723
        %v1767 = vtanh.pop %v1729
        %v1768 = vtanh.pop %v1735
        %v1769 = vtanh.pop %v1741
        %v1770 = vtanh.pop %v1747
        %v1771 = vtanh.pop %v1753
        %s1772 = scalar_lea.vmem [#allocation2], 256
        %v1773 = vld [vmem:[%s1772] sm:$0xff]
        %v1774 = vld [vmem:[%s1772 + $0x8] sm:$0xff]
        %v1775 = vld [vmem:[%s1772 + $0x10] sm:$0xff]
        %v1776 = vld [vmem:[%s1772 + $0x18] sm:$0xff]
        %v1777 = vld [vmem:[%s1772 + $0x20] sm:$0xff]
        %v1778 = vld [vmem:[%s1772 + $0x28] sm:$0xff]
        %v1779 = vld [vmem:[%s1772 + $0x30] sm:$0xff]
        %v1780 = vld [vmem:[%s1772 + $0x38] sm:$0xff]
        %v1781 = vld [vmem:[%s1772 + $0x40] sm:$0xff]
        %v1782 = vld [vmem:[%s1772 + $0x48] sm:$0xff]
        %v1783 = vld [vmem:[%s1772 + $0x50] sm:$0xff]
        %v1784 = vld [vmem:[%s1772 + $0x58] sm:$0xff]
        %v1785 = vld [vmem:[%s1772 + $0x60] sm:$0xff]
        %v1786 = vld [vmem:[%s1772 + $0x68] sm:$0xff]
        %v1787 = vld [vmem:[%s1772 + $0x70] sm:$0xff]
        %v1788 = vld [vmem:[%s1772 + $0x78] sm:$0xff]
        %s1789 = scalar_lea.vmem %s2, 2
        %v1790 = vld [vmem:[%s1789] sm:$0x1]
        %v1792 = vlaneseq
        %v1793 = vshrl.u32 %v1792, 7
        %v1794 = vsub.s32 0, %v1793
        %v1795 = vrot.slane %v1790, %v1794
        %1797 = vmatprep.subr.mxu0 0.0
        %v1798 = vand.u32 %v1773, 4294901760
        %1799 = vmatpush1.msra.mxu0 %v1798
        %1800 = vmatprep.subr.mxu0 0.0
        %v1801 = vand.u32 %v1774, 4294901760
        %1802 = vmatpush1.msra.mxu0 %v1801
        %1803 = vmatprep.subr.mxu0 0.0
        %v1804 = vand.u32 %v1775, 4294901760
        %1805 = vmatpush1.msra.mxu0 %v1804
        %1806 = vmatprep.subr.mxu0 0.0
        %v1807 = vand.u32 %v1776, 4294901760
        %1808 = vmatpush1.msra.mxu0 %v1807
        %1809 = vmatprep.subr.mxu0 0.0
        %v1810 = vand.u32 %v1777, 4294901760
        %1811 = vmatpush1.msra.mxu0 %v1810
        %1812 = vmatprep.subr.mxu0 0.0
        %v1813 = vand.u32 %v1778, 4294901760
        %1814 = vmatpush1.msra.mxu0 %v1813
        %1815 = vmatprep.subr.mxu0 0.0
        %v1816 = vand.u32 %v1779, 4294901760
        %1817 = vmatpush1.msra.mxu0 %v1816
        %1818 = vmatprep.subr.mxu0 0.0
        %v1819 = vand.u32 %v1780, 4294901760
        %1820 = vmatpush1.msra.mxu0 %v1819
        %1821 = vmatprep.subr.mxu0 0.0
        %v1822 = vand.u32 %v1781, 4294901760
        %1823 = vmatpush1.msra.mxu0 %v1822
        %1824 = vmatprep.subr.mxu0 0.0
        %v1825 = vand.u32 %v1782, 4294901760
        %1826 = vmatpush1.msra.mxu0 %v1825
        %1827 = vmatprep.subr.mxu0 0.0
        %v1828 = vand.u32 %v1783, 4294901760
        %1829 = vmatpush1.msra.mxu0 %v1828
        %1830 = vmatprep.subr.mxu0 0.0
        %v1831 = vand.u32 %v1784, 4294901760
        %1832 = vmatpush1.msra.mxu0 %v1831
        %1833 = vmatprep.subr.mxu0 0.0
        %v1834 = vand.u32 %v1785, 4294901760
        %1835 = vmatpush1.msra.mxu0 %v1834
        %1836 = vmatprep.subr.mxu0 0.0
        %v1837 = vand.u32 %v1786, 4294901760
        %1838 = vmatpush1.msra.mxu0 %v1837
        %1839 = vmatprep.subr.mxu0 0.0
        %v1840 = vand.u32 %v1787, 4294901760
        %1841 = vmatpush1.msra.mxu0 %v1840
        %1842 = vmatprep.subr.mxu0 0.0
        %v1843 = vand.u32 %v1788, 4294901760
        %1844 = vmatpush1.msra.mxu0 %v1843
        %1845 = vmatprep.subr.mxu0 0.0
        %1846 = vmatpush1.msra.mxu0 0.0
        %1847 = vmatprep.subr.mxu0 0.0
        %1848 = vmatpush1.msra.mxu0 0.0
        %1849 = vmatprep.subr.mxu0 0.0
        %1850 = vmatpush1.msra.mxu0 0.0
        %1851 = vmatprep.subr.mxu0 0.0
        %1852 = vmatpush1.msra.mxu0 0.0
        %1853 = vmatprep.subr.mxu0 0.0
        %1854 = vmatpush1.msra.mxu0 0.0
        %1855 = vmatprep.subr.mxu0 0.0
        %1856 = vmatpush1.msra.mxu0 0.0
        %1857 = vmatprep.subr.mxu0 0.0
        %1858 = vmatpush1.msra.mxu0 0.0
        %1859 = vmatprep.subr.mxu0 0.0
        %1860 = vmatpush1.msra.mxu0 0.0
        %1861 = vmatprep.subr.mxu0 0.0
        %1862 = vmatpush1.msra.mxu0 0.0
        %1863 = vmatprep.subr.mxu0 0.0
        %1864 = vmatpush1.msra.mxu0 0.0
        %1865 = vmatprep.subr.mxu0 0.0
        %1866 = vmatpush1.msra.mxu0 0.0
        %1867 = vmatprep.subr.mxu0 0.0
        %1868 = vmatpush1.msra.mxu0 0.0
        %1869 = vmatprep.subr.mxu0 0.0
        %1870 = vmatpush1.msra.mxu0 0.0
        %1871 = vmatprep.subr.mxu0 0.0
        %1872 = vmatpush1.msra.mxu0 0.0
        %1873 = vmatprep.subr.mxu0 0.0
        %1874 = vmatpush1.msra.mxu0 0.0
        %1875 = vmatprep.subr.mxu0 0.0
        %1876 = vmatpush1.msra.mxu0 0.0
        %1877 = vmatprep.mubr.f32.mxu0 0.0
        %v1878 = vand.u32 %v1756, 4294901760
        %v1879 = vsub.f32 %v1756, %v1878
        %v1880 = vand.u32 %v1879, 4294901760
        %v1881 = vsub.f32 %v1879, %v1880
        %v1882 = vand.u32 %v1881, 4294901760
        %1883 = vmatmul.mubr.f32.gmra.mrb[0].mxu0 %v1882
        %v1884 = vpop.f32.mrb[0].mxu0
        %v1885 = vadd.f32 %v1795, %v1884
        %v1886 = vpop.f32.mrb[0].mxu0
        %1887 = vmatprep.mubr.f32.mxu0 0.0
        %v1888 = vand.u32 %v1757, 4294901760
        %v1889 = vsub.f32 %v1757, %v1888
        %v1890 = vand.u32 %v1889, 4294901760
        %v1891 = vsub.f32 %v1889, %v1890
        %v1892 = vand.u32 %v1891, 4294901760
        %1893 = vmatmul.mubr.f32.gmra.mrb[0].mxu0 %v1892
        %v1894 = vpop.f32.mrb[0].mxu0
        %v1895 = vadd.f32 %v1795, %v1894
        %v1896 = vpop.f32.mrb[0].mxu0
        %1897 = vmatprep.mubr.f32.mxu0 0.0
        %v1898 = vand.u32 %v1758, 4294901760
        %v1899 = vsub.f32 %v1758, %v1898
        %v1900 = vand.u32 %v1899, 4294901760
        %v1901 = vsub.f32 %v1899, %v1900
        %v1902 = vand.u32 %v1901, 4294901760
        %1903 = vmatmul.mubr.f32.gmra.mrb[0].mxu0 %v1902
        %v1904 = vpop.f32.mrb[0].mxu0
        %v1905 = vadd.f32 %v1795, %v1904
        %v1906 = vpop.f32.mrb[0].mxu0
        %1907 = vmatprep.mubr.f32.mxu0 0.0
        %v1908 = vand.u32 %v1759, 4294901760
        %v1909 = vsub.f32 %v1759, %v1908
        %v1910 = vand.u32 %v1909, 4294901760
        %v1911 = vsub.f32 %v1909, %v1910
        %v1912 = vand.u32 %v1911, 4294901760
        %1913 = vmatmul.mubr.f32.gmra.mrb[0].mxu0 %v1912
        %v1914 = vpop.f32.mrb[0].mxu0
        %v1915 = vadd.f32 %v1795, %v1914
        %v1916 = vpop.f32.mrb[0].mxu0
        %1917 = vmatprep.mubr.f32.mxu0 0.0
        %v1918 = vand.u32 %v1760, 4294901760
        %v1919 = vsub.f32 %v1760, %v1918
        %v1920 = vand.u32 %v1919, 4294901760
        %v1921 = vsub.f32 %v1919, %v1920
        %v1922 = vand.u32 %v1921, 4294901760
        %1923 = vmatmul.mubr.f32.gmra.mrb[0].mxu0 %v1922
        %v1924 = vpop.f32.mrb[0].mxu0
        %v1925 = vadd.f32 %v1795, %v1924
        %v1926 = vpop.f32.mrb[0].mxu0
        %1927 = vmatprep.mubr.f32.mxu0 0.0
        %v1928 = vand.u32 %v1761, 4294901760
        %v1929 = vsub.f32 %v1761, %v1928
        %v1930 = vand.u32 %v1929, 4294901760
        %v1931 = vsub.f32 %v1929, %v1930
        %v1932 = vand.u32 %v1931, 4294901760
        %1933 = vmatmul.mubr.f32.gmra.mrb[0].mxu0 %v1932
        %v1934 = vpop.f32.mrb[0].mxu0
        %v1935 = vadd.f32 %v1795, %v1934
        %v1936 = vpop.f32.mrb[0].mxu0
        %1937 = vmatprep.mubr.f32.mxu0 0.0
        %v1938 = vand.u32 %v1762, 4294901760
        %v1939 = vsub.f32 %v1762, %v1938
        %v1940 = vand.u32 %v1939, 4294901760
        %v1941 = vsub.f32 %v1939, %v1940
        %v1942 = vand.u32 %v1941, 4294901760
        %1943 = vmatmul.mubr.f32.gmra.mrb[0].mxu0 %v1942
        %v1944 = vpop.f32.mrb[0].mxu0
        %v1945 = vadd.f32 %v1795, %v1944
        %v1946 = vpop.f32.mrb[0].mxu0
        %1947 = vmatprep.mubr.f32.mxu0 0.0
        %v1948 = vand.u32 %v1763, 4294901760
        %v1949 = vsub.f32 %v1763, %v1948
        %v1950 = vand.u32 %v1949, 4294901760
        %v1951 = vsub.f32 %v1949, %v1950
        %v1952 = vand.u32 %v1951, 4294901760
        %1953 = vmatmul.mubr.f32.gmra.mrb[0].mxu0 %v1952
        %v1954 = vpop.f32.mrb[0].mxu0
        %v1955 = vadd.f32 %v1795, %v1954
        %v1956 = vpop.f32.mrb[0].mxu0
        %1957 = vmatprep.mubr.f32.mxu0 0.0
        %v1958 = vand.u32 %v1764, 4294901760
        %v1959 = vsub.f32 %v1764, %v1958
        %v1960 = vand.u32 %v1959, 4294901760
        %v1961 = vsub.f32 %v1959, %v1960
        %v1962 = vand.u32 %v1961, 4294901760
        %1963 = vmatmul.mubr.f32.gmra.mrb[0].mxu0 %v1962
        %v1964 = vpop.f32.mrb[0].mxu0
        %v1965 = vadd.f32 %v1795, %v1964
        %v1966 = vpop.f32.mrb[0].mxu0
        %1967 = vmatprep.mubr.f32.mxu0 0.0
        %v1968 = vand.u32 %v1765, 4294901760
        %v1969 = vsub.f32 %v1765, %v1968
        %v1970 = vand.u32 %v1969, 4294901760
        %v1971 = vsub.f32 %v1969, %v1970
        %v1972 = vand.u32 %v1971, 4294901760
        %1973 = vmatmul.mubr.f32.gmra.mrb[0].mxu0 %v1972
        %v1974 = vpop.f32.mrb[0].mxu0
        %v1975 = vadd.f32 %v1795, %v1974
        %v1976 = vpop.f32.mrb[0].mxu0
        %1977 = vmatprep.mubr.f32.mxu0 0.0
        %v1978 = vand.u32 %v1766, 4294901760
        %v1979 = vsub.f32 %v1766, %v1978
        %v1980 = vand.u32 %v1979, 4294901760
        %v1981 = vsub.f32 %v1979, %v1980
        %v1982 = vand.u32 %v1981, 4294901760
        %1983 = vmatmul.mubr.f32.gmra.mrb[0].mxu0 %v1982
        %v1984 = vpop.f32.mrb[0].mxu0
        %v1985 = vadd.f32 %v1795, %v1984
        %v1986 = vpop.f32.mrb[0].mxu0
        %1987 = vmatprep.mubr.f32.mxu0 0.0
        %v1988 = vand.u32 %v1767, 4294901760
        %v1989 = vsub.f32 %v1767, %v1988
        %v1990 = vand.u32 %v1989, 4294901760
        %v1991 = vsub.f32 %v1989, %v1990
        %v1992 = vand.u32 %v1991, 4294901760
        %1993 = vmatmul.mubr.f32.gmra.mrb[0].mxu0 %v1992
        %v1994 = vpop.f32.mrb[0].mxu0
        %v1995 = vadd.f32 %v1795, %v1994
        %v1996 = vpop.f32.mrb[0].mxu0
        %1997 = vmatprep.mubr.f32.mxu0 0.0
        %v1998 = vand.u32 %v1768, 4294901760
        %v1999 = vsub.f32 %v1768, %v1998
        %v2000 = vand.u32 %v1999, 4294901760
        %v2001 = vsub.f32 %v1999, %v2000
        %v2002 = vand.u32 %v2001, 4294901760
        %2003 = vmatmul.mubr.f32.gmra.mrb[0].mxu0 %v2002
        %v2004 = vpop.f32.mrb[0].mxu0
        %v2005 = vadd.f32 %v1795, %v2004
        %v2006 = vpop.f32.mrb[0].mxu0
        %2007 = vmatprep.mubr.f32.mxu0 0.0
        %v2008 = vand.u32 %v1769, 4294901760
        %v2009 = vsub.f32 %v1769, %v2008
        %v2010 = vand.u32 %v2009, 4294901760
        %v2011 = vsub.f32 %v2009, %v2010
        %v2012 = vand.u32 %v2011, 4294901760
        %2013 = vmatmul.mubr.f32.gmra.mrb[0].mxu0 %v2012
        %v2014 = vpop.f32.mrb[0].mxu0
        %v2015 = vadd.f32 %v1795, %v2014
        %v2016 = vpop.f32.mrb[0].mxu0
        %2017 = vmatprep.mubr.f32.mxu0 0.0
        %v2018 = vand.u32 %v1770, 4294901760
        %v2019 = vsub.f32 %v1770, %v2018
        %v2020 = vand.u32 %v2019, 4294901760
        %v2021 = vsub.f32 %v2019, %v2020
        %v2022 = vand.u32 %v2021, 4294901760
        %2023 = vmatmul.mubr.f32.gmra.mrb[0].mxu0 %v2022
        %v2024 = vpop.f32.mrb[0].mxu0
        %v2025 = vadd.f32 %v1795, %v2024
        %v2026 = vpop.f32.mrb[0].mxu0
        %2027 = vmatprep.mubr.f32.mxu0 0.0
        %v2028 = vand.u32 %v1771, 4294901760
        %v2029 = vsub.f32 %v1771, %v2028
        %v2030 = vand.u32 %v2029, 4294901760
        %v2031 = vsub.f32 %v2029, %v2030
        %v2032 = vand.u32 %v2031, 4294901760
        %2033 = vmatmul.mubr.f32.gmra.mrb[0].mxu0 %v2032
        %v2034 = vpop.f32.mrb[0].mxu0
        %v2035 = vadd.f32 %v1795, %v2034
        %v2036 = vpop.f32.mrb[0].mxu0
        %2037 = vdwg.mxu0
        %2038 = vmatprep.subr.mxu0 0.0
        %v2039 = vand.u32 %v1773, 4294901760
        %v2040 = vsub.f32 %v1773, %v2039
        %v2041 = vand.u32 %v2040, 4294901760
        %v2042 = vsub.f32 %v2040, %v2041
        %v2043 = vand.u32 %v2042, 4294901760
        %2044 = vmatpush1.msra.mxu0 %v2043
        %2045 = vmatprep.subr.mxu0 0.0
        %v2046 = vand.u32 %v1774, 4294901760
        %v2047 = vsub.f32 %v1774, %v2046
        %v2048 = vand.u32 %v2047, 4294901760
        %v2049 = vsub.f32 %v2047, %v2048
        %v2050 = vand.u32 %v2049, 4294901760
        %2051 = vmatpush1.msra.mxu0 %v2050
        %2052 = vmatprep.subr.mxu0 0.0
        %v2053 = vand.u32 %v1775, 4294901760
        %v2054 = vsub.f32 %v1775, %v2053
        %v2055 = vand.u32 %v2054, 4294901760
        %v2056 = vsub.f32 %v2054, %v2055
        %v2057 = vand.u32 %v2056, 4294901760
        %2058 = vmatpush1.msra.mxu0 %v2057
        %2059 = vmatprep.subr.mxu0 0.0
        %v2060 = vand.u32 %v1776, 4294901760
        %v2061 = vsub.f32 %v1776, %v2060
        %v2062 = vand.u32 %v2061, 4294901760
        %v2063 = vsub.f32 %v2061, %v2062
        %v2064 = vand.u32 %v2063, 4294901760
        %2065 = vmatpush1.msra.mxu0 %v2064
        %2066 = vmatprep.subr.mxu0 0.0
        %v2067 = vand.u32 %v1777, 4294901760
        %v2068 = vsub.f32 %v1777, %v2067
        %v2069 = vand.u32 %v2068, 4294901760
        %v2070 = vsub.f32 %v2068, %v2069
        %v2071 = vand.u32 %v2070, 4294901760
        %2072 = vmatpush1.msra.mxu0 %v2071
        %2073 = vmatprep.subr.mxu0 0.0
        %v2074 = vand.u32 %v1778, 4294901760
        %v2075 = vsub.f32 %v1778, %v2074
        %v2076 = vand.u32 %v2075, 4294901760
        %v2077 = vsub.f32 %v2075, %v2076
        %v2078 = vand.u32 %v2077, 4294901760
        %2079 = vmatpush1.msra.mxu0 %v2078
        %2080 = vmatprep.subr.mxu0 0.0
        %v2081 = vand.u32 %v1779, 4294901760
        %v2082 = vsub.f32 %v1779, %v2081
        %v2083 = vand.u32 %v2082, 4294901760
        %v2084 = vsub.f32 %v2082, %v2083
        %v2085 = vand.u32 %v2084, 4294901760
        %2086 = vmatpush1.msra.mxu0 %v2085
        %2087 = vmatprep.subr.mxu0 0.0
        %v2088 = vand.u32 %v1780, 4294901760
        %v2089 = vsub.f32 %v1780, %v2088
        %v2090 = vand.u32 %v2089, 4294901760
        %v2091 = vsub.f32 %v2089, %v2090
        %v2092 = vand.u32 %v2091, 4294901760
        %2093 = vmatpush1.msra.mxu0 %v2092
        %2094 = vmatprep.subr.mxu0 0.0
        %v2095 = vand.u32 %v1781, 4294901760
        %v2096 = vsub.f32 %v1781, %v2095
        %v2097 = vand.u32 %v2096, 4294901760
        %v2098 = vsub.f32 %v2096, %v2097
        %v2099 = vand.u32 %v2098, 4294901760
        %2100 = vmatpush1.msra.mxu0 %v2099
        %2101 = vmatprep.subr.mxu0 0.0
        %v2102 = vand.u32 %v1782, 4294901760
        %v2103 = vsub.f32 %v1782, %v2102
        %v2104 = vand.u32 %v2103, 4294901760
        %v2105 = vsub.f32 %v2103, %v2104
        %v2106 = vand.u32 %v2105, 4294901760
        %2107 = vmatpush1.msra.mxu0 %v2106
        %2108 = vmatprep.subr.mxu0 0.0
        %v2109 = vand.u32 %v1783, 4294901760
        %v2110 = vsub.f32 %v1783, %v2109
        %v2111 = vand.u32 %v2110, 4294901760
        %v2112 = vsub.f32 %v2110, %v2111
        %v2113 = vand.u32 %v2112, 4294901760
        %2114 = vmatpush1.msra.mxu0 %v2113
        %2115 = vmatprep.subr.mxu0 0.0
        %v2116 = vand.u32 %v1784, 4294901760
        %v2117 = vsub.f32 %v1784, %v2116
        %v2118 = vand.u32 %v2117, 4294901760
        %v2119 = vsub.f32 %v2117, %v2118
        %v2120 = vand.u32 %v2119, 4294901760
        %2121 = vmatpush1.msra.mxu0 %v2120
        %2122 = vmatprep.subr.mxu0 0.0
        %v2123 = vand.u32 %v1785, 4294901760
        %v2124 = vsub.f32 %v1785, %v2123
        %v2125 = vand.u32 %v2124, 4294901760
        %v2126 = vsub.f32 %v2124, %v2125
        %v2127 = vand.u32 %v2126, 4294901760
        %2128 = vmatpush1.msra.mxu0 %v2127
        %2129 = vmatprep.subr.mxu0 0.0
        %v2130 = vand.u32 %v1786, 4294901760
        %v2131 = vsub.f32 %v1786, %v2130
        %v2132 = vand.u32 %v2131, 4294901760
        %v2133 = vsub.f32 %v2131, %v2132
        %v2134 = vand.u32 %v2133, 4294901760
        %2135 = vmatpush1.msra.mxu0 %v2134
        %2136 = vmatprep.subr.mxu0 0.0
        %v2137 = vand.u32 %v1787, 4294901760
        %v2138 = vsub.f32 %v1787, %v2137
        %v2139 = vand.u32 %v2138, 4294901760
        %v2140 = vsub.f32 %v2138, %v2139
        %v2141 = vand.u32 %v2140, 4294901760
        %2142 = vmatpush1.msra.mxu0 %v2141
        %2143 = vmatprep.subr.mxu0 0.0
        %v2144 = vand.u32 %v1788, 4294901760
        %v2145 = vsub.f32 %v1788, %v2144
        %v2146 = vand.u32 %v2145, 4294901760
        %v2147 = vsub.f32 %v2145, %v2146
        %v2148 = vand.u32 %v2147, 4294901760
        %2149 = vmatpush1.msra.mxu0 %v2148
        %2150 = vmatprep.subr.mxu0 0.0
        %2151 = vmatpush1.msra.mxu0 0.0
        %2152 = vmatprep.subr.mxu0 0.0
        %2153 = vmatpush1.msra.mxu0 0.0
        %2154 = vmatprep.subr.mxu0 0.0
        %2155 = vmatpush1.msra.mxu0 0.0
        %2156 = vmatprep.subr.mxu0 0.0
        %2157 = vmatpush1.msra.mxu0 0.0
        %2158 = vmatprep.subr.mxu0 0.0
        %2159 = vmatpush1.msra.mxu0 0.0
        %2160 = vmatprep.subr.mxu0 0.0
        %2161 = vmatpush1.msra.mxu0 0.0
        %2162 = vmatprep.subr.mxu0 0.0
        %2163 = vmatpush1.msra.mxu0 0.0
        %2164 = vmatprep.subr.mxu0 0.0
        %2165 = vmatpush1.msra.mxu0 0.0
        %2166 = vmatprep.subr.mxu0 0.0
        %2167 = vmatpush1.msra.mxu0 0.0
        %2168 = vmatprep.subr.mxu0 0.0
        %2169 = vmatpush1.msra.mxu0 0.0
        %2170 = vmatprep.subr.mxu0 0.0
        %2171 = vmatpush1.msra.mxu0 0.0
        %2172 = vmatprep.subr.mxu0 0.0
        %2173 = vmatpush1.msra.mxu0 0.0
        %2174 = vmatprep.subr.mxu0 0.0
        %2175 = vmatpush1.msra.mxu0 0.0
        %2176 = vmatprep.subr.mxu0 0.0
        %2177 = vmatpush1.msra.mxu0 0.0
        %2178 = vmatprep.subr.mxu0 0.0
        %2179 = vmatpush1.msra.mxu0 0.0
        %2180 = vmatprep.subr.mxu0 0.0
        %2181 = vmatpush1.msra.mxu0 0.0
        %2182 = vmatprep.mubr.f32.mxu0 0.0
        %v2183 = vand.u32 %v1756, 4294901760
        %2184 = vmatmul.mubr.f32.gmra.mrb[0].mxu0 %v2183
        %v2185 = vpop.f32.mrb[0].mxu0
        %v2186 = vadd.f32 %v1885, %v2185
        %v2187 = vpop.f32.mrb[0].mxu0
        %2188 = vmatprep.mubr.f32.mxu0 0.0
        %v2189 = vand.u32 %v1757, 4294901760
        %2190 = vmatmul.mubr.f32.gmra.mrb[0].mxu0 %v2189
        %v2191 = vpop.f32.mrb[0].mxu0
        %v2192 = vadd.f32 %v1895, %v2191
        %v2193 = vpop.f32.mrb[0].mxu0
        %2194 = vmatprep.mubr.f32.mxu0 0.0
        %v2195 = vand.u32 %v1758, 4294901760
        %2196 = vmatmul.mubr.f32.gmra.mrb[0].mxu0 %v2195
        %v2197 = vpop.f32.mrb[0].mxu0
        %v2198 = vadd.f32 %v1905, %v2197
        %v2199 = vpop.f32.mrb[0].mxu0
        %2200 = vmatprep.mubr.f32.mxu0 0.0
        %v2201 = vand.u32 %v1759, 4294901760
        %2202 = vmatmul.mubr.f32.gmra.mrb[0].mxu0 %v2201
        %v2203 = vpop.f32.mrb[0].mxu0
        %v2204 = vadd.f32 %v1915, %v2203
        %v2205 = vpop.f32.mrb[0].mxu0
        %2206 = vmatprep.mubr.f32.mxu0 0.0
        %v2207 = vand.u32 %v1760, 4294901760
        %2208 = vmatmul.mubr.f32.gmra.mrb[0].mxu0 %v2207
        %v2209 = vpop.f32.mrb[0].mxu0
        %v2210 = vadd.f32 %v1925, %v2209
        %v2211 = vpop.f32.mrb[0].mxu0
        %2212 = vmatprep.mubr.f32.mxu0 0.0
        %v2213 = vand.u32 %v1761, 4294901760
        %2214 = vmatmul.mubr.f32.gmra.mrb[0].mxu0 %v2213
        %v2215 = vpop.f32.mrb[0].mxu0
        %v2216 = vadd.f32 %v1935, %v2215
        %v2217 = vpop.f32.mrb[0].mxu0
        %2218 = vmatprep.mubr.f32.mxu0 0.0
        %v2219 = vand.u32 %v1762, 4294901760
        %2220 = vmatmul.mubr.f32.gmra.mrb[0].mxu0 %v2219
        %v2221 = vpop.f32.mrb[0].mxu0
        %v2222 = vadd.f32 %v1945, %v2221
        %v2223 = vpop.f32.mrb[0].mxu0
        %2224 = vmatprep.mubr.f32.mxu0 0.0
        %v2225 = vand.u32 %v1763, 4294901760
        %2226 = vmatmul.mubr.f32.gmra.mrb[0].mxu0 %v2225
        %v2227 = vpop.f32.mrb[0].mxu0
        %v2228 = vadd.f32 %v1955, %v2227
        %v2229 = vpop.f32.mrb[0].mxu0
        %2230 = vmatprep.mubr.f32.mxu0 0.0
        %v2231 = vand.u32 %v1764, 4294901760
        %2232 = vmatmul.mubr.f32.gmra.mrb[0].mxu0 %v2231
        %v2233 = vpop.f32.mrb[0].mxu0
        %v2234 = vadd.f32 %v1965, %v2233
        %v2235 = vpop.f32.mrb[0].mxu0
        %2236 = vmatprep.mubr.f32.mxu0 0.0
        %v2237 = vand.u32 %v1765, 4294901760
        %2238 = vmatmul.mubr.f32.gmra.mrb[0].mxu0 %v2237
        %v2239 = vpop.f32.mrb[0].mxu0
        %v2240 = vadd.f32 %v1975, %v2239
        %v2241 = vpop.f32.mrb[0].mxu0
        %2242 = vmatprep.mubr.f32.mxu0 0.0
        %v2243 = vand.u32 %v1766, 4294901760
        %2244 = vmatmul.mubr.f32.gmra.mrb[0].mxu0 %v2243
        %v2245 = vpop.f32.mrb[0].mxu0
        %v2246 = vadd.f32 %v1985, %v2245
        %v2247 = vpop.f32.mrb[0].mxu0
        %2248 = vmatprep.mubr.f32.mxu0 0.0
        %v2249 = vand.u32 %v1767, 4294901760
        %2250 = vmatmul.mubr.f32.gmra.mrb[0].mxu0 %v2249
        %v2251 = vpop.f32.mrb[0].mxu0
        %v2252 = vadd.f32 %v1995, %v2251
        %v2253 = vpop.f32.mrb[0].mxu0
        %2254 = vmatprep.mubr.f32.mxu0 0.0
        %v2255 = vand.u32 %v1768, 4294901760
        %2256 = vmatmul.mubr.f32.gmra.mrb[0].mxu0 %v2255
        %v2257 = vpop.f32.mrb[0].mxu0
        %v2258 = vadd.f32 %v2005, %v2257
        %v2259 = vpop.f32.mrb[0].mxu0
        %2260 = vmatprep.mubr.f32.mxu0 0.0
        %v2261 = vand.u32 %v1769, 4294901760
        %2262 = vmatmul.mubr.f32.gmra.mrb[0].mxu0 %v2261
        %v2263 = vpop.f32.mrb[0].mxu0
        %v2264 = vadd.f32 %v2015, %v2263
        %v2265 = vpop.f32.mrb[0].mxu0
        %2266 = vmatprep.mubr.f32.mxu0 0.0
        %v2267 = vand.u32 %v1770, 4294901760
        %2268 = vmatmul.mubr.f32.gmra.mrb[0].mxu0 %v2267
        %v2269 = vpop.f32.mrb[0].mxu0
        %v2270 = vadd.f32 %v2025, %v2269
        %v2271 = vpop.f32.mrb[0].mxu0
        %2272 = vmatprep.mubr.f32.mxu0 0.0
        %v2273 = vand.u32 %v1771, 4294901760
        %2274 = vmatmul.mubr.f32.gmra.mrb[0].mxu0 %v2273
        %v2275 = vpop.f32.mrb[0].mxu0
        %v2276 = vadd.f32 %v2035, %v2275
        %v2277 = vpop.f32.mrb[0].mxu0
        %2278 = vdwg.mxu0
        %2279 = vmatprep.subr.mxu0 0.0
        %v2280 = vand.u32 %v1773, 4294901760
        %v2281 = vsub.f32 %v1773, %v2280
        %2282 = vmatpush1.msra.mxu0 %v2281
        %2283 = vmatprep.subr.mxu0 0.0
        %v2284 = vand.u32 %v1774, 4294901760
        %v2285 = vsub.f32 %v1774, %v2284
        %2286 = vmatpush1.msra.mxu0 %v2285
        %2287 = vmatprep.subr.mxu0 0.0
        %v2288 = vand.u32 %v1775, 4294901760
        %v2289 = vsub.f32 %v1775, %v2288
        %2290 = vmatpush1.msra.mxu0 %v2289
        %2291 = vmatprep.subr.mxu0 0.0
        %v2292 = vand.u32 %v1776, 4294901760
        %v2293 = vsub.f32 %v1776, %v2292
        %2294 = vmatpush1.msra.mxu0 %v2293
        %2295 = vmatprep.subr.mxu0 0.0
        %v2296 = vand.u32 %v1777, 4294901760
        %v2297 = vsub.f32 %v1777, %v2296
        %2298 = vmatpush1.msra.mxu0 %v2297
        %2299 = vmatprep.subr.mxu0 0.0
        %v2300 = vand.u32 %v1778, 4294901760
        %v2301 = vsub.f32 %v1778, %v2300
        %2302 = vmatpush1.msra.mxu0 %v2301
        %2303 = vmatprep.subr.mxu0 0.0
        %v2304 = vand.u32 %v1779, 4294901760
        %v2305 = vsub.f32 %v1779, %v2304
        %2306 = vmatpush1.msra.mxu0 %v2305
        %2307 = vmatprep.subr.mxu0 0.0
        %v2308 = vand.u32 %v1780, 4294901760
        %v2309 = vsub.f32 %v1780, %v2308
        %2310 = vmatpush1.msra.mxu0 %v2309
        %2311 = vmatprep.subr.mxu0 0.0
        %v2312 = vand.u32 %v1781, 4294901760
        %v2313 = vsub.f32 %v1781, %v2312
        %2314 = vmatpush1.msra.mxu0 %v2313
        %2315 = vmatprep.subr.mxu0 0.0
        %v2316 = vand.u32 %v1782, 4294901760
        %v2317 = vsub.f32 %v1782, %v2316
        %2318 = vmatpush1.msra.mxu0 %v2317
        %2319 = vmatprep.subr.mxu0 0.0
        %v2320 = vand.u32 %v1783, 4294901760
        %v2321 = vsub.f32 %v1783, %v2320
        %2322 = vmatpush1.msra.mxu0 %v2321
        %2323 = vmatprep.subr.mxu0 0.0
        %v2324 = vand.u32 %v1784, 4294901760
        %v2325 = vsub.f32 %v1784, %v2324
        %2326 = vmatpush1.msra.mxu0 %v2325
        %2327 = vmatprep.subr.mxu0 0.0
        %v2328 = vand.u32 %v1785, 4294901760
        %v2329 = vsub.f32 %v1785, %v2328
        %2330 = vmatpush1.msra.mxu0 %v2329
        %2331 = vmatprep.subr.mxu0 0.0
        %v2332 = vand.u32 %v1786, 4294901760
        %v2333 = vsub.f32 %v1786, %v2332
        %2334 = vmatpush1.msra.mxu0 %v2333
        %2335 = vmatprep.subr.mxu0 0.0
        %v2336 = vand.u32 %v1787, 4294901760
        %v2337 = vsub.f32 %v1787, %v2336
        %2338 = vmatpush1.msra.mxu0 %v2337
        %2339 = vmatprep.subr.mxu0 0.0
        %v2340 = vand.u32 %v1788, 4294901760
        %v2341 = vsub.f32 %v1788, %v2340
        %2342 = vmatpush1.msra.mxu0 %v2341
        %2343 = vmatprep.subr.mxu0 0.0
        %2344 = vmatpush1.msra.mxu0 0.0
        %2345 = vmatprep.subr.mxu0 0.0
        %2346 = vmatpush1.msra.mxu0 0.0
        %2347 = vmatprep.subr.mxu0 0.0
        %2348 = vmatpush1.msra.mxu0 0.0
        %2349 = vmatprep.subr.mxu0 0.0
        %2350 = vmatpush1.msra.mxu0 0.0
        %2351 = vmatprep.subr.mxu0 0.0
        %2352 = vmatpush1.msra.mxu0 0.0
        %2353 = vmatprep.subr.mxu0 0.0
        %2354 = vmatpush1.msra.mxu0 0.0
        %2355 = vmatprep.subr.mxu0 0.0
        %2356 = vmatpush1.msra.mxu0 0.0
        %2357 = vmatprep.subr.mxu0 0.0
        %2358 = vmatpush1.msra.mxu0 0.0
        %2359 = vmatprep.subr.mxu0 0.0
        %2360 = vmatpush1.msra.mxu0 0.0
        %2361 = vmatprep.subr.mxu0 0.0
        %2362 = vmatpush1.msra.mxu0 0.0
        %2363 = vmatprep.subr.mxu0 0.0
        %2364 = vmatpush1.msra.mxu0 0.0
        %2365 = vmatprep.subr.mxu0 0.0
        %2366 = vmatpush1.msra.mxu0 0.0
        %2367 = vmatprep.subr.mxu0 0.0
        %2368 = vmatpush1.msra.mxu0 0.0
        %2369 = vmatprep.subr.mxu0 0.0
        %2370 = vmatpush1.msra.mxu0 0.0
        %2371 = vmatprep.subr.mxu0 0.0
        %2372 = vmatpush1.msra.mxu0 0.0
        %2373 = vmatprep.subr.mxu0 0.0
        %2374 = vmatpush1.msra.mxu0 0.0
        %2375 = vmatprep.mubr.f32.mxu0 0.0
        %v2376 = vand.u32 %v1756, 4294901760
        %v2377 = vsub.f32 %v1756, %v2376
        %2378 = vmatmul.mubr.f32.gmra.mrb[0].mxu0 %v2377
        %v2379 = vpop.f32.mrb[0].mxu0
        %v2380 = vadd.f32 %v2186, %v2379
        %v2381 = vpop.f32.mrb[0].mxu0
        %2382 = vmatprep.mubr.f32.mxu0 0.0
        %v2383 = vand.u32 %v1757, 4294901760
        %v2384 = vsub.f32 %v1757, %v2383
        %2385 = vmatmul.mubr.f32.gmra.mrb[0].mxu0 %v2384
        %v2386 = vpop.f32.mrb[0].mxu0
        %v2387 = vadd.f32 %v2192, %v2386
        %v2388 = vpop.f32.mrb[0].mxu0
        %2389 = vmatprep.mubr.f32.mxu0 0.0
        %v2390 = vand.u32 %v1758, 4294901760
        %v2391 = vsub.f32 %v1758, %v2390
        %2392 = vmatmul.mubr.f32.gmra.mrb[0].mxu0 %v2391
        %v2393 = vpop.f32.mrb[0].mxu0
        %v2394 = vadd.f32 %v2198, %v2393
        %v2395 = vpop.f32.mrb[0].mxu0
        %2396 = vmatprep.mubr.f32.mxu0 0.0
        %v2397 = vand.u32 %v1759, 4294901760
        %v2398 = vsub.f32 %v1759, %v2397
        %2399 = vmatmul.mubr.f32.gmra.mrb[0].mxu0 %v2398
        %v2400 = vpop.f32.mrb[0].mxu0
        %v2401 = vadd.f32 %v2204, %v2400
        %v2402 = vpop.f32.mrb[0].mxu0
        %2403 = vmatprep.mubr.f32.mxu0 0.0
        %v2404 = vand.u32 %v1760, 4294901760
        %v2405 = vsub.f32 %v1760, %v2404
        %2406 = vmatmul.mubr.f32.gmra.mrb[0].mxu0 %v2405
        %v2407 = vpop.f32.mrb[0].mxu0
        %v2408 = vadd.f32 %v2210, %v2407
        %v2409 = vpop.f32.mrb[0].mxu0
        %2410 = vmatprep.mubr.f32.mxu0 0.0
        %v2411 = vand.u32 %v1761, 4294901760
        %v2412 = vsub.f32 %v1761, %v2411
        %2413 = vmatmul.mubr.f32.gmra.mrb[0].mxu0 %v2412
        %v2414 = vpop.f32.mrb[0].mxu0
        %v2415 = vadd.f32 %v2216, %v2414
        %v2416 = vpop.f32.mrb[0].mxu0
        %2417 = vmatprep.mubr.f32.mxu0 0.0
        %v2418 = vand.u32 %v1762, 4294901760
        %v2419 = vsub.f32 %v1762, %v2418
        %2420 = vmatmul.mubr.f32.gmra.mrb[0].mxu0 %v2419
        %v2421 = vpop.f32.mrb[0].mxu0
        %v2422 = vadd.f32 %v2222, %v2421
        %v2423 = vpop.f32.mrb[0].mxu0
        %2424 = vmatprep.mubr.f32.mxu0 0.0
        %v2425 = vand.u32 %v1763, 4294901760
        %v2426 = vsub.f32 %v1763, %v2425
        %2427 = vmatmul.mubr.f32.gmra.mrb[0].mxu0 %v2426
        %v2428 = vpop.f32.mrb[0].mxu0
        %v2429 = vadd.f32 %v2228, %v2428
        %v2430 = vpop.f32.mrb[0].mxu0
        %2431 = vmatprep.mubr.f32.mxu0 0.0
        %v2432 = vand.u32 %v1764, 4294901760
        %v2433 = vsub.f32 %v1764, %v2432
        %2434 = vmatmul.mubr.f32.gmra.mrb[0].mxu0 %v2433
        %v2435 = vpop.f32.mrb[0].mxu0
        %v2436 = vadd.f32 %v2234, %v2435
        %v2437 = vpop.f32.mrb[0].mxu0
        %2438 = vmatprep.mubr.f32.mxu0 0.0
        %v2439 = vand.u32 %v1765, 4294901760
        %v2440 = vsub.f32 %v1765, %v2439
        %2441 = vmatmul.mubr.f32.gmra.mrb[0].mxu0 %v2440
        %v2442 = vpop.f32.mrb[0].mxu0
        %v2443 = vadd.f32 %v2240, %v2442
        %v2444 = vpop.f32.mrb[0].mxu0
        %2445 = vmatprep.mubr.f32.mxu0 0.0
        %v2446 = vand.u32 %v1766, 4294901760
        %v2447 = vsub.f32 %v1766, %v2446
        %2448 = vmatmul.mubr.f32.gmra.mrb[0].mxu0 %v2447
        %v2449 = vpop.f32.mrb[0].mxu0
        %v2450 = vadd.f32 %v2246, %v2449
        %v2451 = vpop.f32.mrb[0].mxu0
        %2452 = vmatprep.mubr.f32.mxu0 0.0
        %v2453 = vand.u32 %v1767, 4294901760
        %v2454 = vsub.f32 %v1767, %v2453
        %2455 = vmatmul.mubr.f32.gmra.mrb[0].mxu0 %v2454
        %v2456 = vpop.f32.mrb[0].mxu0
        %v2457 = vadd.f32 %v2252, %v2456
        %v2458 = vpop.f32.mrb[0].mxu0
        %2459 = vmatprep.mubr.f32.mxu0 0.0
        %v2460 = vand.u32 %v1768, 4294901760
        %v2461 = vsub.f32 %v1768, %v2460
        %2462 = vmatmul.mubr.f32.gmra.mrb[0].mxu0 %v2461
        %v2463 = vpop.f32.mrb[0].mxu0
        %v2464 = vadd.f32 %v2258, %v2463
        %v2465 = vpop.f32.mrb[0].mxu0
        %2466 = vmatprep.mubr.f32.mxu0 0.0
        %v2467 = vand.u32 %v1769, 4294901760
        %v2468 = vsub.f32 %v1769, %v2467
        %2469 = vmatmul.mubr.f32.gmra.mrb[0].mxu0 %v2468
        %v2470 = vpop.f32.mrb[0].mxu0
        %v2471 = vadd.f32 %v2264, %v2470
        %v2472 = vpop.f32.mrb[0].mxu0
        %2473 = vmatprep.mubr.f32.mxu0 0.0
        %v2474 = vand.u32 %v1770, 4294901760
        %v2475 = vsub.f32 %v1770, %v2474
        %2476 = vmatmul.mubr.f32.gmra.mrb[0].mxu0 %v2475
        %v2477 = vpop.f32.mrb[0].mxu0
        %v2478 = vadd.f32 %v2270, %v2477
        %v2479 = vpop.f32.mrb[0].mxu0
        %2480 = vmatprep.mubr.f32.mxu0 0.0
        %v2481 = vand.u32 %v1771, 4294901760
        %v2482 = vsub.f32 %v1771, %v2481
        %2483 = vmatmul.mubr.f32.gmra.mrb[0].mxu0 %v2482
        %v2484 = vpop.f32.mrb[0].mxu0
        %v2485 = vadd.f32 %v2276, %v2484
        %v2486 = vpop.f32.mrb[0].mxu0
        %2487 = vdwg.mxu0
        %2488 = vmatprep.subr.mxu0 0.0
        %v2489 = vand.u32 %v1773, 4294901760
        %2490 = vmatpush1.msra.mxu0 %v2489
        %2491 = vmatprep.subr.mxu0 0.0
        %v2492 = vand.u32 %v1774, 4294901760
        %2493 = vmatpush1.msra.mxu0 %v2492
        %2494 = vmatprep.subr.mxu0 0.0
        %v2495 = vand.u32 %v1775, 4294901760
        %2496 = vmatpush1.msra.mxu0 %v2495
        %2497 = vmatprep.subr.mxu0 0.0
        %v2498 = vand.u32 %v1776, 4294901760
        %2499 = vmatpush1.msra.mxu0 %v2498
        %2500 = vmatprep.subr.mxu0 0.0
        %v2501 = vand.u32 %v1777, 4294901760
        %2502 = vmatpush1.msra.mxu0 %v2501
        %2503 = vmatprep.subr.mxu0 0.0
        %v2504 = vand.u32 %v1778, 4294901760
        %2505 = vmatpush1.msra.mxu0 %v2504
        %2506 = vmatprep.subr.mxu0 0.0
        %v2507 = vand.u32 %v1779, 4294901760
        %2508 = vmatpush1.msra.mxu0 %v2507
        %2509 = vmatprep.subr.mxu0 0.0
        %v2510 = vand.u32 %v1780, 4294901760
        %2511 = vmatpush1.msra.mxu0 %v2510
        %2512 = vmatprep.subr.mxu0 0.0
        %v2513 = vand.u32 %v1781, 4294901760
        %2514 = vmatpush1.msra.mxu0 %v2513
        %2515 = vmatprep.subr.mxu0 0.0
        %v2516 = vand.u32 %v1782, 4294901760
        %2517 = vmatpush1.msra.mxu0 %v2516
        %2518 = vmatprep.subr.mxu0 0.0
        %v2519 = vand.u32 %v1783, 4294901760
        %2520 = vmatpush1.msra.mxu0 %v2519
        %2521 = vmatprep.subr.mxu0 0.0
        %v2522 = vand.u32 %v1784, 4294901760
        %2523 = vmatpush1.msra.mxu0 %v2522
        %2524 = vmatprep.subr.mxu0 0.0
        %v2525 = vand.u32 %v1785, 4294901760
        %2526 = vmatpush1.msra.mxu0 %v2525
        %2527 = vmatprep.subr.mxu0 0.0
        %v2528 = vand.u32 %v1786, 4294901760
        %2529 = vmatpush1.msra.mxu0 %v2528
        %2530 = vmatprep.subr.mxu0 0.0
        %v2531 = vand.u32 %v1787, 4294901760
        %2532 = vmatpush1.msra.mxu0 %v2531
        %2533 = vmatprep.subr.mxu0 0.0
        %v2534 = vand.u32 %v1788, 4294901760
        %2535 = vmatpush1.msra.mxu0 %v2534
        %2536 = vmatprep.subr.mxu0 0.0
        %2537 = vmatpush1.msra.mxu0 0.0
        %2538 = vmatprep.subr.mxu0 0.0
        %2539 = vmatpush1.msra.mxu0 0.0
        %2540 = vmatprep.subr.mxu0 0.0
        %2541 = vmatpush1.msra.mxu0 0.0
        %2542 = vmatprep.subr.mxu0 0.0
        %2543 = vmatpush1.msra.mxu0 0.0
        %2544 = vmatprep.subr.mxu0 0.0
        %2545 = vmatpush1.msra.mxu0 0.0
        %2546 = vmatprep.subr.mxu0 0.0
        %2547 = vmatpush1.msra.mxu0 0.0
        %2548 = vmatprep.subr.mxu0 0.0
        %2549 = vmatpush1.msra.mxu0 0.0
        %2550 = vmatprep.subr.mxu0 0.0
        %2551 = vmatpush1.msra.mxu0 0.0
        %2552 = vmatprep.subr.mxu0 0.0
        %2553 = vmatpush1.msra.mxu0 0.0
        %2554 = vmatprep.subr.mxu0 0.0
        %2555 = vmatpush1.msra.mxu0 0.0
        %2556 = vmatprep.subr.mxu0 0.0
        %2557 = vmatpush1.msra.mxu0 0.0
        %2558 = vmatprep.subr.mxu0 0.0
        %2559 = vmatpush1.msra.mxu0 0.0
        %2560 = vmatprep.subr.mxu0 0.0
        %2561 = vmatpush1.msra.mxu0 0.0
        %2562 = vmatprep.subr.mxu0 0.0
        %2563 = vmatpush1.msra.mxu0 0.0
        %2564 = vmatprep.subr.mxu0 0.0
        %2565 = vmatpush1.msra.mxu0 0.0
        %2566 = vmatprep.subr.mxu0 0.0
        %2567 = vmatpush1.msra.mxu0 0.0
        %2568 = vmatprep.mubr.f32.mxu0 0.0
        %v2569 = vand.u32 %v1756, 4294901760
        %v2570 = vsub.f32 %v1756, %v2569
        %v2571 = vand.u32 %v2570, 4294901760
        %2572 = vmatmul.mubr.f32.gmra.mrb[0].mxu0 %v2571
        %v2573 = vpop.f32.mrb[0].mxu0
        %v2574 = vadd.f32 %v2380, %v2573
        %v2575 = vpop.f32.mrb[0].mxu0
        %2576 = vmatprep.mubr.f32.mxu0 0.0
        %v2577 = vand.u32 %v1757, 4294901760
        %v2578 = vsub.f32 %v1757, %v2577
        %v2579 = vand.u32 %v2578, 4294901760
        %2580 = vmatmul.mubr.f32.gmra.mrb[0].mxu0 %v2579
        %v2581 = vpop.f32.mrb[0].mxu0
        %v2582 = vadd.f32 %v2387, %v2581
        %v2583 = vpop.f32.mrb[0].mxu0
        %2584 = vmatprep.mubr.f32.mxu0 0.0
        %v2585 = vand.u32 %v1758, 4294901760
        %v2586 = vsub.f32 %v1758, %v2585
        %v2587 = vand.u32 %v2586, 4294901760
        %2588 = vmatmul.mubr.f32.gmra.mrb[0].mxu0 %v2587
        %v2589 = vpop.f32.mrb[0].mxu0
        %v2590 = vadd.f32 %v2394, %v2589
        %v2591 = vpop.f32.mrb[0].mxu0
        %2592 = vmatprep.mubr.f32.mxu0 0.0
        %v2593 = vand.u32 %v1759, 4294901760
        %v2594 = vsub.f32 %v1759, %v2593
        %v2595 = vand.u32 %v2594, 4294901760
        %2596 = vmatmul.mubr.f32.gmra.mrb[0].mxu0 %v2595
        %v2597 = vpop.f32.mrb[0].mxu0
        %v2598 = vadd.f32 %v2401, %v2597
        %v2599 = vpop.f32.mrb[0].mxu0
        %2600 = vmatprep.mubr.f32.mxu0 0.0
        %v2601 = vand.u32 %v1760, 4294901760
        %v2602 = vsub.f32 %v1760, %v2601
        %v2603 = vand.u32 %v2602, 4294901760
        %2604 = vmatmul.mubr.f32.gmra.mrb[0].mxu0 %v2603
        %v2605 = vpop.f32.mrb[0].mxu0
        %v2606 = vadd.f32 %v2408, %v2605
        %v2607 = vpop.f32.mrb[0].mxu0
        %2608 = vmatprep.mubr.f32.mxu0 0.0
        %v2609 = vand.u32 %v1761, 4294901760
        %v2610 = vsub.f32 %v1761, %v2609
        %v2611 = vand.u32 %v2610, 4294901760
        %2612 = vmatmul.mubr.f32.gmra.mrb[0].mxu0 %v2611
        %v2613 = vpop.f32.mrb[0].mxu0
        %v2614 = vadd.f32 %v2415, %v2613
        %v2615 = vpop.f32.mrb[0].mxu0
        %2616 = vmatprep.mubr.f32.mxu0 0.0
        %v2617 = vand.u32 %v1762, 4294901760
        %v2618 = vsub.f32 %v1762, %v2617
        %v2619 = vand.u32 %v2618, 4294901760
        %2620 = vmatmul.mubr.f32.gmra.mrb[0].mxu0 %v2619
        %v2621 = vpop.f32.mrb[0].mxu0
        %v2622 = vadd.f32 %v2422, %v2621
        %v2623 = vpop.f32.mrb[0].mxu0
        %2624 = vmatprep.mubr.f32.mxu0 0.0
        %v2625 = vand.u32 %v1763, 4294901760
        %v2626 = vsub.f32 %v1763, %v2625
        %v2627 = vand.u32 %v2626, 4294901760
        %2628 = vmatmul.mubr.f32.gmra.mrb[0].mxu0 %v2627
        %v2629 = vpop.f32.mrb[0].mxu0
        %v2630 = vadd.f32 %v2429, %v2629
        %v2631 = vpop.f32.mrb[0].mxu0
        %2632 = vmatprep.mubr.f32.mxu0 0.0
        %v2633 = vand.u32 %v1764, 4294901760
        %v2634 = vsub.f32 %v1764, %v2633
        %v2635 = vand.u32 %v2634, 4294901760
        %2636 = vmatmul.mubr.f32.gmra.mrb[0].mxu0 %v2635
        %v2637 = vpop.f32.mrb[0].mxu0
        %v2638 = vadd.f32 %v2436, %v2637
        %v2639 = vpop.f32.mrb[0].mxu0
        %2640 = vmatprep.mubr.f32.mxu0 0.0
        %v2641 = vand.u32 %v1765, 4294901760
        %v2642 = vsub.f32 %v1765, %v2641
        %v2643 = vand.u32 %v2642, 4294901760
        %2644 = vmatmul.mubr.f32.gmra.mrb[0].mxu0 %v2643
        %v2645 = vpop.f32.mrb[0].mxu0
        %v2646 = vadd.f32 %v2443, %v2645
        %v2647 = vpop.f32.mrb[0].mxu0
        %2648 = vmatprep.mubr.f32.mxu0 0.0
        %v2649 = vand.u32 %v1766, 4294901760
        %v2650 = vsub.f32 %v1766, %v2649
        %v2651 = vand.u32 %v2650, 4294901760
        %2652 = vmatmul.mubr.f32.gmra.mrb[0].mxu0 %v2651
        %v2653 = vpop.f32.mrb[0].mxu0
        %v2654 = vadd.f32 %v2450, %v2653
        %v2655 = vpop.f32.mrb[0].mxu0
        %2656 = vmatprep.mubr.f32.mxu0 0.0
        %v2657 = vand.u32 %v1767, 4294901760
        %v2658 = vsub.f32 %v1767, %v2657
        %v2659 = vand.u32 %v2658, 4294901760
        %2660 = vmatmul.mubr.f32.gmra.mrb[0].mxu0 %v2659
        %v2661 = vpop.f32.mrb[0].mxu0
        %v2662 = vadd.f32 %v2457, %v2661
        %v2663 = vpop.f32.mrb[0].mxu0
        %2664 = vmatprep.mubr.f32.mxu0 0.0
        %v2665 = vand.u32 %v1768, 4294901760
        %v2666 = vsub.f32 %v1768, %v2665
        %v2667 = vand.u32 %v2666, 4294901760
        %2668 = vmatmul.mubr.f32.gmra.mrb[0].mxu0 %v2667
        %v2669 = vpop.f32.mrb[0].mxu0
        %v2670 = vadd.f32 %v2464, %v2669
        %v2671 = vpop.f32.mrb[0].mxu0
        %2672 = vmatprep.mubr.f32.mxu0 0.0
        %v2673 = vand.u32 %v1769, 4294901760
        %v2674 = vsub.f32 %v1769, %v2673
        %v2675 = vand.u32 %v2674, 4294901760
        %2676 = vmatmul.mubr.f32.gmra.mrb[0].mxu0 %v2675
        %v2677 = vpop.f32.mrb[0].mxu0
        %v2678 = vadd.f32 %v2471, %v2677
        %v2679 = vpop.f32.mrb[0].mxu0
        %2680 = vmatprep.mubr.f32.mxu0 0.0
        %v2681 = vand.u32 %v1770, 4294901760
        %v2682 = vsub.f32 %v1770, %v2681
        %v2683 = vand.u32 %v2682, 4294901760
        %2684 = vmatmul.mubr.f32.gmra.mrb[0].mxu0 %v2683
        %v2685 = vpop.f32.mrb[0].mxu0
        %v2686 = vadd.f32 %v2478, %v2685
        %v2687 = vpop.f32.mrb[0].mxu0
        %2688 = vmatprep.mubr.f32.mxu0 0.0
        %v2689 = vand.u32 %v1771, 4294901760
        %v2690 = vsub.f32 %v1771, %v2689
        %v2691 = vand.u32 %v2690, 4294901760
        %2692 = vmatmul.mubr.f32.gmra.mrb[0].mxu0 %v2691
        %v2693 = vpop.f32.mrb[0].mxu0
        %v2694 = vadd.f32 %v2485, %v2693
        %v2695 = vpop.f32.mrb[0].mxu0
        %2696 = vdwg.mxu0
        %2697 = vmatprep.subr.mxu0 0.0
        %v2698 = vand.u32 %v1773, 4294901760
        %v2699 = vsub.f32 %v1773, %v2698
        %v2700 = vand.u32 %v2699, 4294901760
        %2701 = vmatpush1.msra.mxu0 %v2700
        %2702 = vmatprep.subr.mxu0 0.0
        %v2703 = vand.u32 %v1774, 4294901760
        %v2704 = vsub.f32 %v1774, %v2703
        %v2705 = vand.u32 %v2704, 4294901760
        %2706 = vmatpush1.msra.mxu0 %v2705
        %2707 = vmatprep.subr.mxu0 0.0
        %v2708 = vand.u32 %v1775, 4294901760
        %v2709 = vsub.f32 %v1775, %v2708
        %v2710 = vand.u32 %v2709, 4294901760
        %2711 = vmatpush1.msra.mxu0 %v2710
        %2712 = vmatprep.subr.mxu0 0.0
        %v2713 = vand.u32 %v1776, 4294901760
        %v2714 = vsub.f32 %v1776, %v2713
        %v2715 = vand.u32 %v2714, 4294901760
        %2716 = vmatpush1.msra.mxu0 %v2715
        %2717 = vmatprep.subr.mxu0 0.0
        %v2718 = vand.u32 %v1777, 4294901760
        %v2719 = vsub.f32 %v1777, %v2718
        %v2720 = vand.u32 %v2719, 4294901760
        %2721 = vmatpush1.msra.mxu0 %v2720
        %2722 = vmatprep.subr.mxu0 0.0
        %v2723 = vand.u32 %v1778, 4294901760
        %v2724 = vsub.f32 %v1778, %v2723
        %v2725 = vand.u32 %v2724, 4294901760
        %2726 = vmatpush1.msra.mxu0 %v2725
        %2727 = vmatprep.subr.mxu0 0.0
        %v2728 = vand.u32 %v1779, 4294901760
        %v2729 = vsub.f32 %v1779, %v2728
        %v2730 = vand.u32 %v2729, 4294901760
        %2731 = vmatpush1.msra.mxu0 %v2730
        %2732 = vmatprep.subr.mxu0 0.0
        %v2733 = vand.u32 %v1780, 4294901760
        %v2734 = vsub.f32 %v1780, %v2733
        %v2735 = vand.u32 %v2734, 4294901760
        %2736 = vmatpush1.msra.mxu0 %v2735
        %2737 = vmatprep.subr.mxu0 0.0
        %v2738 = vand.u32 %v1781, 4294901760
        %v2739 = vsub.f32 %v1781, %v2738
        %v2740 = vand.u32 %v2739, 4294901760
        %2741 = vmatpush1.msra.mxu0 %v2740
        %2742 = vmatprep.subr.mxu0 0.0
        %v2743 = vand.u32 %v1782, 4294901760
        %v2744 = vsub.f32 %v1782, %v2743
        %v2745 = vand.u32 %v2744, 4294901760
        %2746 = vmatpush1.msra.mxu0 %v2745
        %2747 = vmatprep.subr.mxu0 0.0
        %v2748 = vand.u32 %v1783, 4294901760
        %v2749 = vsub.f32 %v1783, %v2748
        %v2750 = vand.u32 %v2749, 4294901760
        %2751 = vmatpush1.msra.mxu0 %v2750
        %2752 = vmatprep.subr.mxu0 0.0
        %v2753 = vand.u32 %v1784, 4294901760
        %v2754 = vsub.f32 %v1784, %v2753
        %v2755 = vand.u32 %v2754, 4294901760
        %2756 = vmatpush1.msra.mxu0 %v2755
        %2757 = vmatprep.subr.mxu0 0.0
        %v2758 = vand.u32 %v1785, 4294901760
        %v2759 = vsub.f32 %v1785, %v2758
        %v2760 = vand.u32 %v2759, 4294901760
        %2761 = vmatpush1.msra.mxu0 %v2760
        %2762 = vmatprep.subr.mxu0 0.0
        %v2763 = vand.u32 %v1786, 4294901760
        %v2764 = vsub.f32 %v1786, %v2763
        %v2765 = vand.u32 %v2764, 4294901760
        %2766 = vmatpush1.msra.mxu0 %v2765
        %2767 = vmatprep.subr.mxu0 0.0
        %v2768 = vand.u32 %v1787, 4294901760
        %v2769 = vsub.f32 %v1787, %v2768
        %v2770 = vand.u32 %v2769, 4294901760
        %2771 = vmatpush1.msra.mxu0 %v2770
        %2772 = vmatprep.subr.mxu0 0.0
        %v2773 = vand.u32 %v1788, 4294901760
        %v2774 = vsub.f32 %v1788, %v2773
        %v2775 = vand.u32 %v2774, 4294901760
        %2776 = vmatpush1.msra.mxu0 %v2775
        %2777 = vmatprep.subr.mxu0 0.0
        %2778 = vmatpush1.msra.mxu0 0.0
        %2779 = vmatprep.subr.mxu0 0.0
        %2780 = vmatpush1.msra.mxu0 0.0
        %2781 = vmatprep.subr.mxu0 0.0
        %2782 = vmatpush1.msra.mxu0 0.0
        %2783 = vmatprep.subr.mxu0 0.0
        %2784 = vmatpush1.msra.mxu0 0.0
        %2785 = vmatprep.subr.mxu0 0.0
        %2786 = vmatpush1.msra.mxu0 0.0
        %2787 = vmatprep.subr.mxu0 0.0
        %2788 = vmatpush1.msra.mxu0 0.0
        %2789 = vmatprep.subr.mxu0 0.0
        %2790 = vmatpush1.msra.mxu0 0.0
        %2791 = vmatprep.subr.mxu0 0.0
        %2792 = vmatpush1.msra.mxu0 0.0
        %2793 = vmatprep.subr.mxu0 0.0
        %2794 = vmatpush1.msra.mxu0 0.0
        %2795 = vmatprep.subr.mxu0 0.0
        %2796 = vmatpush1.msra.mxu0 0.0
        %2797 = vmatprep.subr.mxu0 0.0
        %2798 = vmatpush1.msra.mxu0 0.0
        %2799 = vmatprep.subr.mxu0 0.0
        %2800 = vmatpush1.msra.mxu0 0.0
        %2801 = vmatprep.subr.mxu0 0.0
        %2802 = vmatpush1.msra.mxu0 0.0
        %2803 = vmatprep.subr.mxu0 0.0
        %2804 = vmatpush1.msra.mxu0 0.0
        %2805 = vmatprep.subr.mxu0 0.0
        %2806 = vmatpush1.msra.mxu0 0.0
        %2807 = vmatprep.subr.mxu0 0.0
        %2808 = vmatpush1.msra.mxu0 0.0
        %2809 = vmatprep.mubr.f32.mxu0 0.0
        %v2810 = vand.u32 %v1756, 4294901760
        %2811 = vmatmul.mubr.f32.gmra.mrb[0].mxu0 %v2810
        %v2812 = vpop.f32.mrb[0].mxu0
        %v2813 = vadd.f32 %v2574, %v2812
        %v2814 = vpop.f32.mrb[0].mxu0
        %2815 = vmatprep.mubr.f32.mxu0 0.0
        %v2816 = vand.u32 %v1757, 4294901760
        %2817 = vmatmul.mubr.f32.gmra.mrb[0].mxu0 %v2816
        %v2818 = vpop.f32.mrb[0].mxu0
        %v2819 = vadd.f32 %v2582, %v2818
        %v2820 = vpop.f32.mrb[0].mxu0
        %2821 = vmatprep.mubr.f32.mxu0 0.0
        %v2822 = vand.u32 %v1758, 4294901760
        %2823 = vmatmul.mubr.f32.gmra.mrb[0].mxu0 %v2822
        %v2824 = vpop.f32.mrb[0].mxu0
        %v2825 = vadd.f32 %v2590, %v2824
        %v2826 = vpop.f32.mrb[0].mxu0
        %2827 = vmatprep.mubr.f32.mxu0 0.0
        %v2828 = vand.u32 %v1759, 4294901760
        %2829 = vmatmul.mubr.f32.gmra.mrb[0].mxu0 %v2828
        %v2830 = vpop.f32.mrb[0].mxu0
        %v2831 = vadd.f32 %v2598, %v2830
        %v2832 = vpop.f32.mrb[0].mxu0
        %2833 = vmatprep.mubr.f32.mxu0 0.0
        %v2834 = vand.u32 %v1760, 4294901760
        %2835 = vmatmul.mubr.f32.gmra.mrb[0].mxu0 %v2834
        %v2836 = vpop.f32.mrb[0].mxu0
        %v2837 = vadd.f32 %v2606, %v2836
        %v2838 = vpop.f32.mrb[0].mxu0
        %2839 = vmatprep.mubr.f32.mxu0 0.0
        %v2840 = vand.u32 %v1761, 4294901760
        %2841 = vmatmul.mubr.f32.gmra.mrb[0].mxu0 %v2840
        %v2842 = vpop.f32.mrb[0].mxu0
        %v2843 = vadd.f32 %v2614, %v2842
        %v2844 = vpop.f32.mrb[0].mxu0
        %2845 = vmatprep.mubr.f32.mxu0 0.0
        %v2846 = vand.u32 %v1762, 4294901760
        %2847 = vmatmul.mubr.f32.gmra.mrb[0].mxu0 %v2846
        %v2848 = vpop.f32.mrb[0].mxu0
        %v2849 = vadd.f32 %v2622, %v2848
        %v2850 = vpop.f32.mrb[0].mxu0
        %2851 = vmatprep.mubr.f32.mxu0 0.0
        %v2852 = vand.u32 %v1763, 4294901760
        %2853 = vmatmul.mubr.f32.gmra.mrb[0].mxu0 %v2852
        %v2854 = vpop.f32.mrb[0].mxu0
        %v2855 = vadd.f32 %v2630, %v2854
        %v2856 = vpop.f32.mrb[0].mxu0
        %2857 = vmatprep.mubr.f32.mxu0 0.0
        %v2858 = vand.u32 %v1764, 4294901760
        %2859 = vmatmul.mubr.f32.gmra.mrb[0].mxu0 %v2858
        %v2860 = vpop.f32.mrb[0].mxu0
        %v2861 = vadd.f32 %v2638, %v2860
        %v2862 = vpop.f32.mrb[0].mxu0
        %2863 = vmatprep.mubr.f32.mxu0 0.0
        %v2864 = vand.u32 %v1765, 4294901760
        %2865 = vmatmul.mubr.f32.gmra.mrb[0].mxu0 %v2864
        %v2866 = vpop.f32.mrb[0].mxu0
        %v2867 = vadd.f32 %v2646, %v2866
        %v2868 = vpop.f32.mrb[0].mxu0
        %2869 = vmatprep.mubr.f32.mxu0 0.0
        %v2870 = vand.u32 %v1766, 4294901760
        %2871 = vmatmul.mubr.f32.gmra.mrb[0].mxu0 %v2870
        %v2872 = vpop.f32.mrb[0].mxu0
        %v2873 = vadd.f32 %v2654, %v2872
        %v2874 = vpop.f32.mrb[0].mxu0
        %2875 = vmatprep.mubr.f32.mxu0 0.0
        %v2876 = vand.u32 %v1767, 4294901760
        %2877 = vmatmul.mubr.f32.gmra.mrb[0].mxu0 %v2876
        %v2878 = vpop.f32.mrb[0].mxu0
        %v2879 = vadd.f32 %v2662, %v2878
        %v2880 = vpop.f32.mrb[0].mxu0
        %2881 = vmatprep.mubr.f32.mxu0 0.0
        %v2882 = vand.u32 %v1768, 4294901760
        %2883 = vmatmul.mubr.f32.gmra.mrb[0].mxu0 %v2882
        %v2884 = vpop.f32.mrb[0].mxu0
        %v2885 = vadd.f32 %v2670, %v2884
        %v2886 = vpop.f32.mrb[0].mxu0
        %2887 = vmatprep.mubr.f32.mxu0 0.0
        %v2888 = vand.u32 %v1769, 4294901760
        %2889 = vmatmul.mubr.f32.gmra.mrb[0].mxu0 %v2888
        %v2890 = vpop.f32.mrb[0].mxu0
        %v2891 = vadd.f32 %v2678, %v2890
        %v2892 = vpop.f32.mrb[0].mxu0
        %2893 = vmatprep.mubr.f32.mxu0 0.0
        %v2894 = vand.u32 %v1770, 4294901760
        %2895 = vmatmul.mubr.f32.gmra.mrb[0].mxu0 %v2894
        %v2896 = vpop.f32.mrb[0].mxu0
        %v2897 = vadd.f32 %v2686, %v2896
        %v2898 = vpop.f32.mrb[0].mxu0
        %2899 = vmatprep.mubr.f32.mxu0 0.0
        %v2900 = vand.u32 %v1771, 4294901760
        %2901 = vmatmul.mubr.f32.gmra.mrb[0].mxu0 %v2900
        %v2902 = vpop.f32.mrb[0].mxu0
        %v2903 = vadd.f32 %v2694, %v2902
        %v2904 = vpop.f32.mrb[0].mxu0
        %2905 = vdwg.mxu0
        %2906 = vmatprep.subr.mxu0 0.0
        %v2907 = vand.u32 %v1773, 4294901760
        %2908 = vmatpush1.msra.mxu0 %v2907
        %2909 = vmatprep.subr.mxu0 0.0
        %v2910 = vand.u32 %v1774, 4294901760
        %2911 = vmatpush1.msra.mxu0 %v2910
        %2912 = vmatprep.subr.mxu0 0.0
        %v2913 = vand.u32 %v1775, 4294901760
        %2914 = vmatpush1.msra.mxu0 %v2913
        %2915 = vmatprep.subr.mxu0 0.0
        %v2916 = vand.u32 %v1776, 4294901760
        %2917 = vmatpush1.msra.mxu0 %v2916
        %2918 = vmatprep.subr.mxu0 0.0
        %v2919 = vand.u32 %v1777, 4294901760
        %2920 = vmatpush1.msra.mxu0 %v2919
        %2921 = vmatprep.subr.mxu0 0.0
        %v2922 = vand.u32 %v1778, 4294901760
        %2923 = vmatpush1.msra.mxu0 %v2922
        %2924 = vmatprep.subr.mxu0 0.0
        %v2925 = vand.u32 %v1779, 4294901760
        %2926 = vmatpush1.msra.mxu0 %v2925
        %2927 = vmatprep.subr.mxu0 0.0
        %v2928 = vand.u32 %v1780, 4294901760
        %2929 = vmatpush1.msra.mxu0 %v2928
        %2930 = vmatprep.subr.mxu0 0.0
        %v2931 = vand.u32 %v1781, 4294901760
        %2932 = vmatpush1.msra.mxu0 %v2931
        %2933 = vmatprep.subr.mxu0 0.0
        %v2934 = vand.u32 %v1782, 4294901760
        %2935 = vmatpush1.msra.mxu0 %v2934
        %2936 = vmatprep.subr.mxu0 0.0
        %v2937 = vand.u32 %v1783, 4294901760
        %2938 = vmatpush1.msra.mxu0 %v2937
        %2939 = vmatprep.subr.mxu0 0.0
        %v2940 = vand.u32 %v1784, 4294901760
        %2941 = vmatpush1.msra.mxu0 %v2940
        %2942 = vmatprep.subr.mxu0 0.0
        %v2943 = vand.u32 %v1785, 4294901760
        %2944 = vmatpush1.msra.mxu0 %v2943
        %2945 = vmatprep.subr.mxu0 0.0
        %v2946 = vand.u32 %v1786, 4294901760
        %2947 = vmatpush1.msra.mxu0 %v2946
        %2948 = vmatprep.subr.mxu0 0.0
        %v2949 = vand.u32 %v1787, 4294901760
        %2950 = vmatpush1.msra.mxu0 %v2949
        %2951 = vmatprep.subr.mxu0 0.0
        %v2952 = vand.u32 %v1788, 4294901760
        %2953 = vmatpush1.msra.mxu0 %v2952
        %2954 = vmatprep.subr.mxu0 0.0
        %2955 = vmatpush1.msra.mxu0 0.0
        %2956 = vmatprep.subr.mxu0 0.0
        %2957 = vmatpush1.msra.mxu0 0.0
        %2958 = vmatprep.subr.mxu0 0.0
        %2959 = vmatpush1.msra.mxu0 0.0
        %2960 = vmatprep.subr.mxu0 0.0
        %2961 = vmatpush1.msra.mxu0 0.0
        %2962 = vmatprep.subr.mxu0 0.0
        %2963 = vmatpush1.msra.mxu0 0.0
        %2964 = vmatprep.subr.mxu0 0.0
        %2965 = vmatpush1.msra.mxu0 0.0
        %2966 = vmatprep.subr.mxu0 0.0
        %2967 = vmatpush1.msra.mxu0 0.0
        %2968 = vmatprep.subr.mxu0 0.0
        %2969 = vmatpush1.msra.mxu0 0.0
        %2970 = vmatprep.subr.mxu0 0.0
        %2971 = vmatpush1.msra.mxu0 0.0
        %2972 = vmatprep.subr.mxu0 0.0
        %2973 = vmatpush1.msra.mxu0 0.0
        %2974 = vmatprep.subr.mxu0 0.0
        %2975 = vmatpush1.msra.mxu0 0.0
        %2976 = vmatprep.subr.mxu0 0.0
        %2977 = vmatpush1.msra.mxu0 0.0
        %2978 = vmatprep.subr.mxu0 0.0
        %2979 = vmatpush1.msra.mxu0 0.0
        %2980 = vmatprep.subr.mxu0 0.0
        %2981 = vmatpush1.msra.mxu0 0.0
        %2982 = vmatprep.subr.mxu0 0.0
        %2983 = vmatpush1.msra.mxu0 0.0
        %2984 = vmatprep.subr.mxu0 0.0
        %2985 = vmatpush1.msra.mxu0 0.0
        %2986 = vmatprep.mubr.f32.mxu0 0.0
        %v2987 = vand.u32 %v1756, 4294901760
        %2988 = vmatmul.mubr.f32.gmra.mrb[0].mxu0 %v2987
        %v2989 = vpop.f32.mrb[0].mxu0
        %v2990 = vadd.f32 %v2813, %v2989
        %v2991 = vpop.f32.mrb[0].mxu0
        %2992 = vmatprep.mubr.f32.mxu0 0.0
        %v2993 = vand.u32 %v1757, 4294901760
        %2994 = vmatmul.mubr.f32.gmra.mrb[0].mxu0 %v2993
        %v2995 = vpop.f32.mrb[0].mxu0
        %v2996 = vadd.f32 %v2819, %v2995
        %v2997 = vpop.f32.mrb[0].mxu0
        %2998 = vmatprep.mubr.f32.mxu0 0.0
        %v2999 = vand.u32 %v1758, 4294901760
        %3000 = vmatmul.mubr.f32.gmra.mrb[0].mxu0 %v2999
        %v3001 = vpop.f32.mrb[0].mxu0
        %v3002 = vadd.f32 %v2825, %v3001
        %v3003 = vpop.f32.mrb[0].mxu0
        %3004 = vmatprep.mubr.f32.mxu0 0.0
        %v3005 = vand.u32 %v1759, 4294901760
        %3006 = vmatmul.mubr.f32.gmra.mrb[0].mxu0 %v3005
        %v3007 = vpop.f32.mrb[0].mxu0
        %v3008 = vadd.f32 %v2831, %v3007
        %v3009 = vpop.f32.mrb[0].mxu0
        %3010 = vmatprep.mubr.f32.mxu0 0.0
        %v3011 = vand.u32 %v1760, 4294901760
        %3012 = vmatmul.mubr.f32.gmra.mrb[0].mxu0 %v3011
        %v3013 = vpop.f32.mrb[0].mxu0
        %v3014 = vadd.f32 %v2837, %v3013
        %v3015 = vpop.f32.mrb[0].mxu0
        %3016 = vmatprep.mubr.f32.mxu0 0.0
        %v3017 = vand.u32 %v1761, 4294901760
        %3018 = vmatmul.mubr.f32.gmra.mrb[0].mxu0 %v3017
        %v3019 = vpop.f32.mrb[0].mxu0
        %v3020 = vadd.f32 %v2843, %v3019
        %v3021 = vpop.f32.mrb[0].mxu0
        %3022 = vmatprep.mubr.f32.mxu0 0.0
        %v3023 = vand.u32 %v1762, 4294901760
        %3024 = vmatmul.mubr.f32.gmra.mrb[0].mxu0 %v3023
        %v3025 = vpop.f32.mrb[0].mxu0
        %v3026 = vadd.f32 %v2849, %v3025
        %v3027 = vpop.f32.mrb[0].mxu0
        %3028 = vmatprep.mubr.f32.mxu0 0.0
        %v3029 = vand.u32 %v1763, 4294901760
        %3030 = vmatmul.mubr.f32.gmra.mrb[0].mxu0 %v3029
        %v3031 = vpop.f32.mrb[0].mxu0
        %v3032 = vadd.f32 %v2855, %v3031
        %v3033 = vpop.f32.mrb[0].mxu0
        %3034 = vmatprep.mubr.f32.mxu0 0.0
        %v3035 = vand.u32 %v1764, 4294901760
        %3036 = vmatmul.mubr.f32.gmra.mrb[0].mxu0 %v3035
        %v3037 = vpop.f32.mrb[0].mxu0
        %v3038 = vadd.f32 %v2861, %v3037
        %v3039 = vpop.f32.mrb[0].mxu0
        %3040 = vmatprep.mubr.f32.mxu0 0.0
        %v3041 = vand.u32 %v1765, 4294901760
        %3042 = vmatmul.mubr.f32.gmra.mrb[0].mxu0 %v3041
        %v3043 = vpop.f32.mrb[0].mxu0
        %v3044 = vadd.f32 %v2867, %v3043
        %v3045 = vpop.f32.mrb[0].mxu0
        %3046 = vmatprep.mubr.f32.mxu0 0.0
        %v3047 = vand.u32 %v1766, 4294901760
        %3048 = vmatmul.mubr.f32.gmra.mrb[0].mxu0 %v3047
        %v3049 = vpop.f32.mrb[0].mxu0
        %v3050 = vadd.f32 %v2873, %v3049
        %v3051 = vpop.f32.mrb[0].mxu0
        %3052 = vmatprep.mubr.f32.mxu0 0.0
        %v3053 = vand.u32 %v1767, 4294901760
        %3054 = vmatmul.mubr.f32.gmra.mrb[0].mxu0 %v3053
        %v3055 = vpop.f32.mrb[0].mxu0
        %v3056 = vadd.f32 %v2879, %v3055
        %v3057 = vpop.f32.mrb[0].mxu0
        %3058 = vmatprep.mubr.f32.mxu0 0.0
        %v3059 = vand.u32 %v1768, 4294901760
        %3060 = vmatmul.mubr.f32.gmra.mrb[0].mxu0 %v3059
        %v3061 = vpop.f32.mrb[0].mxu0
        %v3062 = vadd.f32 %v2885, %v3061
        %v3063 = vpop.f32.mrb[0].mxu0
        %3064 = vmatprep.mubr.f32.mxu0 0.0
        %v3065 = vand.u32 %v1769, 4294901760
        %3066 = vmatmul.mubr.f32.gmra.mrb[0].mxu0 %v3065
        %v3067 = vpop.f32.mrb[0].mxu0
        %v3068 = vadd.f32 %v2891, %v3067
        %v3069 = vpop.f32.mrb[0].mxu0
        %3070 = vmatprep.mubr.f32.mxu0 0.0
        %v3071 = vand.u32 %v1770, 4294901760
        %3072 = vmatmul.mubr.f32.gmra.mrb[0].mxu0 %v3071
        %v3073 = vpop.f32.mrb[0].mxu0
        %v3074 = vadd.f32 %v2897, %v3073
        %v3075 = vpop.f32.mrb[0].mxu0
        %3076 = vmatprep.mubr.f32.mxu0 0.0
        %v3077 = vand.u32 %v1771, 4294901760
        %3078 = vmatmul.mubr.f32.gmra.mrb[0].mxu0 %v3077
        %v3079 = vpop.f32.mrb[0].mxu0
        %v3080 = vadd.f32 %v2903, %v3079
        %v3081 = vpop.f32.mrb[0].mxu0
        %3082 = vdwg.mxu0
        %v3083 = vtanh.pop %v2990
        %v3084 = vtanh.pop %v2996
        %v3085 = vtanh.pop %v3002
        %v3086 = vtanh.pop %v3008
        %v3087 = vtanh.pop %v3014
        %v3088 = vtanh.pop %v3020
        %v3089 = vtanh.pop %v3026
        %v3090 = vtanh.pop %v3032
        %v3091 = vtanh.pop %v3038
        %v3092 = vtanh.pop %v3044
        %v3093 = vtanh.pop %v3050
        %v3094 = vtanh.pop %v3056
        %v3095 = vtanh.pop %v3062
        %v3096 = vtanh.pop %v3068
        %v3097 = vtanh.pop %v3074
        %v3098 = vtanh.pop %v3080
        %s3099 = scalar_lea.vmem [#allocation2], 384
        %v3100 = vld [vmem:[%s3099] sm:$0xff]
        %v3101 = vld [vmem:[%s3099 + $0x8] sm:$0xff]
        %v3102 = vld [vmem:[%s3099 + $0x10] sm:$0xff]
        %v3103 = vld [vmem:[%s3099 + $0x18] sm:$0xff]
        %v3104 = vld [vmem:[%s3099 + $0x20] sm:$0xff]
        %v3105 = vld [vmem:[%s3099 + $0x28] sm:$0xff]
        %v3106 = vld [vmem:[%s3099 + $0x30] sm:$0xff]
        %v3107 = vld [vmem:[%s3099 + $0x38] sm:$0xff]
        %v3108 = vld [vmem:[%s3099 + $0x40] sm:$0xff]
        %v3109 = vld [vmem:[%s3099 + $0x48] sm:$0xff]
        %v3110 = vld [vmem:[%s3099 + $0x50] sm:$0xff]
        %v3111 = vld [vmem:[%s3099 + $0x58] sm:$0xff]
        %v3112 = vld [vmem:[%s3099 + $0x60] sm:$0xff]
        %v3113 = vld [vmem:[%s3099 + $0x68] sm:$0xff]
        %v3114 = vld [vmem:[%s3099 + $0x70] sm:$0xff]
        %v3115 = vld [vmem:[%s3099 + $0x78] sm:$0xff]
        %s3116 = scalar_lea.vmem %s2, 3
        %v3117 = vld [vmem:[%s3116] sm:$0x1]
        %v3119 = vlaneseq
        %v3120 = vshrl.u32 %v3119, 7
        %v3121 = vsub.s32 0, %v3120
        %v3122 = vrot.slane %v3117, %v3121
        %3124 = vmatprep.subr.mxu0 0.0
        %v3125 = vand.u32 %v3100, 4294901760
        %3126 = vmatpush1.msra.mxu0 %v3125
        %3127 = vmatprep.subr.mxu0 0.0
        %v3128 = vand.u32 %v3101, 4294901760
        %3129 = vmatpush1.msra.mxu0 %v3128
        %3130 = vmatprep.subr.mxu0 0.0
        %v3131 = vand.u32 %v3102, 4294901760
        %3132 = vmatpush1.msra.mxu0 %v3131
        %3133 = vmatprep.subr.mxu0 0.0
        %v3134 = vand.u32 %v3103, 4294901760
        %3135 = vmatpush1.msra.mxu0 %v3134
        %3136 = vmatprep.subr.mxu0 0.0
        %v3137 = vand.u32 %v3104, 4294901760
        %3138 = vmatpush1.msra.mxu0 %v3137
        %3139 = vmatprep.subr.mxu0 0.0
        %v3140 = vand.u32 %v3105, 4294901760
        %3141 = vmatpush1.msra.mxu0 %v3140
        %3142 = vmatprep.subr.mxu0 0.0
        %v3143 = vand.u32 %v3106, 4294901760
        %3144 = vmatpush1.msra.mxu0 %v3143
        %3145 = vmatprep.subr.mxu0 0.0
        %v3146 = vand.u32 %v3107, 4294901760
        %3147 = vmatpush1.msra.mxu0 %v3146
        %3148 = vmatprep.subr.mxu0 0.0
        %v3149 = vand.u32 %v3108, 4294901760
        %3150 = vmatpush1.msra.mxu0 %v3149
        %3151 = vmatprep.subr.mxu0 0.0
        %v3152 = vand.u32 %v3109, 4294901760
        %3153 = vmatpush1.msra.mxu0 %v3152
        %3154 = vmatprep.subr.mxu0 0.0
        %v3155 = vand.u32 %v3110, 4294901760
        %3156 = vmatpush1.msra.mxu0 %v3155
        %3157 = vmatprep.subr.mxu0 0.0
        %v3158 = vand.u32 %v3111, 4294901760
        %3159 = vmatpush1.msra.mxu0 %v3158
        %3160 = vmatprep.subr.mxu0 0.0
        %v3161 = vand.u32 %v3112, 4294901760
        %3162 = vmatpush1.msra.mxu0 %v3161
        %3163 = vmatprep.subr.mxu0 0.0
        %v3164 = vand.u32 %v3113, 4294901760
        %3165 = vmatpush1.msra.mxu0 %v3164
        %3166 = vmatprep.subr.mxu0 0.0
        %v3167 = vand.u32 %v3114, 4294901760
        %3168 = vmatpush1.msra.mxu0 %v3167
        %3169 = vmatprep.subr.mxu0 0.0
        %v3170 = vand.u32 %v3115, 4294901760
        %3171 = vmatpush1.msra.mxu0 %v3170
        %3172 = vmatprep.subr.mxu0 0.0
        %3173 = vmatpush1.msra.mxu0 0.0
        %3174 = vmatprep.subr.mxu0 0.0
        %3175 = vmatpush1.msra.mxu0 0.0
        %3176 = vmatprep.subr.mxu0 0.0
        %3177 = vmatpush1.msra.mxu0 0.0
        %3178 = vmatprep.subr.mxu0 0.0
        %3179 = vmatpush1.msra.mxu0 0.0
        %3180 = vmatprep.subr.mxu0 0.0
        %3181 = vmatpush1.msra.mxu0 0.0
        %3182 = vmatprep.subr.mxu0 0.0
        %3183 = vmatpush1.msra.mxu0 0.0
        %3184 = vmatprep.subr.mxu0 0.0
        %3185 = vmatpush1.msra.mxu0 0.0
        %3186 = vmatprep.subr.mxu0 0.0
        %3187 = vmatpush1.msra.mxu0 0.0
        %3188 = vmatprep.subr.mxu0 0.0
        %3189 = vmatpush1.msra.mxu0 0.0
        %3190 = vmatprep.subr.mxu0 0.0
        %3191 = vmatpush1.msra.mxu0 0.0
        %3192 = vmatprep.subr.mxu0 0.0
        %3193 = vmatpush1.msra.mxu0 0.0
        %3194 = vmatprep.subr.mxu0 0.0
        %3195 = vmatpush1.msra.mxu0 0.0
        %3196 = vmatprep.subr.mxu0 0.0
        %3197 = vmatpush1.msra.mxu0 0.0
        %3198 = vmatprep.subr.mxu0 0.0
        %3199 = vmatpush1.msra.mxu0 0.0
        %3200 = vmatprep.subr.mxu0 0.0
        %3201 = vmatpush1.msra.mxu0 0.0
        %3202 = vmatprep.subr.mxu0 0.0
        %3203 = vmatpush1.msra.mxu0 0.0
        %3204 = vmatprep.mubr.f32.mxu0 0.0
        %v3205 = vand.u32 %v3083, 4294901760
        %v3206 = vsub.f32 %v3083, %v3205
        %v3207 = vand.u32 %v3206, 4294901760
        %v3208 = vsub.f32 %v3206, %v3207
        %v3209 = vand.u32 %v3208, 4294901760
        %3210 = vmatmul.mubr.f32.gmra.mrb[0].mxu0 %v3209
        %v3211 = vpop.f32.mrb[0].mxu0
        %v3212 = vadd.f32 %v3122, %v3211
        %v3213 = vpop.f32.mrb[0].mxu0
        %3214 = vmatprep.mubr.f32.mxu0 0.0
        %v3215 = vand.u32 %v3084, 4294901760
        %v3216 = vsub.f32 %v3084, %v3215
        %v3217 = vand.u32 %v3216, 4294901760
        %v3218 = vsub.f32 %v3216, %v3217
        %v3219 = vand.u32 %v3218, 4294901760
        %3220 = vmatmul.mubr.f32.gmra.mrb[0].mxu0 %v3219
        %v3221 = vpop.f32.mrb[0].mxu0
        %v3222 = vadd.f32 %v3122, %v3221
        %v3223 = vpop.f32.mrb[0].mxu0
        %3224 = vmatprep.mubr.f32.mxu0 0.0
        %v3225 = vand.u32 %v3085, 4294901760
        %v3226 = vsub.f32 %v3085, %v3225
        %v3227 = vand.u32 %v3226, 4294901760
        %v3228 = vsub.f32 %v3226, %v3227
        %v3229 = vand.u32 %v3228, 4294901760
        %3230 = vmatmul.mubr.f32.gmra.mrb[0].mxu0 %v3229
        %v3231 = vpop.f32.mrb[0].mxu0
        %v3232 = vadd.f32 %v3122, %v3231
        %v3233 = vpop.f32.mrb[0].mxu0
        %3234 = vmatprep.mubr.f32.mxu0 0.0
        %v3235 = vand.u32 %v3086, 4294901760
        %v3236 = vsub.f32 %v3086, %v3235
        %v3237 = vand.u32 %v3236, 4294901760
        %v3238 = vsub.f32 %v3236, %v3237
        %v3239 = vand.u32 %v3238, 4294901760
        %3240 = vmatmul.mubr.f32.gmra.mrb[0].mxu0 %v3239
        %v3241 = vpop.f32.mrb[0].mxu0
        %v3242 = vadd.f32 %v3122, %v3241
        %v3243 = vpop.f32.mrb[0].mxu0
        %3244 = vmatprep.mubr.f32.mxu0 0.0
        %v3245 = vand.u32 %v3087, 4294901760
        %v3246 = vsub.f32 %v3087, %v3245
        %v3247 = vand.u32 %v3246, 4294901760
        %v3248 = vsub.f32 %v3246, %v3247
        %v3249 = vand.u32 %v3248, 4294901760
        %3250 = vmatmul.mubr.f32.gmra.mrb[0].mxu0 %v3249
        %v3251 = vpop.f32.mrb[0].mxu0
        %v3252 = vadd.f32 %v3122, %v3251
        %v3253 = vpop.f32.mrb[0].mxu0
        %3254 = vmatprep.mubr.f32.mxu0 0.0
        %v3255 = vand.u32 %v3088, 4294901760
        %v3256 = vsub.f32 %v3088, %v3255
        %v3257 = vand.u32 %v3256, 4294901760
        %v3258 = vsub.f32 %v3256, %v3257
        %v3259 = vand.u32 %v3258, 4294901760
        %3260 = vmatmul.mubr.f32.gmra.mrb[0].mxu0 %v3259
        %v3261 = vpop.f32.mrb[0].mxu0
        %v3262 = vadd.f32 %v3122, %v3261
        %v3263 = vpop.f32.mrb[0].mxu0
        %3264 = vmatprep.mubr.f32.mxu0 0.0
        %v3265 = vand.u32 %v3089, 4294901760
        %v3266 = vsub.f32 %v3089, %v3265
        %v3267 = vand.u32 %v3266, 4294901760
        %v3268 = vsub.f32 %v3266, %v3267
        %v3269 = vand.u32 %v3268, 4294901760
        %3270 = vmatmul.mubr.f32.gmra.mrb[0].mxu0 %v3269
        %v3271 = vpop.f32.mrb[0].mxu0
        %v3272 = vadd.f32 %v3122, %v3271
        %v3273 = vpop.f32.mrb[0].mxu0
        %3274 = vmatprep.mubr.f32.mxu0 0.0
        %v3275 = vand.u32 %v3090, 4294901760
        %v3276 = vsub.f32 %v3090, %v3275
        %v3277 = vand.u32 %v3276, 4294901760
        %v3278 = vsub.f32 %v3276, %v3277
        %v3279 = vand.u32 %v3278, 4294901760
        %3280 = vmatmul.mubr.f32.gmra.mrb[0].mxu0 %v3279
        %v3281 = vpop.f32.mrb[0].mxu0
        %v3282 = vadd.f32 %v3122, %v3281
        %v3283 = vpop.f32.mrb[0].mxu0
        %3284 = vmatprep.mubr.f32.mxu0 0.0
        %v3285 = vand.u32 %v3091, 4294901760
        %v3286 = vsub.f32 %v3091, %v3285
        %v3287 = vand.u32 %v3286, 4294901760
        %v3288 = vsub.f32 %v3286, %v3287
        %v3289 = vand.u32 %v3288, 4294901760
        %3290 = vmatmul.mubr.f32.gmra.mrb[0].mxu0 %v3289
        %v3291 = vpop.f32.mrb[0].mxu0
        %v3292 = vadd.f32 %v3122, %v3291
        %v3293 = vpop.f32.mrb[0].mxu0
        %3294 = vmatprep.mubr.f32.mxu0 0.0
        %v3295 = vand.u32 %v3092, 4294901760
        %v3296 = vsub.f32 %v3092, %v3295
        %v3297 = vand.u32 %v3296, 4294901760
        %v3298 = vsub.f32 %v3296, %v3297
        %v3299 = vand.u32 %v3298, 4294901760
        %3300 = vmatmul.mubr.f32.gmra.mrb[0].mxu0 %v3299
        %v3301 = vpop.f32.mrb[0].mxu0
        %v3302 = vadd.f32 %v3122, %v3301
        %v3303 = vpop.f32.mrb[0].mxu0
        %3304 = vmatprep.mubr.f32.mxu0 0.0
        %v3305 = vand.u32 %v3093, 4294901760
        %v3306 = vsub.f32 %v3093, %v3305
        %v3307 = vand.u32 %v3306, 4294901760
        %v3308 = vsub.f32 %v3306, %v3307
        %v3309 = vand.u32 %v3308, 4294901760
        %3310 = vmatmul.mubr.f32.gmra.mrb[0].mxu0 %v3309
        %v3311 = vpop.f32.mrb[0].mxu0
        %v3312 = vadd.f32 %v3122, %v3311
        %v3313 = vpop.f32.mrb[0].mxu0
        %3314 = vmatprep.mubr.f32.mxu0 0.0
        %v3315 = vand.u32 %v3094, 4294901760
        %v3316 = vsub.f32 %v3094, %v3315
        %v3317 = vand.u32 %v3316, 4294901760
        %v3318 = vsub.f32 %v3316, %v3317
        %v3319 = vand.u32 %v3318, 4294901760
        %3320 = vmatmul.mubr.f32.gmra.mrb[0].mxu0 %v3319
        %v3321 = vpop.f32.mrb[0].mxu0
        %v3322 = vadd.f32 %v3122, %v3321
        %v3323 = vpop.f32.mrb[0].mxu0
        %3324 = vmatprep.mubr.f32.mxu0 0.0
        %v3325 = vand.u32 %v3095, 4294901760
        %v3326 = vsub.f32 %v3095, %v3325
        %v3327 = vand.u32 %v3326, 4294901760
        %v3328 = vsub.f32 %v3326, %v3327
        %v3329 = vand.u32 %v3328, 4294901760
        %3330 = vmatmul.mubr.f32.gmra.mrb[0].mxu0 %v3329
        %v3331 = vpop.f32.mrb[0].mxu0
        %v3332 = vadd.f32 %v3122, %v3331
        %v3333 = vpop.f32.mrb[0].mxu0
        %3334 = vmatprep.mubr.f32.mxu0 0.0
        %v3335 = vand.u32 %v3096, 4294901760
        %v3336 = vsub.f32 %v3096, %v3335
        %v3337 = vand.u32 %v3336, 4294901760
        %v3338 = vsub.f32 %v3336, %v3337
        %v3339 = vand.u32 %v3338, 4294901760
        %3340 = vmatmul.mubr.f32.gmra.mrb[0].mxu0 %v3339
        %v3341 = vpop.f32.mrb[0].mxu0
        %v3342 = vadd.f32 %v3122, %v3341
        %v3343 = vpop.f32.mrb[0].mxu0
        %3344 = vmatprep.mubr.f32.mxu0 0.0
        %v3345 = vand.u32 %v3097, 4294901760
        %v3346 = vsub.f32 %v3097, %v3345
        %v3347 = vand.u32 %v3346, 4294901760
        %v3348 = vsub.f32 %v3346, %v3347
        %v3349 = vand.u32 %v3348, 4294901760
        %3350 = vmatmul.mubr.f32.gmra.mrb[0].mxu0 %v3349
        %v3351 = vpop.f32.mrb[0].mxu0
        %v3352 = vadd.f32 %v3122, %v3351
        %v3353 = vpop.f32.mrb[0].mxu0
        %3354 = vmatprep.mubr.f32.mxu0 0.0
        %v3355 = vand.u32 %v3098, 4294901760
        %v3356 = vsub.f32 %v3098, %v3355
        %v3357 = vand.u32 %v3356, 4294901760
        %v3358 = vsub.f32 %v3356, %v3357
        %v3359 = vand.u32 %v3358, 4294901760
        %3360 = vmatmul.mubr.f32.gmra.mrb[0].mxu0 %v3359
        %v3361 = vpop.f32.mrb[0].mxu0
        %v3362 = vadd.f32 %v3122, %v3361
        %v3363 = vpop.f32.mrb[0].mxu0
        %3364 = vdwg.mxu0
        %3365 = vmatprep.subr.mxu0 0.0
        %v3366 = vand.u32 %v3100, 4294901760
        %v3367 = vsub.f32 %v3100, %v3366
        %v3368 = vand.u32 %v3367, 4294901760
        %v3369 = vsub.f32 %v3367, %v3368
        %v3370 = vand.u32 %v3369, 4294901760
        %3371 = vmatpush1.msra.mxu0 %v3370
        %3372 = vmatprep.subr.mxu0 0.0
        %v3373 = vand.u32 %v3101, 4294901760
        %v3374 = vsub.f32 %v3101, %v3373
        %v3375 = vand.u32 %v3374, 4294901760
        %v3376 = vsub.f32 %v3374, %v3375
        %v3377 = vand.u32 %v3376, 4294901760
        %3378 = vmatpush1.msra.mxu0 %v3377
        %3379 = vmatprep.subr.mxu0 0.0
        %v3380 = vand.u32 %v3102, 4294901760
        %v3381 = vsub.f32 %v3102, %v3380
        %v3382 = vand.u32 %v3381, 4294901760
        %v3383 = vsub.f32 %v3381, %v3382
        %v3384 = vand.u32 %v3383, 4294901760
        %3385 = vmatpush1.msra.mxu0 %v3384
        %3386 = vmatprep.subr.mxu0 0.0
        %v3387 = vand.u32 %v3103, 4294901760
        %v3388 = vsub.f32 %v3103, %v3387
        %v3389 = vand.u32 %v3388, 4294901760
        %v3390 = vsub.f32 %v3388, %v3389
        %v3391 = vand.u32 %v3390, 4294901760
        %3392 = vmatpush1.msra.mxu0 %v3391
        %3393 = vmatprep.subr.mxu0 0.0
        %v3394 = vand.u32 %v3104, 4294901760
        %v3395 = vsub.f32 %v3104, %v3394
        %v3396 = vand.u32 %v3395, 4294901760
        %v3397 = vsub.f32 %v3395, %v3396
        %v3398 = vand.u32 %v3397, 4294901760
        %3399 = vmatpush1.msra.mxu0 %v3398
        %3400 = vmatprep.subr.mxu0 0.0
        %v3401 = vand.u32 %v3105, 4294901760
        %v3402 = vsub.f32 %v3105, %v3401
        %v3403 = vand.u32 %v3402, 4294901760
        %v3404 = vsub.f32 %v3402, %v3403
        %v3405 = vand.u32 %v3404, 4294901760
        %3406 = vmatpush1.msra.mxu0 %v3405
        %3407 = vmatprep.subr.mxu0 0.0
        %v3408 = vand.u32 %v3106, 4294901760
        %v3409 = vsub.f32 %v3106, %v3408
        %v3410 = vand.u32 %v3409, 4294901760
        %v3411 = vsub.f32 %v3409, %v3410
        %v3412 = vand.u32 %v3411, 4294901760
        %3413 = vmatpush1.msra.mxu0 %v3412
        %3414 = vmatprep.subr.mxu0 0.0
        %v3415 = vand.u32 %v3107, 4294901760
        %v3416 = vsub.f32 %v3107, %v3415
        %v3417 = vand.u32 %v3416, 4294901760
        %v3418 = vsub.f32 %v3416, %v3417
        %v3419 = vand.u32 %v3418, 4294901760
        %3420 = vmatpush1.msra.mxu0 %v3419
        %3421 = vmatprep.subr.mxu0 0.0
        %v3422 = vand.u32 %v3108, 4294901760
        %v3423 = vsub.f32 %v3108, %v3422
        %v3424 = vand.u32 %v3423, 4294901760
        %v3425 = vsub.f32 %v3423, %v3424
        %v3426 = vand.u32 %v3425, 4294901760
        %3427 = vmatpush1.msra.mxu0 %v3426
        %3428 = vmatprep.subr.mxu0 0.0
        %v3429 = vand.u32 %v3109, 4294901760
        %v3430 = vsub.f32 %v3109, %v3429
        %v3431 = vand.u32 %v3430, 4294901760
        %v3432 = vsub.f32 %v3430, %v3431
        %v3433 = vand.u32 %v3432, 4294901760
        %3434 = vmatpush1.msra.mxu0 %v3433
        %3435 = vmatprep.subr.mxu0 0.0
        %v3436 = vand.u32 %v3110, 4294901760
        %v3437 = vsub.f32 %v3110, %v3436
        %v3438 = vand.u32 %v3437, 4294901760
        %v3439 = vsub.f32 %v3437, %v3438
        %v3440 = vand.u32 %v3439, 4294901760
        %3441 = vmatpush1.msra.mxu0 %v3440
        %3442 = vmatprep.subr.mxu0 0.0
        %v3443 = vand.u32 %v3111, 4294901760
        %v3444 = vsub.f32 %v3111, %v3443
        %v3445 = vand.u32 %v3444, 4294901760
        %v3446 = vsub.f32 %v3444, %v3445
        %v3447 = vand.u32 %v3446, 4294901760
        %3448 = vmatpush1.msra.mxu0 %v3447
        %3449 = vmatprep.subr.mxu0 0.0
        %v3450 = vand.u32 %v3112, 4294901760
        %v3451 = vsub.f32 %v3112, %v3450
        %v3452 = vand.u32 %v3451, 4294901760
        %v3453 = vsub.f32 %v3451, %v3452
        %v3454 = vand.u32 %v3453, 4294901760
        %3455 = vmatpush1.msra.mxu0 %v3454
        %3456 = vmatprep.subr.mxu0 0.0
        %v3457 = vand.u32 %v3113, 4294901760
        %v3458 = vsub.f32 %v3113, %v3457
        %v3459 = vand.u32 %v3458, 4294901760
        %v3460 = vsub.f32 %v3458, %v3459
        %v3461 = vand.u32 %v3460, 4294901760
        %3462 = vmatpush1.msra.mxu0 %v3461
        %3463 = vmatprep.subr.mxu0 0.0
        %v3464 = vand.u32 %v3114, 4294901760
        %v3465 = vsub.f32 %v3114, %v3464
        %v3466 = vand.u32 %v3465, 4294901760
        %v3467 = vsub.f32 %v3465, %v3466
        %v3468 = vand.u32 %v3467, 4294901760
        %3469 = vmatpush1.msra.mxu0 %v3468
        %3470 = vmatprep.subr.mxu0 0.0
        %v3471 = vand.u32 %v3115, 4294901760
        %v3472 = vsub.f32 %v3115, %v3471
        %v3473 = vand.u32 %v3472, 4294901760
        %v3474 = vsub.f32 %v3472, %v3473
        %v3475 = vand.u32 %v3474, 4294901760
        %3476 = vmatpush1.msra.mxu0 %v3475
        %3477 = vmatprep.subr.mxu0 0.0
        %3478 = vmatpush1.msra.mxu0 0.0
        %3479 = vmatprep.subr.mxu0 0.0
        %3480 = vmatpush1.msra.mxu0 0.0
        %3481 = vmatprep.subr.mxu0 0.0
        %3482 = vmatpush1.msra.mxu0 0.0
        %3483 = vmatprep.subr.mxu0 0.0
        %3484 = vmatpush1.msra.mxu0 0.0
        %3485 = vmatprep.subr.mxu0 0.0
        %3486 = vmatpush1.msra.mxu0 0.0
        %3487 = vmatprep.subr.mxu0 0.0
        %3488 = vmatpush1.msra.mxu0 0.0
        %3489 = vmatprep.subr.mxu0 0.0
        %3490 = vmatpush1.msra.mxu0 0.0
        %3491 = vmatprep.subr.mxu0 0.0
        %3492 = vmatpush1.msra.mxu0 0.0
        %3493 = vmatprep.subr.mxu0 0.0
        %3494 = vmatpush1.msra.mxu0 0.0
        %3495 = vmatprep.subr.mxu0 0.0
        %3496 = vmatpush1.msra.mxu0 0.0
        %3497 = vmatprep.subr.mxu0 0.0
        %3498 = vmatpush1.msra.mxu0 0.0
        %3499 = vmatprep.subr.mxu0 0.0
        %3500 = vmatpush1.msra.mxu0 0.0
        %3501 = vmatprep.subr.mxu0 0.0
        %3502 = vmatpush1.msra.mxu0 0.0
        %3503 = vmatprep.subr.mxu0 0.0
        %3504 = vmatpush1.msra.mxu0 0.0
        %3505 = vmatprep.subr.mxu0 0.0
        %3506 = vmatpush1.msra.mxu0 0.0
        %3507 = vmatprep.subr.mxu0 0.0
        %3508 = vmatpush1.msra.mxu0 0.0
        %3509 = vmatprep.mubr.f32.mxu0 0.0
        %v3510 = vand.u32 %v3083, 4294901760
        %3511 = vmatmul.mubr.f32.gmra.mrb[0].mxu0 %v3510
        %v3512 = vpop.f32.mrb[0].mxu0
        %v3513 = vadd.f32 %v3212, %v3512
        %v3514 = vpop.f32.mrb[0].mxu0
        %3515 = vmatprep.mubr.f32.mxu0 0.0
        %v3516 = vand.u32 %v3084, 4294901760
        %3517 = vmatmul.mubr.f32.gmra.mrb[0].mxu0 %v3516
        %v3518 = vpop.f32.mrb[0].mxu0
        %v3519 = vadd.f32 %v3222, %v3518
        %v3520 = vpop.f32.mrb[0].mxu0
        %3521 = vmatprep.mubr.f32.mxu0 0.0
        %v3522 = vand.u32 %v3085, 4294901760
        %3523 = vmatmul.mubr.f32.gmra.mrb[0].mxu0 %v3522
        %v3524 = vpop.f32.mrb[0].mxu0
        %v3525 = vadd.f32 %v3232, %v3524
        %v3526 = vpop.f32.mrb[0].mxu0
        %3527 = vmatprep.mubr.f32.mxu0 0.0
        %v3528 = vand.u32 %v3086, 4294901760
        %3529 = vmatmul.mubr.f32.gmra.mrb[0].mxu0 %v3528
        %v3530 = vpop.f32.mrb[0].mxu0
        %v3531 = vadd.f32 %v3242, %v3530
        %v3532 = vpop.f32.mrb[0].mxu0
        %3533 = vmatprep.mubr.f32.mxu0 0.0
        %v3534 = vand.u32 %v3087, 4294901760
        %3535 = vmatmul.mubr.f32.gmra.mrb[0].mxu0 %v3534
        %v3536 = vpop.f32.mrb[0].mxu0
        %v3537 = vadd.f32 %v3252, %v3536
        %v3538 = vpop.f32.mrb[0].mxu0
        %3539 = vmatprep.mubr.f32.mxu0 0.0
        %v3540 = vand.u32 %v3088, 4294901760
        %3541 = vmatmul.mubr.f32.gmra.mrb[0].mxu0 %v3540
        %v3542 = vpop.f32.mrb[0].mxu0
        %v3543 = vadd.f32 %v3262, %v3542
        %v3544 = vpop.f32.mrb[0].mxu0
        %3545 = vmatprep.mubr.f32.mxu0 0.0
        %v3546 = vand.u32 %v3089, 4294901760
        %3547 = vmatmul.mubr.f32.gmra.mrb[0].mxu0 %v3546
        %v3548 = vpop.f32.mrb[0].mxu0
        %v3549 = vadd.f32 %v3272, %v3548
        %v3550 = vpop.f32.mrb[0].mxu0
        %3551 = vmatprep.mubr.f32.mxu0 0.0
        %v3552 = vand.u32 %v3090, 4294901760
        %3553 = vmatmul.mubr.f32.gmra.mrb[0].mxu0 %v3552
        %v3554 = vpop.f32.mrb[0].mxu0
        %v3555 = vadd.f32 %v3282, %v3554
        %v3556 = vpop.f32.mrb[0].mxu0
        %3557 = vmatprep.mubr.f32.mxu0 0.0
        %v3558 = vand.u32 %v3091, 4294901760
        %3559 = vmatmul.mubr.f32.gmra.mrb[0].mxu0 %v3558
        %v3560 = vpop.f32.mrb[0].mxu0
        %v3561 = vadd.f32 %v3292, %v3560
        %v3562 = vpop.f32.mrb[0].mxu0
        %3563 = vmatprep.mubr.f32.mxu0 0.0
        %v3564 = vand.u32 %v3092, 4294901760
        %3565 = vmatmul.mubr.f32.gmra.mrb[0].mxu0 %v3564
        %v3566 = vpop.f32.mrb[0].mxu0
        %v3567 = vadd.f32 %v3302, %v3566
        %v3568 = vpop.f32.mrb[0].mxu0
        %3569 = vmatprep.mubr.f32.mxu0 0.0
        %v3570 = vand.u32 %v3093, 4294901760
        %3571 = vmatmul.mubr.f32.gmra.mrb[0].mxu0 %v3570
        %v3572 = vpop.f32.mrb[0].mxu0
        %v3573 = vadd.f32 %v3312, %v3572
        %v3574 = vpop.f32.mrb[0].mxu0
        %3575 = vmatprep.mubr.f32.mxu0 0.0
        %v3576 = vand.u32 %v3094, 4294901760
        %3577 = vmatmul.mubr.f32.gmra.mrb[0].mxu0 %v3576
        %v3578 = vpop.f32.mrb[0].mxu0
        %v3579 = vadd.f32 %v3322, %v3578
        %v3580 = vpop.f32.mrb[0].mxu0
        %3581 = vmatprep.mubr.f32.mxu0 0.0
        %v3582 = vand.u32 %v3095, 4294901760
        %3583 = vmatmul.mubr.f32.gmra.mrb[0].mxu0 %v3582
        %v3584 = vpop.f32.mrb[0].mxu0
        %v3585 = vadd.f32 %v3332, %v3584
        %v3586 = vpop.f32.mrb[0].mxu0
        %3587 = vmatprep.mubr.f32.mxu0 0.0
        %v3588 = vand.u32 %v3096, 4294901760
        %3589 = vmatmul.mubr.f32.gmra.mrb[0].mxu0 %v3588
        %v3590 = vpop.f32.mrb[0].mxu0
        %v3591 = vadd.f32 %v3342, %v3590
        %v3592 = vpop.f32.mrb[0].mxu0
        %3593 = vmatprep.mubr.f32.mxu0 0.0
        %v3594 = vand.u32 %v3097, 4294901760
        %3595 = vmatmul.mubr.f32.gmra.mrb[0].mxu0 %v3594
        %v3596 = vpop.f32.mrb[0].mxu0
        %v3597 = vadd.f32 %v3352, %v3596
        %v3598 = vpop.f32.mrb[0].mxu0
        %3599 = vmatprep.mubr.f32.mxu0 0.0
        %v3600 = vand.u32 %v3098, 4294901760
        %3601 = vmatmul.mubr.f32.gmra.mrb[0].mxu0 %v3600
        %v3602 = vpop.f32.mrb[0].mxu0
        %v3603 = vadd.f32 %v3362, %v3602
        %v3604 = vpop.f32.mrb[0].mxu0
        %3605 = vdwg.mxu0
        %3606 = vmatprep.subr.mxu0 0.0
        %v3607 = vand.u32 %v3100, 4294901760
        %v3608 = vsub.f32 %v3100, %v3607
        %3609 = vmatpush1.msra.mxu0 %v3608
        %3610 = vmatprep.subr.mxu0 0.0
        %v3611 = vand.u32 %v3101, 4294901760
        %v3612 = vsub.f32 %v3101, %v3611
        %3613 = vmatpush1.msra.mxu0 %v3612
        %3614 = vmatprep.subr.mxu0 0.0
        %v3615 = vand.u32 %v3102, 4294901760
        %v3616 = vsub.f32 %v3102, %v3615
        %3617 = vmatpush1.msra.mxu0 %v3616
        %3618 = vmatprep.subr.mxu0 0.0
        %v3619 = vand.u32 %v3103, 4294901760
        %v3620 = vsub.f32 %v3103, %v3619
        %3621 = vmatpush1.msra.mxu0 %v3620
        %3622 = vmatprep.subr.mxu0 0.0
        %v3623 = vand.u32 %v3104, 4294901760
        %v3624 = vsub.f32 %v3104, %v3623
        %3625 = vmatpush1.msra.mxu0 %v3624
        %3626 = vmatprep.subr.mxu0 0.0
        %v3627 = vand.u32 %v3105, 4294901760
        %v3628 = vsub.f32 %v3105, %v3627
        %3629 = vmatpush1.msra.mxu0 %v3628
        %3630 = vmatprep.subr.mxu0 0.0
        %v3631 = vand.u32 %v3106, 4294901760
        %v3632 = vsub.f32 %v3106, %v3631
        %3633 = vmatpush1.msra.mxu0 %v3632
        %3634 = vmatprep.subr.mxu0 0.0
        %v3635 = vand.u32 %v3107, 4294901760
        %v3636 = vsub.f32 %v3107, %v3635
        %3637 = vmatpush1.msra.mxu0 %v3636
        %3638 = vmatprep.subr.mxu0 0.0
        %v3639 = vand.u32 %v3108, 4294901760
        %v3640 = vsub.f32 %v3108, %v3639
        %3641 = vmatpush1.msra.mxu0 %v3640
        %3642 = vmatprep.subr.mxu0 0.0
        %v3643 = vand.u32 %v3109, 4294901760
        %v3644 = vsub.f32 %v3109, %v3643
        %3645 = vmatpush1.msra.mxu0 %v3644
        %3646 = vmatprep.subr.mxu0 0.0
        %v3647 = vand.u32 %v3110, 4294901760
        %v3648 = vsub.f32 %v3110, %v3647
        %3649 = vmatpush1.msra.mxu0 %v3648
        %3650 = vmatprep.subr.mxu0 0.0
        %v3651 = vand.u32 %v3111, 4294901760
        %v3652 = vsub.f32 %v3111, %v3651
        %3653 = vmatpush1.msra.mxu0 %v3652
        %3654 = vmatprep.subr.mxu0 0.0
        %v3655 = vand.u32 %v3112, 4294901760
        %v3656 = vsub.f32 %v3112, %v3655
        %3657 = vmatpush1.msra.mxu0 %v3656
        %3658 = vmatprep.subr.mxu0 0.0
        %v3659 = vand.u32 %v3113, 4294901760
        %v3660 = vsub.f32 %v3113, %v3659
        %3661 = vmatpush1.msra.mxu0 %v3660
        %3662 = vmatprep.subr.mxu0 0.0
        %v3663 = vand.u32 %v3114, 4294901760
        %v3664 = vsub.f32 %v3114, %v3663
        %3665 = vmatpush1.msra.mxu0 %v3664
        %3666 = vmatprep.subr.mxu0 0.0
        %v3667 = vand.u32 %v3115, 4294901760
        %v3668 = vsub.f32 %v3115, %v3667
        %3669 = vmatpush1.msra.mxu0 %v3668
        %3670 = vmatprep.subr.mxu0 0.0
        %3671 = vmatpush1.msra.mxu0 0.0
        %3672 = vmatprep.subr.mxu0 0.0
        %3673 = vmatpush1.msra.mxu0 0.0
        %3674 = vmatprep.subr.mxu0 0.0
        %3675 = vmatpush1.msra.mxu0 0.0
        %3676 = vmatprep.subr.mxu0 0.0
        %3677 = vmatpush1.msra.mxu0 0.0
        %3678 = vmatprep.subr.mxu0 0.0
        %3679 = vmatpush1.msra.mxu0 0.0
        %3680 = vmatprep.subr.mxu0 0.0
        %3681 = vmatpush1.msra.mxu0 0.0
        %3682 = vmatprep.subr.mxu0 0.0
        %3683 = vmatpush1.msra.mxu0 0.0
        %3684 = vmatprep.subr.mxu0 0.0
        %3685 = vmatpush1.msra.mxu0 0.0
        %3686 = vmatprep.subr.mxu0 0.0
        %3687 = vmatpush1.msra.mxu0 0.0
        %3688 = vmatprep.subr.mxu0 0.0
        %3689 = vmatpush1.msra.mxu0 0.0
        %3690 = vmatprep.subr.mxu0 0.0
        %3691 = vmatpush1.msra.mxu0 0.0
        %3692 = vmatprep.subr.mxu0 0.0
        %3693 = vmatpush1.msra.mxu0 0.0
        %3694 = vmatprep.subr.mxu0 0.0
        %3695 = vmatpush1.msra.mxu0 0.0
        %3696 = vmatprep.subr.mxu0 0.0
        %3697 = vmatpush1.msra.mxu0 0.0
        %3698 = vmatprep.subr.mxu0 0.0
        %3699 = vmatpush1.msra.mxu0 0.0
        %3700 = vmatprep.subr.mxu0 0.0
        %3701 = vmatpush1.msra.mxu0 0.0
        %3702 = vmatprep.mubr.f32.mxu0 0.0
        %v3703 = vand.u32 %v3083, 4294901760
        %v3704 = vsub.f32 %v3083, %v3703
        %3705 = vmatmul.mubr.f32.gmra.mrb[0].mxu0 %v3704
        %v3706 = vpop.f32.mrb[0].mxu0
        %v3707 = vadd.f32 %v3513, %v3706
        %v3708 = vpop.f32.mrb[0].mxu0
        %3709 = vmatprep.mubr.f32.mxu0 0.0
        %v3710 = vand.u32 %v3084, 4294901760
        %v3711 = vsub.f32 %v3084, %v3710
        %3712 = vmatmul.mubr.f32.gmra.mrb[0].mxu0 %v3711
        %v3713 = vpop.f32.mrb[0].mxu0
        %v3714 = vadd.f32 %v3519, %v3713
        %v3715 = vpop.f32.mrb[0].mxu0
        %3716 = vmatprep.mubr.f32.mxu0 0.0
        %v3717 = vand.u32 %v3085, 4294901760
        %v3718 = vsub.f32 %v3085, %v3717
        %3719 = vmatmul.mubr.f32.gmra.mrb[0].mxu0 %v3718
        %v3720 = vpop.f32.mrb[0].mxu0
        %v3721 = vadd.f32 %v3525, %v3720
        %v3722 = vpop.f32.mrb[0].mxu0
        %3723 = vmatprep.mubr.f32.mxu0 0.0
        %v3724 = vand.u32 %v3086, 4294901760
        %v3725 = vsub.f32 %v3086, %v3724
        %3726 = vmatmul.mubr.f32.gmra.mrb[0].mxu0 %v3725
        %v3727 = vpop.f32.mrb[0].mxu0
        %v3728 = vadd.f32 %v3531, %v3727
        %v3729 = vpop.f32.mrb[0].mxu0
        %3730 = vmatprep.mubr.f32.mxu0 0.0
        %v3731 = vand.u32 %v3087, 4294901760
        %v3732 = vsub.f32 %v3087, %v3731
        %3733 = vmatmul.mubr.f32.gmra.mrb[0].mxu0 %v3732
        %v3734 = vpop.f32.mrb[0].mxu0
        %v3735 = vadd.f32 %v3537, %v3734
        %v3736 = vpop.f32.mrb[0].mxu0
        %3737 = vmatprep.mubr.f32.mxu0 0.0
        %v3738 = vand.u32 %v3088, 4294901760
        %v3739 = vsub.f32 %v3088, %v3738
        %3740 = vmatmul.mubr.f32.gmra.mrb[0].mxu0 %v3739
        %v3741 = vpop.f32.mrb[0].mxu0
        %v3742 = vadd.f32 %v3543, %v3741
        %v3743 = vpop.f32.mrb[0].mxu0
        %3744 = vmatprep.mubr.f32.mxu0 0.0
        %v3745 = vand.u32 %v3089, 4294901760
        %v3746 = vsub.f32 %v3089, %v3745
        %3747 = vmatmul.mubr.f32.gmra.mrb[0].mxu0 %v3746
        %v3748 = vpop.f32.mrb[0].mxu0
        %v3749 = vadd.f32 %v3549, %v3748
        %v3750 = vpop.f32.mrb[0].mxu0
        %3751 = vmatprep.mubr.f32.mxu0 0.0
        %v3752 = vand.u32 %v3090, 4294901760
        %v3753 = vsub.f32 %v3090, %v3752
        %3754 = vmatmul.mubr.f32.gmra.mrb[0].mxu0 %v3753
        %v3755 = vpop.f32.mrb[0].mxu0
        %v3756 = vadd.f32 %v3555, %v3755
        %v3757 = vpop.f32.mrb[0].mxu0
        %3758 = vmatprep.mubr.f32.mxu0 0.0
        %v3759 = vand.u32 %v3091, 4294901760
        %v3760 = vsub.f32 %v3091, %v3759
        %3761 = vmatmul.mubr.f32.gmra.mrb[0].mxu0 %v3760
        %v3762 = vpop.f32.mrb[0].mxu0
        %v3763 = vadd.f32 %v3561, %v3762
        %v3764 = vpop.f32.mrb[0].mxu0
        %3765 = vmatprep.mubr.f32.mxu0 0.0
        %v3766 = vand.u32 %v3092, 4294901760
        %v3767 = vsub.f32 %v3092, %v3766
        %3768 = vmatmul.mubr.f32.gmra.mrb[0].mxu0 %v3767
        %v3769 = vpop.f32.mrb[0].mxu0
        %v3770 = vadd.f32 %v3567, %v3769
        %v3771 = vpop.f32.mrb[0].mxu0
        %3772 = vmatprep.mubr.f32.mxu0 0.0
        %v3773 = vand.u32 %v3093, 4294901760
        %v3774 = vsub.f32 %v3093, %v3773
        %3775 = vmatmul.mubr.f32.gmra.mrb[0].mxu0 %v3774
        %v3776 = vpop.f32.mrb[0].mxu0
        %v3777 = vadd.f32 %v3573, %v3776
        %v3778 = vpop.f32.mrb[0].mxu0
        %3779 = vmatprep.mubr.f32.mxu0 0.0
        %v3780 = vand.u32 %v3094, 4294901760
        %v3781 = vsub.f32 %v3094, %v3780
        %3782 = vmatmul.mubr.f32.gmra.mrb[0].mxu0 %v3781
        %v3783 = vpop.f32.mrb[0].mxu0
        %v3784 = vadd.f32 %v3579, %v3783
        %v3785 = vpop.f32.mrb[0].mxu0
        %3786 = vmatprep.mubr.f32.mxu0 0.0
        %v3787 = vand.u32 %v3095, 4294901760
        %v3788 = vsub.f32 %v3095, %v3787
        %3789 = vmatmul.mubr.f32.gmra.mrb[0].mxu0 %v3788
        %v3790 = vpop.f32.mrb[0].mxu0
        %v3791 = vadd.f32 %v3585, %v3790
        %v3792 = vpop.f32.mrb[0].mxu0
        %3793 = vmatprep.mubr.f32.mxu0 0.0
        %v3794 = vand.u32 %v3096, 4294901760
        %v3795 = vsub.f32 %v3096, %v3794
        %3796 = vmatmul.mubr.f32.gmra.mrb[0].mxu0 %v3795
        %v3797 = vpop.f32.mrb[0].mxu0
        %v3798 = vadd.f32 %v3591, %v3797
        %v3799 = vpop.f32.mrb[0].mxu0
        %3800 = vmatprep.mubr.f32.mxu0 0.0
        %v3801 = vand.u32 %v3097, 4294901760
        %v3802 = vsub.f32 %v3097, %v3801
        %3803 = vmatmul.mubr.f32.gmra.mrb[0].mxu0 %v3802
        %v3804 = vpop.f32.mrb[0].mxu0
        %v3805 = vadd.f32 %v3597, %v3804
        %v3806 = vpop.f32.mrb[0].mxu0
        %3807 = vmatprep.mubr.f32.mxu0 0.0
        %v3808 = vand.u32 %v3098, 4294901760
        %v3809 = vsub.f32 %v3098, %v3808
        %3810 = vmatmul.mubr.f32.gmra.mrb[0].mxu0 %v3809
        %v3811 = vpop.f32.mrb[0].mxu0
        %v3812 = vadd.f32 %v3603, %v3811
        %v3813 = vpop.f32.mrb[0].mxu0
        %3814 = vdwg.mxu0
        %3815 = vmatprep.subr.mxu0 0.0
        %v3816 = vand.u32 %v3100, 4294901760
        %3817 = vmatpush1.msra.mxu0 %v3816
        %3818 = vmatprep.subr.mxu0 0.0
        %v3819 = vand.u32 %v3101, 4294901760
        %3820 = vmatpush1.msra.mxu0 %v3819
        %3821 = vmatprep.subr.mxu0 0.0
        %v3822 = vand.u32 %v3102, 4294901760
        %3823 = vmatpush1.msra.mxu0 %v3822
        %3824 = vmatprep.subr.mxu0 0.0
        %v3825 = vand.u32 %v3103, 4294901760
        %3826 = vmatpush1.msra.mxu0 %v3825
        %3827 = vmatprep.subr.mxu0 0.0
        %v3828 = vand.u32 %v3104, 4294901760
        %3829 = vmatpush1.msra.mxu0 %v3828
        %3830 = vmatprep.subr.mxu0 0.0
        %v3831 = vand.u32 %v3105, 4294901760
        %3832 = vmatpush1.msra.mxu0 %v3831
        %3833 = vmatprep.subr.mxu0 0.0
        %v3834 = vand.u32 %v3106, 4294901760
        %3835 = vmatpush1.msra.mxu0 %v3834
        %3836 = vmatprep.subr.mxu0 0.0
        %v3837 = vand.u32 %v3107, 4294901760
        %3838 = vmatpush1.msra.mxu0 %v3837
        %3839 = vmatprep.subr.mxu0 0.0
        %v3840 = vand.u32 %v3108, 4294901760
        %3841 = vmatpush1.msra.mxu0 %v3840
        %3842 = vmatprep.subr.mxu0 0.0
        %v3843 = vand.u32 %v3109, 4294901760
        %3844 = vmatpush1.msra.mxu0 %v3843
        %3845 = vmatprep.subr.mxu0 0.0
        %v3846 = vand.u32 %v3110, 4294901760
        %3847 = vmatpush1.msra.mxu0 %v3846
        %3848 = vmatprep.subr.mxu0 0.0
        %v3849 = vand.u32 %v3111, 4294901760
        %3850 = vmatpush1.msra.mxu0 %v3849
        %3851 = vmatprep.subr.mxu0 0.0
        %v3852 = vand.u32 %v3112, 4294901760
        %3853 = vmatpush1.msra.mxu0 %v3852
        %3854 = vmatprep.subr.mxu0 0.0
        %v3855 = vand.u32 %v3113, 4294901760
        %3856 = vmatpush1.msra.mxu0 %v3855
        %3857 = vmatprep.subr.mxu0 0.0
        %v3858 = vand.u32 %v3114, 4294901760
        %3859 = vmatpush1.msra.mxu0 %v3858
        %3860 = vmatprep.subr.mxu0 0.0
        %v3861 = vand.u32 %v3115, 4294901760
        %3862 = vmatpush1.msra.mxu0 %v3861
        %3863 = vmatprep.subr.mxu0 0.0
        %3864 = vmatpush1.msra.mxu0 0.0
        %3865 = vmatprep.subr.mxu0 0.0
        %3866 = vmatpush1.msra.mxu0 0.0
        %3867 = vmatprep.subr.mxu0 0.0
        %3868 = vmatpush1.msra.mxu0 0.0
        %3869 = vmatprep.subr.mxu0 0.0
        %3870 = vmatpush1.msra.mxu0 0.0
        %3871 = vmatprep.subr.mxu0 0.0
        %3872 = vmatpush1.msra.mxu0 0.0
        %3873 = vmatprep.subr.mxu0 0.0
        %3874 = vmatpush1.msra.mxu0 0.0
        %3875 = vmatprep.subr.mxu0 0.0
        %3876 = vmatpush1.msra.mxu0 0.0
        %3877 = vmatprep.subr.mxu0 0.0
        %3878 = vmatpush1.msra.mxu0 0.0
        %3879 = vmatprep.subr.mxu0 0.0
        %3880 = vmatpush1.msra.mxu0 0.0
        %3881 = vmatprep.subr.mxu0 0.0
        %3882 = vmatpush1.msra.mxu0 0.0
        %3883 = vmatprep.subr.mxu0 0.0
        %3884 = vmatpush1.msra.mxu0 0.0
        %3885 = vmatprep.subr.mxu0 0.0
        %3886 = vmatpush1.msra.mxu0 0.0
        %3887 = vmatprep.subr.mxu0 0.0
        %3888 = vmatpush1.msra.mxu0 0.0
        %3889 = vmatprep.subr.mxu0 0.0
        %3890 = vmatpush1.msra.mxu0 0.0
        %3891 = vmatprep.subr.mxu0 0.0
        %3892 = vmatpush1.msra.mxu0 0.0
        %3893 = vmatprep.subr.mxu0 0.0
        %3894 = vmatpush1.msra.mxu0 0.0
        %3895 = vmatprep.mubr.f32.mxu0 0.0
        %v3896 = vand.u32 %v3083, 4294901760
        %v3897 = vsub.f32 %v3083, %v3896
        %v3898 = vand.u32 %v3897, 4294901760
        %3899 = vmatmul.mubr.f32.gmra.mrb[0].mxu0 %v3898
        %v3900 = vpop.f32.mrb[0].mxu0
        %v3901 = vadd.f32 %v3707, %v3900
        %v3902 = vpop.f32.mrb[0].mxu0
        %3903 = vmatprep.mubr.f32.mxu0 0.0
        %v3904 = vand.u32 %v3084, 4294901760
        %v3905 = vsub.f32 %v3084, %v3904
        %v3906 = vand.u32 %v3905, 4294901760
        %3907 = vmatmul.mubr.f32.gmra.mrb[0].mxu0 %v3906
        %v3908 = vpop.f32.mrb[0].mxu0
        %v3909 = vadd.f32 %v3714, %v3908
        %v3910 = vpop.f32.mrb[0].mxu0
        %3911 = vmatprep.mubr.f32.mxu0 0.0
        %v3912 = vand.u32 %v3085, 4294901760
        %v3913 = vsub.f32 %v3085, %v3912
        %v3914 = vand.u32 %v3913, 4294901760
        %3915 = vmatmul.mubr.f32.gmra.mrb[0].mxu0 %v3914
        %v3916 = vpop.f32.mrb[0].mxu0
        %v3917 = vadd.f32 %v3721, %v3916
        %v3918 = vpop.f32.mrb[0].mxu0
        %3919 = vmatprep.mubr.f32.mxu0 0.0
        %v3920 = vand.u32 %v3086, 4294901760
        %v3921 = vsub.f32 %v3086, %v3920
        %v3922 = vand.u32 %v3921, 4294901760
        %3923 = vmatmul.mubr.f32.gmra.mrb[0].mxu0 %v3922
        %v3924 = vpop.f32.mrb[0].mxu0
        %v3925 = vadd.f32 %v3728, %v3924
        %v3926 = vpop.f32.mrb[0].mxu0
        %3927 = vmatprep.mubr.f32.mxu0 0.0
        %v3928 = vand.u32 %v3087, 4294901760
        %v3929 = vsub.f32 %v3087, %v3928
        %v3930 = vand.u32 %v3929, 4294901760
        %3931 = vmatmul.mubr.f32.gmra.mrb[0].mxu0 %v3930
        %v3932 = vpop.f32.mrb[0].mxu0
        %v3933 = vadd.f32 %v3735, %v3932
        %v3934 = vpop.f32.mrb[0].mxu0
        %3935 = vmatprep.mubr.f32.mxu0 0.0
        %v3936 = vand.u32 %v3088, 4294901760
        %v3937 = vsub.f32 %v3088, %v3936
        %v3938 = vand.u32 %v3937, 4294901760
        %3939 = vmatmul.mubr.f32.gmra.mrb[0].mxu0 %v3938
        %v3940 = vpop.f32.mrb[0].mxu0
        %v3941 = vadd.f32 %v3742, %v3940
        %v3942 = vpop.f32.mrb[0].mxu0
        %3943 = vmatprep.mubr.f32.mxu0 0.0
        %v3944 = vand.u32 %v3089, 4294901760
        %v3945 = vsub.f32 %v3089, %v3944
        %v3946 = vand.u32 %v3945, 4294901760
        %3947 = vmatmul.mubr.f32.gmra.mrb[0].mxu0 %v3946
        %v3948 = vpop.f32.mrb[0].mxu0
        %v3949 = vadd.f32 %v3749, %v3948
        %v3950 = vpop.f32.mrb[0].mxu0
        %3951 = vmatprep.mubr.f32.mxu0 0.0
        %v3952 = vand.u32 %v3090, 4294901760
        %v3953 = vsub.f32 %v3090, %v3952
        %v3954 = vand.u32 %v3953, 4294901760
        %3955 = vmatmul.mubr.f32.gmra.mrb[0].mxu0 %v3954
        %v3956 = vpop.f32.mrb[0].mxu0
        %v3957 = vadd.f32 %v3756, %v3956
        %v3958 = vpop.f32.mrb[0].mxu0
        %3959 = vmatprep.mubr.f32.mxu0 0.0
        %v3960 = vand.u32 %v3091, 4294901760
        %v3961 = vsub.f32 %v3091, %v3960
        %v3962 = vand.u32 %v3961, 4294901760
        %3963 = vmatmul.mubr.f32.gmra.mrb[0].mxu0 %v3962
        %v3964 = vpop.f32.mrb[0].mxu0
        %v3965 = vadd.f32 %v3763, %v3964
        %v3966 = vpop.f32.mrb[0].mxu0
        %3967 = vmatprep.mubr.f32.mxu0 0.0
        %v3968 = vand.u32 %v3092, 4294901760
        %v3969 = vsub.f32 %v3092, %v3968
        %v3970 = vand.u32 %v3969, 4294901760
        %3971 = vmatmul.mubr.f32.gmra.mrb[0].mxu0 %v3970
        %v3972 = vpop.f32.mrb[0].mxu0
        %v3973 = vadd.f32 %v3770, %v3972
        %v3974 = vpop.f32.mrb[0].mxu0
        %3975 = vmatprep.mubr.f32.mxu0 0.0
        %v3976 = vand.u32 %v3093, 4294901760
        %v3977 = vsub.f32 %v3093, %v3976
        %v3978 = vand.u32 %v3977, 4294901760
        %3979 = vmatmul.mubr.f32.gmra.mrb[0].mxu0 %v3978
        %v3980 = vpop.f32.mrb[0].mxu0
        %v3981 = vadd.f32 %v3777, %v3980
        %v3982 = vpop.f32.mrb[0].mxu0
        %3983 = vmatprep.mubr.f32.mxu0 0.0
        %v3984 = vand.u32 %v3094, 4294901760
        %v3985 = vsub.f32 %v3094, %v3984
        %v3986 = vand.u32 %v3985, 4294901760
        %3987 = vmatmul.mubr.f32.gmra.mrb[0].mxu0 %v3986
        %v3988 = vpop.f32.mrb[0].mxu0
        %v3989 = vadd.f32 %v3784, %v3988
        %v3990 = vpop.f32.mrb[0].mxu0
        %3991 = vmatprep.mubr.f32.mxu0 0.0
        %v3992 = vand.u32 %v3095, 4294901760
        %v3993 = vsub.f32 %v3095, %v3992
        %v3994 = vand.u32 %v3993, 4294901760
        %3995 = vmatmul.mubr.f32.gmra.mrb[0].mxu0 %v3994
        %v3996 = vpop.f32.mrb[0].mxu0
        %v3997 = vadd.f32 %v3791, %v3996
        %v3998 = vpop.f32.mrb[0].mxu0
        %3999 = vmatprep.mubr.f32.mxu0 0.0
        %v4000 = vand.u32 %v3096, 4294901760
        %v4001 = vsub.f32 %v3096, %v4000
        %v4002 = vand.u32 %v4001, 4294901760
        %4003 = vmatmul.mubr.f32.gmra.mrb[0].mxu0 %v4002
        %v4004 = vpop.f32.mrb[0].mxu0
        %v4005 = vadd.f32 %v3798, %v4004
        %v4006 = vpop.f32.mrb[0].mxu0
        %4007 = vmatprep.mubr.f32.mxu0 0.0
        %v4008 = vand.u32 %v3097, 4294901760
        %v4009 = vsub.f32 %v3097, %v4008
        %v4010 = vand.u32 %v4009, 4294901760
        %4011 = vmatmul.mubr.f32.gmra.mrb[0].mxu0 %v4010
        %v4012 = vpop.f32.mrb[0].mxu0
        %v4013 = vadd.f32 %v3805, %v4012
        %v4014 = vpop.f32.mrb[0].mxu0
        %4015 = vmatprep.mubr.f32.mxu0 0.0
        %v4016 = vand.u32 %v3098, 4294901760
        %v4017 = vsub.f32 %v3098, %v4016
        %v4018 = vand.u32 %v4017, 4294901760
        %4019 = vmatmul.mubr.f32.gmra.mrb[0].mxu0 %v4018
        %v4020 = vpop.f32.mrb[0].mxu0
        %v4021 = vadd.f32 %v3812, %v4020
        %v4022 = vpop.f32.mrb[0].mxu0
        %4023 = vdwg.mxu0
        %4024 = vmatprep.subr.mxu0 0.0
        %v4025 = vand.u32 %v3100, 4294901760
        %v4026 = vsub.f32 %v3100, %v4025
        %v4027 = vand.u32 %v4026, 4294901760
        %4028 = vmatpush1.msra.mxu0 %v4027
        %4029 = vmatprep.subr.mxu0 0.0
        %v4030 = vand.u32 %v3101, 4294901760
        %v4031 = vsub.f32 %v3101, %v4030
        %v4032 = vand.u32 %v4031, 4294901760
        %4033 = vmatpush1.msra.mxu0 %v4032
        %4034 = vmatprep.subr.mxu0 0.0
        %v4035 = vand.u32 %v3102, 4294901760
        %v4036 = vsub.f32 %v3102, %v4035
        %v4037 = vand.u32 %v4036, 4294901760
        %4038 = vmatpush1.msra.mxu0 %v4037
        %4039 = vmatprep.subr.mxu0 0.0
        %v4040 = vand.u32 %v3103, 4294901760
        %v4041 = vsub.f32 %v3103, %v4040
        %v4042 = vand.u32 %v4041, 4294901760
        %4043 = vmatpush1.msra.mxu0 %v4042
        %4044 = vmatprep.subr.mxu0 0.0
        %v4045 = vand.u32 %v3104, 4294901760
        %v4046 = vsub.f32 %v3104, %v4045
        %v4047 = vand.u32 %v4046, 4294901760
        %4048 = vmatpush1.msra.mxu0 %v4047
        %4049 = vmatprep.subr.mxu0 0.0
        %v4050 = vand.u32 %v3105, 4294901760
        %v4051 = vsub.f32 %v3105, %v4050
        %v4052 = vand.u32 %v4051, 4294901760
        %4053 = vmatpush1.msra.mxu0 %v4052
        %4054 = vmatprep.subr.mxu0 0.0
        %v4055 = vand.u32 %v3106, 4294901760
        %v4056 = vsub.f32 %v3106, %v4055
        %v4057 = vand.u32 %v4056, 4294901760
        %4058 = vmatpush1.msra.mxu0 %v4057
        %4059 = vmatprep.subr.mxu0 0.0
        %v4060 = vand.u32 %v3107, 4294901760
        %v4061 = vsub.f32 %v3107, %v4060
        %v4062 = vand.u32 %v4061, 4294901760
        %4063 = vmatpush1.msra.mxu0 %v4062
        %4064 = vmatprep.subr.mxu0 0.0
        %v4065 = vand.u32 %v3108, 4294901760
        %v4066 = vsub.f32 %v3108, %v4065
        %v4067 = vand.u32 %v4066, 4294901760
        %4068 = vmatpush1.msra.mxu0 %v4067
        %4069 = vmatprep.subr.mxu0 0.0
        %v4070 = vand.u32 %v3109, 4294901760
        %v4071 = vsub.f32 %v3109, %v4070
        %v4072 = vand.u32 %v4071, 4294901760
        %4073 = vmatpush1.msra.mxu0 %v4072
        %4074 = vmatprep.subr.mxu0 0.0
        %v4075 = vand.u32 %v3110, 4294901760
        %v4076 = vsub.f32 %v3110, %v4075
        %v4077 = vand.u32 %v4076, 4294901760
        %4078 = vmatpush1.msra.mxu0 %v4077
        %4079 = vmatprep.subr.mxu0 0.0
        %v4080 = vand.u32 %v3111, 4294901760
        %v4081 = vsub.f32 %v3111, %v4080
        %v4082 = vand.u32 %v4081, 4294901760
        %4083 = vmatpush1.msra.mxu0 %v4082
        %4084 = vmatprep.subr.mxu0 0.0
        %v4085 = vand.u32 %v3112, 4294901760
        %v4086 = vsub.f32 %v3112, %v4085
        %v4087 = vand.u32 %v4086, 4294901760
        %4088 = vmatpush1.msra.mxu0 %v4087
        %4089 = vmatprep.subr.mxu0 0.0
        %v4090 = vand.u32 %v3113, 4294901760
        %v4091 = vsub.f32 %v3113, %v4090
        %v4092 = vand.u32 %v4091, 4294901760
        %4093 = vmatpush1.msra.mxu0 %v4092
        %4094 = vmatprep.subr.mxu0 0.0
        %v4095 = vand.u32 %v3114, 4294901760
        %v4096 = vsub.f32 %v3114, %v4095
        %v4097 = vand.u32 %v4096, 4294901760
        %4098 = vmatpush1.msra.mxu0 %v4097
        %4099 = vmatprep.subr.mxu0 0.0
        %v4100 = vand.u32 %v3115, 4294901760
        %v4101 = vsub.f32 %v3115, %v4100
        %v4102 = vand.u32 %v4101, 4294901760
        %4103 = vmatpush1.msra.mxu0 %v4102
        %4104 = vmatprep.subr.mxu0 0.0
        %4105 = vmatpush1.msra.mxu0 0.0
        %4106 = vmatprep.subr.mxu0 0.0
        %4107 = vmatpush1.msra.mxu0 0.0
        %4108 = vmatprep.subr.mxu0 0.0
        %4109 = vmatpush1.msra.mxu0 0.0
        %4110 = vmatprep.subr.mxu0 0.0
        %4111 = vmatpush1.msra.mxu0 0.0
        %4112 = vmatprep.subr.mxu0 0.0
        %4113 = vmatpush1.msra.mxu0 0.0
        %4114 = vmatprep.subr.mxu0 0.0
        %4115 = vmatpush1.msra.mxu0 0.0
        %4116 = vmatprep.subr.mxu0 0.0
        %4117 = vmatpush1.msra.mxu0 0.0
        %4118 = vmatprep.subr.mxu0 0.0
        %4119 = vmatpush1.msra.mxu0 0.0
        %4120 = vmatprep.subr.mxu0 0.0
        %4121 = vmatpush1.msra.mxu0 0.0
        %4122 = vmatprep.subr.mxu0 0.0
        %4123 = vmatpush1.msra.mxu0 0.0
        %4124 = vmatprep.subr.mxu0 0.0
        %4125 = vmatpush1.msra.mxu0 0.0
        %4126 = vmatprep.subr.mxu0 0.0
        %4127 = vmatpush1.msra.mxu0 0.0
        %4128 = vmatprep.subr.mxu0 0.0
        %4129 = vmatpush1.msra.mxu0 0.0
        %4130 = vmatprep.subr.mxu0 0.0
        %4131 = vmatpush1.msra.mxu0 0.0
        %4132 = vmatprep.subr.mxu0 0.0
        %4133 = vmatpush1.msra.mxu0 0.0
        %4134 = vmatprep.subr.mxu0 0.0
        %4135 = vmatpush1.msra.mxu0 0.0
        %4136 = vmatprep.mubr.f32.mxu0 0.0
        %v4137 = vand.u32 %v3083, 4294901760
        %4138 = vmatmul.mubr.f32.gmra.mrb[0].mxu0 %v4137
        %v4139 = vpop.f32.mrb[0].mxu0
        %v4140 = vadd.f32 %v3901, %v4139
        %v4141 = vpop.f32.mrb[0].mxu0
        %4142 = vmatprep.mubr.f32.mxu0 0.0
        %v4143 = vand.u32 %v3084, 4294901760
        %4144 = vmatmul.mubr.f32.gmra.mrb[0].mxu0 %v4143
        %v4145 = vpop.f32.mrb[0].mxu0
        %v4146 = vadd.f32 %v3909, %v4145
        %v4147 = vpop.f32.mrb[0].mxu0
        %4148 = vmatprep.mubr.f32.mxu0 0.0
        %v4149 = vand.u32 %v3085, 4294901760
        %4150 = vmatmul.mubr.f32.gmra.mrb[0].mxu0 %v4149
        %v4151 = vpop.f32.mrb[0].mxu0
        %v4152 = vadd.f32 %v3917, %v4151
        %v4153 = vpop.f32.mrb[0].mxu0
        %4154 = vmatprep.mubr.f32.mxu0 0.0
        %v4155 = vand.u32 %v3086, 4294901760
        %4156 = vmatmul.mubr.f32.gmra.mrb[0].mxu0 %v4155
        %v4157 = vpop.f32.mrb[0].mxu0
        %v4158 = vadd.f32 %v3925, %v4157
        %v4159 = vpop.f32.mrb[0].mxu0
        %4160 = vmatprep.mubr.f32.mxu0 0.0
        %v4161 = vand.u32 %v3087, 4294901760
        %4162 = vmatmul.mubr.f32.gmra.mrb[0].mxu0 %v4161
        %v4163 = vpop.f32.mrb[0].mxu0
        %v4164 = vadd.f32 %v3933, %v4163
        %v4165 = vpop.f32.mrb[0].mxu0
        %4166 = vmatprep.mubr.f32.mxu0 0.0
        %v4167 = vand.u32 %v3088, 4294901760
        %4168 = vmatmul.mubr.f32.gmra.mrb[0].mxu0 %v4167
        %v4169 = vpop.f32.mrb[0].mxu0
        %v4170 = vadd.f32 %v3941, %v4169
        %v4171 = vpop.f32.mrb[0].mxu0
        %4172 = vmatprep.mubr.f32.mxu0 0.0
        %v4173 = vand.u32 %v3089, 4294901760
        %4174 = vmatmul.mubr.f32.gmra.mrb[0].mxu0 %v4173
        %v4175 = vpop.f32.mrb[0].mxu0
        %v4176 = vadd.f32 %v3949, %v4175
        %v4177 = vpop.f32.mrb[0].mxu0
        %4178 = vmatprep.mubr.f32.mxu0 0.0
        %v4179 = vand.u32 %v3090, 4294901760
        %4180 = vmatmul.mubr.f32.gmra.mrb[0].mxu0 %v4179
        %v4181 = vpop.f32.mrb[0].mxu0
        %v4182 = vadd.f32 %v3957, %v4181
        %v4183 = vpop.f32.mrb[0].mxu0
        %4184 = vmatprep.mubr.f32.mxu0 0.0
        %v4185 = vand.u32 %v3091, 4294901760
        %4186 = vmatmul.mubr.f32.gmra.mrb[0].mxu0 %v4185
        %v4187 = vpop.f32.mrb[0].mxu0
        %v4188 = vadd.f32 %v3965, %v4187
        %v4189 = vpop.f32.mrb[0].mxu0
        %4190 = vmatprep.mubr.f32.mxu0 0.0
        %v4191 = vand.u32 %v3092, 4294901760
        %4192 = vmatmul.mubr.f32.gmra.mrb[0].mxu0 %v4191
        %v4193 = vpop.f32.mrb[0].mxu0
        %v4194 = vadd.f32 %v3973, %v4193
        %v4195 = vpop.f32.mrb[0].mxu0
        %4196 = vmatprep.mubr.f32.mxu0 0.0
        %v4197 = vand.u32 %v3093, 4294901760
        %4198 = vmatmul.mubr.f32.gmra.mrb[0].mxu0 %v4197
        %v4199 = vpop.f32.mrb[0].mxu0
        %v4200 = vadd.f32 %v3981, %v4199
        %v4201 = vpop.f32.mrb[0].mxu0
        %4202 = vmatprep.mubr.f32.mxu0 0.0
        %v4203 = vand.u32 %v3094, 4294901760
        %4204 = vmatmul.mubr.f32.gmra.mrb[0].mxu0 %v4203
        %v4205 = vpop.f32.mrb[0].mxu0
        %v4206 = vadd.f32 %v3989, %v4205
        %v4207 = vpop.f32.mrb[0].mxu0
        %4208 = vmatprep.mubr.f32.mxu0 0.0
        %v4209 = vand.u32 %v3095, 4294901760
        %4210 = vmatmul.mubr.f32.gmra.mrb[0].mxu0 %v4209
        %v4211 = vpop.f32.mrb[0].mxu0
        %v4212 = vadd.f32 %v3997, %v4211
        %v4213 = vpop.f32.mrb[0].mxu0
        %4214 = vmatprep.mubr.f32.mxu0 0.0
        %v4215 = vand.u32 %v3096, 4294901760
        %4216 = vmatmul.mubr.f32.gmra.mrb[0].mxu0 %v4215
        %v4217 = vpop.f32.mrb[0].mxu0
        %v4218 = vadd.f32 %v4005, %v4217
        %v4219 = vpop.f32.mrb[0].mxu0
        %4220 = vmatprep.mubr.f32.mxu0 0.0
        %v4221 = vand.u32 %v3097, 4294901760
        %4222 = vmatmul.mubr.f32.gmra.mrb[0].mxu0 %v4221
        %v4223 = vpop.f32.mrb[0].mxu0
        %v4224 = vadd.f32 %v4013, %v4223
        %v4225 = vpop.f32.mrb[0].mxu0
        %4226 = vmatprep.mubr.f32.mxu0 0.0
        %v4227 = vand.u32 %v3098, 4294901760
        %4228 = vmatmul.mubr.f32.gmra.mrb[0].mxu0 %v4227
        %v4229 = vpop.f32.mrb[0].mxu0
        %v4230 = vadd.f32 %v4021, %v4229
        %v4231 = vpop.f32.mrb[0].mxu0
        %4232 = vdwg.mxu0
        %4233 = vmatprep.subr.mxu0 0.0
        %v4234 = vand.u32 %v3100, 4294901760
        %4235 = vmatpush1.msra.mxu0 %v4234
        %4236 = vmatprep.subr.mxu0 0.0
        %v4237 = vand.u32 %v3101, 4294901760
        %4238 = vmatpush1.msra.mxu0 %v4237
        %4239 = vmatprep.subr.mxu0 0.0
        %v4240 = vand.u32 %v3102, 4294901760
        %4241 = vmatpush1.msra.mxu0 %v4240
        %4242 = vmatprep.subr.mxu0 0.0
        %v4243 = vand.u32 %v3103, 4294901760
        %4244 = vmatpush1.msra.mxu0 %v4243
        %4245 = vmatprep.subr.mxu0 0.0
        %v4246 = vand.u32 %v3104, 4294901760
        %4247 = vmatpush1.msra.mxu0 %v4246
        %4248 = vmatprep.subr.mxu0 0.0
        %v4249 = vand.u32 %v3105, 4294901760
        %4250 = vmatpush1.msra.mxu0 %v4249
        %4251 = vmatprep.subr.mxu0 0.0
        %v4252 = vand.u32 %v3106, 4294901760
        %4253 = vmatpush1.msra.mxu0 %v4252
        %4254 = vmatprep.subr.mxu0 0.0
        %v4255 = vand.u32 %v3107, 4294901760
        %4256 = vmatpush1.msra.mxu0 %v4255
        %4257 = vmatprep.subr.mxu0 0.0
        %v4258 = vand.u32 %v3108, 4294901760
        %4259 = vmatpush1.msra.mxu0 %v4258
        %4260 = vmatprep.subr.mxu0 0.0
        %v4261 = vand.u32 %v3109, 4294901760
        %4262 = vmatpush1.msra.mxu0 %v4261
        %4263 = vmatprep.subr.mxu0 0.0
        %v4264 = vand.u32 %v3110, 4294901760
        %4265 = vmatpush1.msra.mxu0 %v4264
        %4266 = vmatprep.subr.mxu0 0.0
        %v4267 = vand.u32 %v3111, 4294901760
        %4268 = vmatpush1.msra.mxu0 %v4267
        %4269 = vmatprep.subr.mxu0 0.0
        %v4270 = vand.u32 %v3112, 4294901760
        %4271 = vmatpush1.msra.mxu0 %v4270
        %4272 = vmatprep.subr.mxu0 0.0
        %v4273 = vand.u32 %v3113, 4294901760
        %4274 = vmatpush1.msra.mxu0 %v4273
        %4275 = vmatprep.subr.mxu0 0.0
        %v4276 = vand.u32 %v3114, 4294901760
        %4277 = vmatpush1.msra.mxu0 %v4276
        %4278 = vmatprep.subr.mxu0 0.0
        %v4279 = vand.u32 %v3115, 4294901760
        %4280 = vmatpush1.msra.mxu0 %v4279
        %4281 = vmatprep.subr.mxu0 0.0
        %4282 = vmatpush1.msra.mxu0 0.0
        %4283 = vmatprep.subr.mxu0 0.0
        %4284 = vmatpush1.msra.mxu0 0.0
        %4285 = vmatprep.subr.mxu0 0.0
        %4286 = vmatpush1.msra.mxu0 0.0
        %4287 = vmatprep.subr.mxu0 0.0
        %4288 = vmatpush1.msra.mxu0 0.0
        %4289 = vmatprep.subr.mxu0 0.0
        %4290 = vmatpush1.msra.mxu0 0.0
        %4291 = vmatprep.subr.mxu0 0.0
        %4292 = vmatpush1.msra.mxu0 0.0
        %4293 = vmatprep.subr.mxu0 0.0
        %4294 = vmatpush1.msra.mxu0 0.0
        %4295 = vmatprep.subr.mxu0 0.0
        %4296 = vmatpush1.msra.mxu0 0.0
        %4297 = vmatprep.subr.mxu0 0.0
        %4298 = vmatpush1.msra.mxu0 0.0
        %4299 = vmatprep.subr.mxu0 0.0
        %4300 = vmatpush1.msra.mxu0 0.0
        %4301 = vmatprep.subr.mxu0 0.0
        %4302 = vmatpush1.msra.mxu0 0.0
        %4303 = vmatprep.subr.mxu0 0.0
        %4304 = vmatpush1.msra.mxu0 0.0
        %4305 = vmatprep.subr.mxu0 0.0
        %4306 = vmatpush1.msra.mxu0 0.0
        %4307 = vmatprep.subr.mxu0 0.0
        %4308 = vmatpush1.msra.mxu0 0.0
        %4309 = vmatprep.subr.mxu0 0.0
        %4310 = vmatpush1.msra.mxu0 0.0
        %4311 = vmatprep.subr.mxu0 0.0
        %4312 = vmatpush1.msra.mxu0 0.0
        %4313 = vmatprep.mubr.f32.mxu0 0.0
        %v4314 = vand.u32 %v3083, 4294901760
        %4315 = vmatmul.mubr.f32.gmra.mrb[0].mxu0 %v4314
        %v4316 = vpop.f32.mrb[0].mxu0
        %v4317 = vadd.f32 %v4140, %v4316
        %v4318 = vpop.f32.mrb[0].mxu0
        %4319 = vmatprep.mubr.f32.mxu0 0.0
        %v4320 = vand.u32 %v3084, 4294901760
        %4321 = vmatmul.mubr.f32.gmra.mrb[0].mxu0 %v4320
        %v4322 = vpop.f32.mrb[0].mxu0
        %v4323 = vadd.f32 %v4146, %v4322
        %v4324 = vpop.f32.mrb[0].mxu0
        %4325 = vmatprep.mubr.f32.mxu0 0.0
        %v4326 = vand.u32 %v3085, 4294901760
        %4327 = vmatmul.mubr.f32.gmra.mrb[0].mxu0 %v4326
        %v4328 = vpop.f32.mrb[0].mxu0
        %v4329 = vadd.f32 %v4152, %v4328
        %v4330 = vpop.f32.mrb[0].mxu0
        %4331 = vmatprep.mubr.f32.mxu0 0.0
        %v4332 = vand.u32 %v3086, 4294901760
        %4333 = vmatmul.mubr.f32.gmra.mrb[0].mxu0 %v4332
        %v4334 = vpop.f32.mrb[0].mxu0
        %v4335 = vadd.f32 %v4158, %v4334
        %v4336 = vpop.f32.mrb[0].mxu0
        %4337 = vmatprep.mubr.f32.mxu0 0.0
        %v4338 = vand.u32 %v3087, 4294901760
        %4339 = vmatmul.mubr.f32.gmra.mrb[0].mxu0 %v4338
        %v4340 = vpop.f32.mrb[0].mxu0
        %v4341 = vadd.f32 %v4164, %v4340
        %v4342 = vpop.f32.mrb[0].mxu0
        %4343 = vmatprep.mubr.f32.mxu0 0.0
        %v4344 = vand.u32 %v3088, 4294901760
        %4345 = vmatmul.mubr.f32.gmra.mrb[0].mxu0 %v4344
        %v4346 = vpop.f32.mrb[0].mxu0
        %v4347 = vadd.f32 %v4170, %v4346
        %v4348 = vpop.f32.mrb[0].mxu0
        %4349 = vmatprep.mubr.f32.mxu0 0.0
        %v4350 = vand.u32 %v3089, 4294901760
        %4351 = vmatmul.mubr.f32.gmra.mrb[0].mxu0 %v4350
        %v4352 = vpop.f32.mrb[0].mxu0
        %v4353 = vadd.f32 %v4176, %v4352
        %v4354 = vpop.f32.mrb[0].mxu0
        %4355 = vmatprep.mubr.f32.mxu0 0.0
        %v4356 = vand.u32 %v3090, 4294901760
        %4357 = vmatmul.mubr.f32.gmra.mrb[0].mxu0 %v4356
        %v4358 = vpop.f32.mrb[0].mxu0
        %v4359 = vadd.f32 %v4182, %v4358
        %v4360 = vpop.f32.mrb[0].mxu0
        %4361 = vmatprep.mubr.f32.mxu0 0.0
        %v4362 = vand.u32 %v3091, 4294901760
        %4363 = vmatmul.mubr.f32.gmra.mrb[0].mxu0 %v4362
        %v4364 = vpop.f32.mrb[0].mxu0
        %v4365 = vadd.f32 %v4188, %v4364
        %v4366 = vpop.f32.mrb[0].mxu0
        %4367 = vmatprep.mubr.f32.mxu0 0.0
        %v4368 = vand.u32 %v3092, 4294901760
        %4369 = vmatmul.mubr.f32.gmra.mrb[0].mxu0 %v4368
        %v4370 = vpop.f32.mrb[0].mxu0
        %v4371 = vadd.f32 %v4194, %v4370
        %v4372 = vpop.f32.mrb[0].mxu0
        %4373 = vmatprep.mubr.f32.mxu0 0.0
        %v4374 = vand.u32 %v3093, 4294901760
        %4375 = vmatmul.mubr.f32.gmra.mrb[0].mxu0 %v4374
        %v4376 = vpop.f32.mrb[0].mxu0
        %v4377 = vadd.f32 %v4200, %v4376
        %v4378 = vpop.f32.mrb[0].mxu0
        %4379 = vmatprep.mubr.f32.mxu0 0.0
        %v4380 = vand.u32 %v3094, 4294901760
        %4381 = vmatmul.mubr.f32.gmra.mrb[0].mxu0 %v4380
        %v4382 = vpop.f32.mrb[0].mxu0
        %v4383 = vadd.f32 %v4206, %v4382
        %v4384 = vpop.f32.mrb[0].mxu0
        %4385 = vmatprep.mubr.f32.mxu0 0.0
        %v4386 = vand.u32 %v3095, 4294901760
        %4387 = vmatmul.mubr.f32.gmra.mrb[0].mxu0 %v4386
        %v4388 = vpop.f32.mrb[0].mxu0
        %v4389 = vadd.f32 %v4212, %v4388
        %v4390 = vpop.f32.mrb[0].mxu0
        %4391 = vmatprep.mubr.f32.mxu0 0.0
        %v4392 = vand.u32 %v3096, 4294901760
        %4393 = vmatmul.mubr.f32.gmra.mrb[0].mxu0 %v4392
        %v4394 = vpop.f32.mrb[0].mxu0
        %v4395 = vadd.f32 %v4218, %v4394
        %v4396 = vpop.f32.mrb[0].mxu0
        %4397 = vmatprep.mubr.f32.mxu0 0.0
        %v4398 = vand.u32 %v3097, 4294901760
        %4399 = vmatmul.mubr.f32.gmra.mrb[0].mxu0 %v4398
        %v4400 = vpop.f32.mrb[0].mxu0
        %v4401 = vadd.f32 %v4224, %v4400
        %v4402 = vpop.f32.mrb[0].mxu0
        %4403 = vmatprep.mubr.f32.mxu0 0.0
        %v4404 = vand.u32 %v3098, 4294901760
        %4405 = vmatmul.mubr.f32.gmra.mrb[0].mxu0 %v4404
        %v4406 = vpop.f32.mrb[0].mxu0
        %v4407 = vadd.f32 %v4230, %v4406
        %v4408 = vpop.f32.mrb[0].mxu0
        %4409 = vdwg.mxu0
        %vm4410 = vcmask 7168
        %4411 = vst.msk [vmem:[%s187] sm:$0xff] %vm4410, %v4317
        %4412 = vst.msk [vmem:[%s187 + $0x8] sm:$0xff] %vm4410, %v4323
        %4413 = vst.msk [vmem:[%s187 + $0x10] sm:$0xff] %vm4410, %v4329
        %4414 = vst.msk [vmem:[%s187 + $0x18] sm:$0xff] %vm4410, %v4335
        %4415 = vst.msk [vmem:[%s187 + $0x20] sm:$0xff] %vm4410, %v4341
        %4416 = vst.msk [vmem:[%s187 + $0x28] sm:$0xff] %vm4410, %v4347
        %4417 = vst.msk [vmem:[%s187 + $0x30] sm:$0xff] %vm4410, %v4353
        %4418 = vst.msk [vmem:[%s187 + $0x38] sm:$0xff] %vm4410, %v4359
        %4419 = vst.msk [vmem:[%s187 + $0x40] sm:$0xff] %vm4410, %v4365
        %4420 = vst.msk [vmem:[%s187 + $0x48] sm:$0xff] %vm4410, %v4371
        %4421 = vst.msk [vmem:[%s187 + $0x50] sm:$0xff] %vm4410, %v4377
        %4422 = vst.msk [vmem:[%s187 + $0x58] sm:$0xff] %vm4410, %v4383
        %4423 = vst.msk [vmem:[%s187 + $0x60] sm:$0xff] %vm4410, %v4389
        %4424 = vst.msk [vmem:[%s187 + $0x68] sm:$0xff] %vm4410, %v4395
        %4425 = vst.msk [vmem:[%s187 + $0x70] sm:$0xff] %vm4410, %v4401
        %4426 = vst.msk [vmem:[%s187 + $0x78] sm:$0xff] %vm4410, %v4407
        %s4427 = smul.u32 16, %s15
        %p4428 = scmp.lt.s32.totalorder %s4427, 31
        %s4429 = scalar_select %p4428, %s4427, 31
        %s4430 = smul.addr %s4429, 8
        %s4431 = scalar_lea.vmem %s3, %s4430
        // Predicated region
        $region37: #{tpu_custom_call.1} parent=31 // pred_check
          %p4432 = pneg %p101
        $region38: #{tpu_custom_call.1} parent=31 // pred_check_branch
          %4434 = sbr.rel (%p4432) target = $region40
        $region39: #{tpu_custom_call.1} parent=31 // pred_region
          %s4435 = smul.u32 16, %s15
        $region40: #{tpu_custom_call.1} parent=31 // pred_fallthru
          _
      $region32: #{tpu_custom_call.1} parent=5 // pred_fallthru
        _
      %p4436 = scmp.le.s32.totalorder 2, %s10
      // Predicated region
      $region41: #{tpu_custom_call.1} parent=5 // pred_check
        %p4437 = pneg %p4436
      $region42: #{tpu_custom_call.1} parent=5 // pred_check_branch
        %4439 = sbr.rel (%p4437) target = $region44
      $region43: #{tpu_custom_call.1} parent=5 // pred_region
        %s4440 = ssub.s32 %s10, 2
        // Predicated region
        $region45: #{tpu_custom_call.1} parent=43 // pred_check
          %p4441 = pneg %p107
        $region46: #{tpu_custom_call.1} parent=43 // pred_check_branch
          %4443 = sbr.rel (%p4441) target = $region48
        $region47: #{tpu_custom_call.1} parent=43 // pred_region
          %s4444 = smul.u32 16, %s16
          %p4445 = scmp.lt.s32.totalorder %s4444, 31
          %s4446 = scalar_select %p4445, %s4444, 31
          %s4447 = smul.addr %s4446, 8
          %s4448 = scalar_lea.vmem %s3, %s4447
        $region48: #{tpu_custom_call.1} parent=43 // pred_fallthru
          _
      $region44: #{tpu_custom_call.1} parent=5 // pred_fallthru
        _
    $region6: #{tpu_custom_call.1} parent=1 // loop_footer
      %s14 = sadd.s32 1, %s10
    $region7: #{tpu_custom_call.1} parent=1 // loop_footer_branch
      %9 = sbr.rel target = $region3
    $region8: #{tpu_custom_call.1} parent=1 // loop_exit
      _
    %4449 = vsyncpa [#allocation3], 1
    %s4450 = scalar_lea.sflag [#allocation3], 1
    %4451 = vsyncpa %s4450, 1

</llo_original>
